<compile_context>
chip_gen: v7x
topology: tpu7x:2x2x1
jax: 0.10.0
libtpu: 0.0.40
codegen_flags: <defaults>
</compile_context>

<pallas_src>
import jax
import jax.numpy as jnp
from jax.experimental import pallas as pl
from jax.experimental.pallas import tpu as pltpu


# ----------------------------- Pallas kernel -------------------------------
def graph_encoder_kernel(
    # per-block tensors (batch folded into rows except adj)
    adj_ref, nf_ref, ef_ref, noise_ref,
    # node MLP
    nw1_ref, nb1_ref, nw2_ref, nb2_ref,
    # edge MLP
    ew1_ref, eb1_ref, ew2_ref, eb2_ref,
    # message passing (combine weights pre-split into two halves)
    bw_ref, cwa_ref, cwb_ref, cb_ref,
    # mean head (fc1 pre-split into (L+1, H, 128))
    mw1_ref, mb1_ref, mw2_ref, mb2_ref,
    # logstd head (fc1 pre-split into (L+1, H, 128))
    lw1_ref, lb1_ref, lw2_ref, lb2_ref,
    # fused output [latent | mean | logstd]
    out_ref,
):
  f32 = jnp.float32
  BLK, N, _ = adj_ref.shape
  H = nw2_ref.shape[1]
  L = bw_ref.shape[0]

  def dot(a, b):
    return jnp.dot(a, b, preferred_element_type=f32)

  adj = adj_ref[...]            # (BLK, N, N)
  noise = noise_ref[...]        # (BLK*N, Z)

  # node MLP: batch folded into MXU rows -> (BLK*N, H)
  h = jnp.tanh(dot(nf_ref[...], nw1_ref[...]) + nb1_ref[...])
  h = jnp.tanh(dot(h, nw2_ref[...]) + nb2_ref[...])

  # edge MLP: batch folded into MXU rows -> (BLK*N*N, H)
  eh = jnp.tanh(dot(ef_ref[...], ew1_ref[...]) + eb1_ref[...])
  eh = jnp.tanh(dot(eh, ew2_ref[...]) + eb2_ref[...])
  # einsum('bijc,bjk->bik') == (sum_c edge_hidden) @ hidden; pre-sum once,
  # reused across all L layers.
  e_sum = jnp.sum(eh.reshape(BLK * N, N, H), axis=-1).reshape(BLK, N, N)

  # head pre-activations accumulated layer by layer (replaces all_hidden concat)
  m_pre = dot(h, mw1_ref[0]) + mb1_ref[...]     # (BLK*N, 128)
  s_pre = dot(h, lw1_ref[0]) + lb1_ref[...]

  cur = h
  for layer in range(L):
    # GraphConvSparse: tanh(adj @ (x @ W)); x@W is batched across the block,
    # the adj matmul is block-diagonal in batch (batched einsum).
    x = dot(cur, bw_ref[layer]).reshape(BLK, N, H)
    cur3 = jnp.tanh(jnp.einsum('bij,bjk->bik', adj, x,
                               preferred_element_type=f32))        # (BLK, N, H)
    # edge message: tanh(einsum('ijc,jk->ik')) == tanh(e_sum @ cur)
    y3 = jnp.tanh(jnp.einsum('bij,bjk->bik', e_sum, cur3,
                             preferred_element_type=f32))          # (BLK, N, H)
    cur2 = cur3.reshape(BLK * N, H)
    y2 = y3.reshape(BLK * N, H)
    # combine_net with split weights: concat([cur, y]) @ cw == cur@cwa + y@cwb
    cur = jnp.tanh(dot(cur2, cwa_ref[layer]) + dot(y2, cwb_ref[layer])
                   + cb_ref[layer])
    m_pre = m_pre + dot(cur, mw1_ref[layer + 1])
    s_pre = s_pre + dot(cur, lw1_ref[layer + 1])

  mean = dot(jnp.tanh(m_pre), mw2_ref[...]) + mb2_ref[...]
  logstd = dot(jnp.tanh(s_pre), lw2_ref[...]) + lb2_ref[...]
  latent = noise * jnp.exp(logstd) + mean

  # single fused output store: [latent | mean | logstd] along lanes
  out_ref[...] = jnp.concatenate([latent, mean, logstd], axis=-1)


# ------------------------------ wrapper ------------------------------------
def _const_index(nd):
  def idx(g, _nd=nd):
    return (0,) * _nd
  return idx


def _pick_batch_block(B, N, E, target_rows=256, edge_bytes_budget=4 << 20):
  """Batch elements folded per grid step: fill ~256 MXU rows, cap VMEM."""
  blk = max(1, min(B, target_rows // max(N, 1)))
  per_elem_edge_bytes = N * N * E * 4
  if per_elem_edge_bytes > 0:
    blk = max(1, min(blk, edge_bytes_budget // per_elem_edge_bytes))
  blk = min(blk, B)
  while B % blk != 0:
    blk -= 1
  return blk


def graph_encoder_forward(adj, node_feat, edge_feat, noise, params, block_b=None):
  B, N, _ = adj.shape
  node_dim = node_feat.shape[-1]
  E = edge_feat.shape[-1]
  H = params["nw2"].shape[1]
  L = params["bw"].shape[0]
  Z = params["mw2"].shape[1]

  BLK = block_b if block_b is not None else _pick_batch_block(B, N, E)
  grid = (B // BLK,)

  # Host-side layout plumbing (free): fold batch into matmul rows.
  nf2 = node_feat.reshape(B * N, node_dim)
  ef2 = edge_feat.reshape(B * N * N, E)
  nz2 = noise.reshape(B * N, Z)

  # Pre-split weights so the kernel never needs concat scratch buffers.
  cwa = params["cw"][:, :H, :]                      # (L, H, H)
  cwb = params["cw"][:, H:, :]                      # (L, H, H)
  mw1 = params["mw1"].reshape(L + 1, H, 128)        # per-layer head slices
  lw1 = params["lw1"].reshape(L + 1, H, 128)

  weights = [
      params["nw1"], params["nb1"], params["nw2"], params["nb2"],
      params["ew1"], params["eb1"], params["ew2"], params["eb2"],
      params["bw"], cwa, cwb, params["cb"],
      mw1, params["mb1"], params["mw2"], params["mb2"],
      lw1, params["lb1"], params["lw2"], params["lb2"],
  ]

  in_specs = [
      pl.BlockSpec((BLK, N, N), lambda g: (g, 0, 0)),        # adj
      pl.BlockSpec((BLK * N, node_dim), lambda g: (g, 0)),   # node feat rows
      pl.BlockSpec((BLK * N * N, E), lambda g: (g, 0)),      # edge feat rows
      pl.BlockSpec((BLK * N, Z), lambda g: (g, 0)),          # gaussian noise
  ] + [pl.BlockSpec(w.shape, _const_index(w.ndim)) for w in weights]

  out_specs = pl.BlockSpec((BLK * N, 3 * Z), lambda g: (g, 0))
  out_shape = jax.ShapeDtypeStruct((B * N, 3 * Z), jnp.float32)

  out = pl.pallas_call(
      graph_encoder_kernel,
      out_shape=out_shape,
      grid=grid,
      in_specs=in_specs,
      out_specs=out_specs,
      compiler_params=pltpu.CompilerParams(
          dimension_semantics=("parallel",)),
  )(adj, nf2, ef2, nz2, *weights)

  out = out.reshape(B, N, 3 * Z)
  latent = out[..., 0 * Z:1 * Z]
  mean = out[..., 1 * Z:2 * Z]
  logstd = out[..., 2 * Z:3 * Z]
  return latent, mean, logstd


# ------------------------- pure-JAX reference ------------------------------
def graph_encoder_reference(adj, node_feat, edge_feat, noise, params):
  p = params
  L = p["bw"].shape[0]
  h = jnp.tanh(node_feat @ p["nw1"] + p["nb1"])
  h = jnp.tanh(h @ p["nw2"] + p["nb2"])
  eh = jnp.tanh(edge_feat @ p["ew1"] + p["eb1"])
  eh = jnp.tanh(eh @ p["ew2"] + p["eb2"])            # (B, N, N, H)
  all_h = [h]
  cur = h
  for l in range(L):
    x = cur @ p["bw"][l]
    x = jnp.einsum("bij,bjk->bik", adj, x)
    cur = jnp.tanh(x)
    y = jnp.tanh(jnp.einsum("bijc,bjk->bik", eh, cur))
    cur = jnp.tanh(jnp.concatenate([cur, y], axis=-1) @ p["cw"][l] + p["cb"][l])
    all_h.append(cur)
  hid = jnp.concatenate(all_h, axis=-1)
  mean = jnp.tanh(hid @ p["mw1"] + p["mb1"]) @ p["mw2"] + p["mb2"]
  logstd = jnp.tanh(hid @ p["lw1"] + p["lb1"]) @ p["lw2"] + p["lb2"]
  latent = noise * jnp.exp(logstd) + mean
  return latent, mean, logstd


# ------------------------------ params init --------------------------------
def init_params(key, node_dim, edge_dim, hidden_dim, z_dim, num_layers):
  def glorot(k, shape):
    fan_in, fan_out = shape[-2], shape[-1]
    r = jnp.sqrt(6.0 / (fan_in + fan_out))
    return jax.random.uniform(k, shape, jnp.float32, -r, r)

  keys = iter(jax.random.split(key, 32))
  H, Z, L = hidden_dim, z_dim, num_layers
  p = {
      "nw1": glorot(next(keys), (node_dim, 128)), "nb1": glorot(next(keys), (1, 128)),
      "nw2": glorot(next(keys), (128, H)),        "nb2": glorot(next(keys), (1, H)),
      "ew1": glorot(next(keys), (edge_dim, 128)), "eb1": glorot(next(keys), (1, 128)),
      "ew2": glorot(next(keys), (128, H)),        "eb2": glorot(next(keys), (1, H)),
      "bw":  glorot(next(keys), (L, H, H)),
      "cw":  glorot(next(keys), (L, 2 * H, H)),
      "cb":  glorot(next(keys), (L, 1, H)),
      "mw1": glorot(next(keys), ((L + 1) * H, 128)), "mb1": glorot(next(keys), (1, 128)),
      "mw2": glorot(next(keys), (128, Z)),           "mb2": glorot(next(keys), (1, Z)),
      "lw1": glorot(next(keys), ((L + 1) * H, 128)), "lb1": glorot(next(keys), (1, 128)),
      "lw2": glorot(next(keys), (128, Z)),           "lb2": glorot(next(keys), (1, Z)),
  }
  return p


# --------------------------------- main -------------------------------------
if __name__ == "__main__":
  B, N = 2, 16
  NODE_DIM, EDGE_DIM = 8, 8
  HIDDEN, Z_DIM, NUM_LAYERS = 32, 32, 3

  key = jax.random.PRNGKey(0)
  k_adj, k_nf, k_ef, k_noise, k_par = jax.random.split(key, 5)

  adj = jax.random.uniform(k_adj, (B, N, N), jnp.float32)
  node_feat = jax.random.normal(k_nf, (B, N, NODE_DIM), jnp.float32)
  edge_feat = jax.random.normal(k_ef, (B, N, N, EDGE_DIM), jnp.float32)
  # TODO(synk): torch.randn noise from the module body is generated host-side
  # and passed in explicitly so the kernel stays deterministic.
  noise = jax.random.normal(k_noise, (B, N, Z_DIM), jnp.float32)

  params = init_params(k_par, NODE_DIM, EDGE_DIM, HIDDEN, Z_DIM, NUM_LAYERS)

  latent, mean, logstd = jax.block_until_ready(
      graph_encoder_forward(adj, node_feat, edge_feat, noise, params))

  ref_latent, ref_mean, ref_logstd = graph_encoder_reference(
      adj, node_feat, edge_feat, noise, params)
  assert latent.shape == (B, N, Z_DIM)
  assert jnp.allclose(mean, ref_mean, atol=2e-3, rtol=2e-3)
  assert jnp.allclose(logstd, ref_logstd, atol=2e-3, rtol=2e-3)
  assert jnp.allclose(latent, ref_latent, atol=2e-3, rtol=2e-3)

  print("KERNEL_OK")
</pallas_src>

<mosaic_0001>
module attributes {stable_mosaic.version = 11 : i64} {
  func.func @graph_encoder_kernel(%arg0: i32, %arg1: memref<2x16x16xf32, #tpu.memory_space<vmem>>, %arg2: memref<32x8xf32, #tpu.memory_space<vmem>>, %arg3: memref<512x8xf32, #tpu.memory_space<vmem>>, %arg4: memref<32x32xf32, #tpu.memory_space<vmem>>, %arg5: memref<8x128xf32, #tpu.memory_space<vmem>>, %arg6: memref<1x128xf32, #tpu.memory_space<vmem>>, %arg7: memref<128x32xf32, #tpu.memory_space<vmem>>, %arg8: memref<1x32xf32, #tpu.memory_space<vmem>>, %arg9: memref<8x128xf32, #tpu.memory_space<vmem>>, %arg10: memref<1x128xf32, #tpu.memory_space<vmem>>, %arg11: memref<128x32xf32, #tpu.memory_space<vmem>>, %arg12: memref<1x32xf32, #tpu.memory_space<vmem>>, %arg13: memref<3x32x32xf32, #tpu.memory_space<vmem>>, %arg14: memref<3x32x32xf32, #tpu.memory_space<vmem>>, %arg15: memref<3x32x32xf32, #tpu.memory_space<vmem>>, %arg16: memref<3x1x32xf32, #tpu.memory_space<vmem>>, %arg17: memref<4x32x128xf32, #tpu.memory_space<vmem>>, %arg18: memref<1x128xf32, #tpu.memory_space<vmem>>, %arg19: memref<128x32xf32, #tpu.memory_space<vmem>>, %arg20: memref<1x32xf32, #tpu.memory_space<vmem>>, %arg21: memref<4x32x128xf32, #tpu.memory_space<vmem>>, %arg22: memref<1x128xf32, #tpu.memory_space<vmem>>, %arg23: memref<128x32xf32, #tpu.memory_space<vmem>>, %arg24: memref<1x32xf32, #tpu.memory_space<vmem>>, %arg25: memref<32x96xf32, #tpu.memory_space<vmem>>) attributes {dimension_semantics = [#tpu.dimension_semantics<parallel>], iteration_bounds = array<i64: 1>, scalar_prefetch = 0 : i64, scratch_operands = 0 : i64, tpu.core_type = #tpu.core_type<tc>, window_params = [{transform_indices = @transform_0, window_bounds = array<i64: 2, 16, 16>}, {transform_indices = @transform_1, window_bounds = array<i64: 32, 8>}, {transform_indices = @transform_2, window_bounds = array<i64: 512, 8>}, {transform_indices = @transform_3, window_bounds = array<i64: 32, 32>}, {pipeline_mode = #tpu.pipeline_mode<synchronous>, transform_indices = @transform_4, window_bounds = array<i64: 8, 128>}, {pipeline_mode = #tpu.pipeline_mode<synchronous>, transform_indices = @transform_5, window_bounds = array<i64: 1, 128>}, {pipeline_mode = #tpu.pipeline_mode<synchronous>, transform_indices = @transform_6, window_bounds = array<i64: 128, 32>}, {pipeline_mode = #tpu.pipeline_mode<synchronous>, transform_indices = @transform_7, window_bounds = array<i64: 1, 32>}, {pipeline_mode = #tpu.pipeline_mode<synchronous>, transform_indices = @transform_8, window_bounds = array<i64: 8, 128>}, {pipeline_mode = #tpu.pipeline_mode<synchronous>, transform_indices = @transform_9, window_bounds = array<i64: 1, 128>}, {pipeline_mode = #tpu.pipeline_mode<synchronous>, transform_indices = @transform_10, window_bounds = array<i64: 128, 32>}, {pipeline_mode = #tpu.pipeline_mode<synchronous>, transform_indices = @transform_11, window_bounds = array<i64: 1, 32>}, {pipeline_mode = #tpu.pipeline_mode<synchronous>, transform_indices = @transform_12, window_bounds = array<i64: 3, 32, 32>}, {pipeline_mode = #tpu.pipeline_mode<synchronous>, transform_indices = @transform_13, window_bounds = array<i64: 3, 32, 32>}, {pipeline_mode = #tpu.pipeline_mode<synchronous>, transform_indices = @transform_14, window_bounds = array<i64: 3, 32, 32>}, {pipeline_mode = #tpu.pipeline_mode<synchronous>, transform_indices = @transform_15, window_bounds = array<i64: 3, 1, 32>}, {pipeline_mode = #tpu.pipeline_mode<synchronous>, transform_indices = @transform_16, window_bounds = array<i64: 4, 32, 128>}, {pipeline_mode = #tpu.pipeline_mode<synchronous>, transform_indices = @transform_17, window_bounds = array<i64: 1, 128>}, {pipeline_mode = #tpu.pipeline_mode<synchronous>, transform_indices = @transform_18, window_bounds = array<i64: 128, 32>}, {pipeline_mode = #tpu.pipeline_mode<synchronous>, transform_indices = @transform_19, window_bounds = array<i64: 1, 32>}, {pipeline_mode = #tpu.pipeline_mode<synchronous>, transform_indices = @transform_20, window_bounds = array<i64: 4, 32, 128>}, {pipeline_mode = #tpu.pipeline_mode<synchronous>, transform_indices = @transform_21, window_bounds = array<i64: 1, 128>}, {pipeline_mode = #tpu.pipeline_mode<synchronous>, transform_indices = @transform_22, window_bounds = array<i64: 128, 32>}, {pipeline_mode = #tpu.pipeline_mode<synchronous>, transform_indices = @transform_23, window_bounds = array<i64: 1, 32>}, {transform_indices = @transform_24, window_bounds = array<i64: 32, 96>}]} {
    %c0 = arith.constant 0 : index
    %c0_0 = arith.constant 0 : index
    %c0_1 = arith.constant 0 : index
    %0 = vector.load %arg1[%c0, %c0_0, %c0_1] : memref<2x16x16xf32, #tpu.memory_space<vmem>>, vector<2x16x16xf32>
    %c0_2 = arith.constant 0 : index
    %c0_3 = arith.constant 0 : index
    %1 = vector.load %arg4[%c0_2, %c0_3] : memref<32x32xf32, #tpu.memory_space<vmem>>, vector<32x32xf32>
    %c0_4 = arith.constant 0 : index
    %c0_5 = arith.constant 0 : index
    %2 = vector.load %arg2[%c0_4, %c0_5] : memref<32x8xf32, #tpu.memory_space<vmem>>, vector<32x8xf32>
    %c0_6 = arith.constant 0 : index
    %c0_7 = arith.constant 0 : index
    %3 = vector.load %arg5[%c0_6, %c0_7] : memref<8x128xf32, #tpu.memory_space<vmem>>, vector<8x128xf32>
    %cst = arith.constant dense<0.000000e+00> : vector<32x128xf32>
    %4 = tpu.matmul %2, %3, %cst {dimension_numbers = #tpu.dot_dimension_numbers<[1], [0], [0], [1], [0, 0, 1, 1], [], []>} : vector<32x8xf32>, vector<8x128xf32>, vector<32x128xf32> -> vector<32x128xf32>
    %c0_8 = arith.constant 0 : index
    %c0_9 = arith.constant 0 : index
    %5 = vector.load %arg6[%c0_8, %c0_9] : memref<1x128xf32, #tpu.memory_space<vmem>>, vector<1x128xf32>
    %6 = vector.broadcast %5 : vector<1x128xf32> to vector<32x128xf32>
    %7 = arith.addf %4, %6 : vector<32x128xf32>
    %8 = math.tanh %7 : vector<32x128xf32>
    %c0_10 = arith.constant 0 : index
    %c0_11 = arith.constant 0 : index
    %9 = vector.load %arg7[%c0_10, %c0_11] : memref<128x32xf32, #tpu.memory_space<vmem>>, vector<128x32xf32>
    %cst_12 = arith.constant dense<0.000000e+00> : vector<32x32xf32>
    %10 = tpu.matmul %8, %9, %cst_12 {dimension_numbers = #tpu.dot_dimension_numbers<[1], [0], [0], [1], [0, 0, 1, 1], [], []>} : vector<32x128xf32>, vector<128x32xf32>, vector<32x32xf32> -> vector<32x32xf32>
    %c0_13 = arith.constant 0 : index
    %c0_14 = arith.constant 0 : index
    %11 = vector.load %arg8[%c0_13, %c0_14] : memref<1x32xf32, #tpu.memory_space<vmem>>, vector<1x32xf32>
    %12 = vector.broadcast %11 : vector<1x32xf32> to vector<32x32xf32>
    %13 = arith.addf %10, %12 : vector<32x32xf32>
    %14 = math.tanh %13 : vector<32x32xf32>
    %c0_15 = arith.constant 0 : index
    %c0_16 = arith.constant 0 : index
    %15 = vector.load %arg3[%c0_15, %c0_16] : memref<512x8xf32, #tpu.memory_space<vmem>>, vector<512x8xf32>
    %c0_17 = arith.constant 0 : index
    %c0_18 = arith.constant 0 : index
    %16 = vector.load %arg9[%c0_17, %c0_18] : memref<8x128xf32, #tpu.memory_space<vmem>>, vector<8x128xf32>
    %cst_19 = arith.constant dense<0.000000e+00> : vector<512x128xf32>
    %17 = tpu.matmul %15, %16, %cst_19 {dimension_numbers = #tpu.dot_dimension_numbers<[1], [0], [0], [1], [0, 0, 1, 1], [], []>} : vector<512x8xf32>, vector<8x128xf32>, vector<512x128xf32> -> vector<512x128xf32>
    %c0_20 = arith.constant 0 : index
    %c0_21 = arith.constant 0 : index
    %18 = vector.load %arg10[%c0_20, %c0_21] : memref<1x128xf32, #tpu.memory_space<vmem>>, vector<1x128xf32>
    %19 = vector.broadcast %18 : vector<1x128xf32> to vector<512x128xf32>
    %20 = arith.addf %17, %19 : vector<512x128xf32>
    %21 = math.tanh %20 : vector<512x128xf32>
    %c0_22 = arith.constant 0 : index
    %c0_23 = arith.constant 0 : index
    %22 = vector.load %arg11[%c0_22, %c0_23] : memref<128x32xf32, #tpu.memory_space<vmem>>, vector<128x32xf32>
    %cst_24 = arith.constant dense<0.000000e+00> : vector<512x32xf32>
    %23 = tpu.matmul %21, %22, %cst_24 {dimension_numbers = #tpu.dot_dimension_numbers<[1], [0], [0], [1], [0, 0, 1, 1], [], []>} : vector<512x128xf32>, vector<128x32xf32>, vector<512x32xf32> -> vector<512x32xf32>
    %c0_25 = arith.constant 0 : index
    %c0_26 = arith.constant 0 : index
    %24 = vector.load %arg12[%c0_25, %c0_26] : memref<1x32xf32, #tpu.memory_space<vmem>>, vector<1x32xf32>
    %25 = vector.broadcast %24 : vector<1x32xf32> to vector<512x32xf32>
    %26 = arith.addf %23, %25 : vector<512x32xf32>
    %27 = math.tanh %26 : vector<512x32xf32>
    %28 = vector.shape_cast %27 : vector<512x32xf32> to vector<32x16x32xf32>
    %cst_27 = arith.constant dense<0.000000e+00> : vector<32x16xf32>
    %29 = vector.multi_reduction <add>, %28, %cst_27 [2] : vector<32x16x32xf32> to vector<32x16xf32>
    %30 = vector.shape_cast %29 : vector<32x16xf32> to vector<2x16x16xf32>
    %c0_28 = arith.constant 0 : index
    %c0_29 = arith.constant 0 : index
    %c0_30 = arith.constant 0 : index
    %31 = vector.load %arg17[%c0_28, %c0_29, %c0_30] : memref<4x32x128xf32, #tpu.memory_space<vmem>>, vector<1x32x128xf32>
    %32 = vector.shape_cast %31 : vector<1x32x128xf32> to vector<32x128xf32>
    %cst_31 = arith.constant dense<0.000000e+00> : vector<32x128xf32>
    %33 = tpu.matmul %14, %32, %cst_31 {dimension_numbers = #tpu.dot_dimension_numbers<[1], [0], [0], [1], [0, 0, 1, 1], [], []>} : vector<32x32xf32>, vector<32x128xf32>, vector<32x128xf32> -> vector<32x128xf32>
    %c0_32 = arith.constant 0 : index
    %c0_33 = arith.constant 0 : index
    %34 = vector.load %arg18[%c0_32, %c0_33] : memref<1x128xf32, #tpu.memory_space<vmem>>, vector<1x128xf32>
    %35 = vector.broadcast %34 : vector<1x128xf32> to vector<32x128xf32>
    %36 = arith.addf %33, %35 : vector<32x128xf32>
    %c0_34 = arith.constant 0 : index
    %c0_35 = arith.constant 0 : index
    %c0_36 = arith.constant 0 : index
    %37 = vector.load %arg21[%c0_34, %c0_35, %c0_36] : memref<4x32x128xf32, #tpu.memory_space<vmem>>, vector<1x32x128xf32>
    %38 = vector.shape_cast %37 : vector<1x32x128xf32> to vector<32x128xf32>
    %cst_37 = arith.constant dense<0.000000e+00> : vector<32x128xf32>
    %39 = tpu.matmul %14, %38, %cst_37 {dimension_numbers = #tpu.dot_dimension_numbers<[1], [0], [0], [1], [0, 0, 1, 1], [], []>} : vector<32x32xf32>, vector<32x128xf32>, vector<32x128xf32> -> vector<32x128xf32>
    %c0_38 = arith.constant 0 : index
    %c0_39 = arith.constant 0 : index
    %40 = vector.load %arg22[%c0_38, %c0_39] : memref<1x128xf32, #tpu.memory_space<vmem>>, vector<1x128xf32>
    %41 = vector.broadcast %40 : vector<1x128xf32> to vector<32x128xf32>
    %42 = arith.addf %39, %41 : vector<32x128xf32>
    %c0_40 = arith.constant 0 : index
    %c0_41 = arith.constant 0 : index
    %c0_42 = arith.constant 0 : index
    %43 = vector.load %arg13[%c0_40, %c0_41, %c0_42] : memref<3x32x32xf32, #tpu.memory_space<vmem>>, vector<1x32x32xf32>
    %44 = vector.shape_cast %43 : vector<1x32x32xf32> to vector<32x32xf32>
    %cst_43 = arith.constant dense<0.000000e+00> : vector<32x32xf32>
    %45 = tpu.matmul %14, %44, %cst_43 {dimension_numbers = #tpu.dot_dimension_numbers<[1], [0], [0], [1], [0, 0, 1, 1], [], []>} : vector<32x32xf32>, vector<32x32xf32>, vector<32x32xf32> -> vector<32x32xf32>
    %46 = vector.shape_cast %45 : vector<32x32xf32> to vector<2x16x32xf32>
    "tpu.trace_start"() <{level = 10 : i32, message = "bij,bjk->bik"}> : () -> ()
    %cst_44 = arith.constant dense<0.000000e+00> : vector<2x16x32xf32>
    %47 = tpu.matmul %0, %46, %cst_44 {dimension_numbers = #tpu.dot_dimension_numbers<[2], [1], [1], [2], [0, 0, 0, 1, 1, 2], [0], [0]>} : vector<2x16x16xf32>, vector<2x16x32xf32>, vector<2x16x32xf32> -> vector<2x16x32xf32>
    "tpu.trace_stop"() : () -> ()
    %48 = math.tanh %47 : vector<2x16x32xf32>
    "tpu.trace_start"() <{level = 10 : i32, message = "bij,bjk->bik"}> : () -> ()
    %cst_45 = arith.constant dense<0.000000e+00> : vector<2x16x32xf32>
    %49 = tpu.matmul %30, %48, %cst_45 {dimension_numbers = #tpu.dot_dimension_numbers<[2], [1], [1], [2], [0, 0, 0, 1, 1, 2], [0], [0]>} : vector<2x16x16xf32>, vector<2x16x32xf32>, vector<2x16x32xf32> -> vector<2x16x32xf32>
    "tpu.trace_stop"() : () -> ()
    %50 = math.tanh %49 : vector<2x16x32xf32>
    %51 = vector.shape_cast %48 : vector<2x16x32xf32> to vector<32x32xf32>
    %52 = vector.shape_cast %50 : vector<2x16x32xf32> to vector<32x32xf32>
    %c0_46 = arith.constant 0 : index
    %c0_47 = arith.constant 0 : index
    %c0_48 = arith.constant 0 : index
    %53 = vector.load %arg14[%c0_46, %c0_47, %c0_48] : memref<3x32x32xf32, #tpu.memory_space<vmem>>, vector<1x32x32xf32>
    %54 = vector.shape_cast %53 : vector<1x32x32xf32> to vector<32x32xf32>
    %cst_49 = arith.constant dense<0.000000e+00> : vector<32x32xf32>
    %55 = tpu.matmul %51, %54, %cst_49 {dimension_numbers = #tpu.dot_dimension_numbers<[1], [0], [0], [1], [0, 0, 1, 1], [], []>} : vector<32x32xf32>, vector<32x32xf32>, vector<32x32xf32> -> vector<32x32xf32>
    %c0_50 = arith.constant 0 : index
    %c0_51 = arith.constant 0 : index
    %c0_52 = arith.constant 0 : index
    %56 = vector.load %arg15[%c0_50, %c0_51, %c0_52] : memref<3x32x32xf32, #tpu.memory_space<vmem>>, vector<1x32x32xf32>
    %57 = vector.shape_cast %56 : vector<1x32x32xf32> to vector<32x32xf32>
    %cst_53 = arith.constant dense<0.000000e+00> : vector<32x32xf32>
    %58 = tpu.matmul %52, %57, %cst_53 {dimension_numbers = #tpu.dot_dimension_numbers<[1], [0], [0], [1], [0, 0, 1, 1], [], []>} : vector<32x32xf32>, vector<32x32xf32>, vector<32x32xf32> -> vector<32x32xf32>
    %59 = arith.addf %55, %58 : vector<32x32xf32>
    %c0_54 = arith.constant 0 : index
    %c0_55 = arith.constant 0 : index
    %c0_56 = arith.constant 0 : index
    %60 = vector.load %arg16[%c0_54, %c0_55, %c0_56] : memref<3x1x32xf32, #tpu.memory_space<vmem>>, vector<1x1x32xf32>
    %61 = vector.shape_cast %60 : vector<1x1x32xf32> to vector<1x32xf32>
    %62 = vector.broadcast %61 : vector<1x32xf32> to vector<32x32xf32>
    %63 = arith.addf %59, %62 : vector<32x32xf32>
    %64 = math.tanh %63 : vector<32x32xf32>
    %c1 = arith.constant 1 : index
    %c0_57 = arith.constant 0 : index
    %c0_58 = arith.constant 0 : index
    %65 = vector.load %arg17[%c1, %c0_57, %c0_58] : memref<4x32x128xf32, #tpu.memory_space<vmem>>, vector<1x32x128xf32>
    %66 = vector.shape_cast %65 : vector<1x32x128xf32> to vector<32x128xf32>
    %cst_59 = arith.constant dense<0.000000e+00> : vector<32x128xf32>
    %67 = tpu.matmul %64, %66, %cst_59 {dimension_numbers = #tpu.dot_dimension_numbers<[1], [0], [0], [1], [0, 0, 1, 1], [], []>} : vector<32x32xf32>, vector<32x128xf32>, vector<32x128xf32> -> vector<32x128xf32>
    %68 = arith.addf %36, %67 : vector<32x128xf32>
    %c1_60 = arith.constant 1 : index
    %c0_61 = arith.constant 0 : index
    %c0_62 = arith.constant 0 : index
    %69 = vector.load %arg21[%c1_60, %c0_61, %c0_62] : memref<4x32x128xf32, #tpu.memory_space<vmem>>, vector<1x32x128xf32>
    %70 = vector.shape_cast %69 : vector<1x32x128xf32> to vector<32x128xf32>
    %cst_63 = arith.constant dense<0.000000e+00> : vector<32x128xf32>
    %71 = tpu.matmul %64, %70, %cst_63 {dimension_numbers = #tpu.dot_dimension_numbers<[1], [0], [0], [1], [0, 0, 1, 1], [], []>} : vector<32x32xf32>, vector<32x128xf32>, vector<32x128xf32> -> vector<32x128xf32>
    %72 = arith.addf %42, %71 : vector<32x128xf32>
    %c1_64 = arith.constant 1 : index
    %c0_65 = arith.constant 0 : index
    %c0_66 = arith.constant 0 : index
    %73 = vector.load %arg13[%c1_64, %c0_65, %c0_66] : memref<3x32x32xf32, #tpu.memory_space<vmem>>, vector<1x32x32xf32>
    %74 = vector.shape_cast %73 : vector<1x32x32xf32> to vector<32x32xf32>
    %cst_67 = arith.constant dense<0.000000e+00> : vector<32x32xf32>
    %75 = tpu.matmul %64, %74, %cst_67 {dimension_numbers = #tpu.dot_dimension_numbers<[1], [0], [0], [1], [0, 0, 1, 1], [], []>} : vector<32x32xf32>, vector<32x32xf32>, vector<32x32xf32> -> vector<32x32xf32>
    %76 = vector.shape_cast %75 : vector<32x32xf32> to vector<2x16x32xf32>
    "tpu.trace_start"() <{level = 10 : i32, message = "bij,bjk->bik"}> : () -> ()
    %cst_68 = arith.constant dense<0.000000e+00> : vector<2x16x32xf32>
    %77 = tpu.matmul %0, %76, %cst_68 {dimension_numbers = #tpu.dot_dimension_numbers<[2], [1], [1], [2], [0, 0, 0, 1, 1, 2], [0], [0]>} : vector<2x16x16xf32>, vector<2x16x32xf32>, vector<2x16x32xf32> -> vector<2x16x32xf32>
    "tpu.trace_stop"() : () -> ()
    %78 = math.tanh %77 : vector<2x16x32xf32>
    "tpu.trace_start"() <{level = 10 : i32, message = "bij,bjk->bik"}> : () -> ()
    %cst_69 = arith.constant dense<0.000000e+00> : vector<2x16x32xf32>
    %79 = tpu.matmul %30, %78, %cst_69 {dimension_numbers = #tpu.dot_dimension_numbers<[2], [1], [1], [2], [0, 0, 0, 1, 1, 2], [0], [0]>} : vector<2x16x16xf32>, vector<2x16x32xf32>, vector<2x16x32xf32> -> vector<2x16x32xf32>
    "tpu.trace_stop"() : () -> ()
    %80 = math.tanh %79 : vector<2x16x32xf32>
    %81 = vector.shape_cast %78 : vector<2x16x32xf32> to vector<32x32xf32>
    %82 = vector.shape_cast %80 : vector<2x16x32xf32> to vector<32x32xf32>
    %c1_70 = arith.constant 1 : index
    %c0_71 = arith.constant 0 : index
    %c0_72 = arith.constant 0 : index
    %83 = vector.load %arg14[%c1_70, %c0_71, %c0_72] : memref<3x32x32xf32, #tpu.memory_space<vmem>>, vector<1x32x32xf32>
    %84 = vector.shape_cast %83 : vector<1x32x32xf32> to vector<32x32xf32>
    %cst_73 = arith.constant dense<0.000000e+00> : vector<32x32xf32>
    %85 = tpu.matmul %81, %84, %cst_73 {dimension_numbers = #tpu.dot_dimension_numbers<[1], [0], [0], [1], [0, 0, 1, 1], [], []>} : vector<32x32xf32>, vector<32x32xf32>, vector<32x32xf32> -> vector<32x32xf32>
    %c1_74 = arith.constant 1 : index
    %c0_75 = arith.constant 0 : index
    %c0_76 = arith.constant 0 : index
    %86 = vector.load %arg15[%c1_74, %c0_75, %c0_76] : memref<3x32x32xf32, #tpu.memory_space<vmem>>, vector<1x32x32xf32>
    %87 = vector.shape_cast %86 : vector<1x32x32xf32> to vector<32x32xf32>
    %cst_77 = arith.constant dense<0.000000e+00> : vector<32x32xf32>
    %88 = tpu.matmul %82, %87, %cst_77 {dimension_numbers = #tpu.dot_dimension_numbers<[1], [0], [0], [1], [0, 0, 1, 1], [], []>} : vector<32x32xf32>, vector<32x32xf32>, vector<32x32xf32> -> vector<32x32xf32>
    %89 = arith.addf %85, %88 : vector<32x32xf32>
    %c1_78 = arith.constant 1 : index
    %c0_79 = arith.constant 0 : index
    %c0_80 = arith.constant 0 : index
    %90 = vector.load %arg16[%c1_78, %c0_79, %c0_80] : memref<3x1x32xf32, #tpu.memory_space<vmem>>, vector<1x1x32xf32>
    %91 = vector.shape_cast %90 : vector<1x1x32xf32> to vector<1x32xf32>
    %92 = vector.broadcast %91 : vector<1x32xf32> to vector<32x32xf32>
    %93 = arith.addf %89, %92 : vector<32x32xf32>
    %94 = math.tanh %93 : vector<32x32xf32>
    %c2 = arith.constant 2 : index
    %c0_81 = arith.constant 0 : index
    %c0_82 = arith.constant 0 : index
    %95 = vector.load %arg17[%c2, %c0_81, %c0_82] : memref<4x32x128xf32, #tpu.memory_space<vmem>>, vector<1x32x128xf32>
    %96 = vector.shape_cast %95 : vector<1x32x128xf32> to vector<32x128xf32>
    %cst_83 = arith.constant dense<0.000000e+00> : vector<32x128xf32>
    %97 = tpu.matmul %94, %96, %cst_83 {dimension_numbers = #tpu.dot_dimension_numbers<[1], [0], [0], [1], [0, 0, 1, 1], [], []>} : vector<32x32xf32>, vector<32x128xf32>, vector<32x128xf32> -> vector<32x128xf32>
    %98 = arith.addf %68, %97 : vector<32x128xf32>
    %c2_84 = arith.constant 2 : index
    %c0_85 = arith.constant 0 : index
    %c0_86 = arith.constant 0 : index
    %99 = vector.load %arg21[%c2_84, %c0_85, %c0_86] : memref<4x32x128xf32, #tpu.memory_space<vmem>>, vector<1x32x128xf32>
    %100 = vector.shape_cast %99 : vector<1x32x128xf32> to vector<32x128xf32>
    %cst_87 = arith.constant dense<0.000000e+00> : vector<32x128xf32>
    %101 = tpu.matmul %94, %100, %cst_87 {dimension_numbers = #tpu.dot_dimension_numbers<[1], [0], [0], [1], [0, 0, 1, 1], [], []>} : vector<32x32xf32>, vector<32x128xf32>, vector<32x128xf32> -> vector<32x128xf32>
    %102 = arith.addf %72, %101 : vector<32x128xf32>
    %c2_88 = arith.constant 2 : index
    %c0_89 = arith.constant 0 : index
    %c0_90 = arith.constant 0 : index
    %103 = vector.load %arg13[%c2_88, %c0_89, %c0_90] : memref<3x32x32xf32, #tpu.memory_space<vmem>>, vector<1x32x32xf32>
    %104 = vector.shape_cast %103 : vector<1x32x32xf32> to vector<32x32xf32>
    %cst_91 = arith.constant dense<0.000000e+00> : vector<32x32xf32>
    %105 = tpu.matmul %94, %104, %cst_91 {dimension_numbers = #tpu.dot_dimension_numbers<[1], [0], [0], [1], [0, 0, 1, 1], [], []>} : vector<32x32xf32>, vector<32x32xf32>, vector<32x32xf32> -> vector<32x32xf32>
    %106 = vector.shape_cast %105 : vector<32x32xf32> to vector<2x16x32xf32>
    "tpu.trace_start"() <{level = 10 : i32, message = "bij,bjk->bik"}> : () -> ()
    %cst_92 = arith.constant dense<0.000000e+00> : vector<2x16x32xf32>
    %107 = tpu.matmul %0, %106, %cst_92 {dimension_numbers = #tpu.dot_dimension_numbers<[2], [1], [1], [2], [0, 0, 0, 1, 1, 2], [0], [0]>} : vector<2x16x16xf32>, vector<2x16x32xf32>, vector<2x16x32xf32> -> vector<2x16x32xf32>
    "tpu.trace_stop"() : () -> ()
    %108 = math.tanh %107 : vector<2x16x32xf32>
    "tpu.trace_start"() <{level = 10 : i32, message = "bij,bjk->bik"}> : () -> ()
    %cst_93 = arith.constant dense<0.000000e+00> : vector<2x16x32xf32>
    %109 = tpu.matmul %30, %108, %cst_93 {dimension_numbers = #tpu.dot_dimension_numbers<[2], [1], [1], [2], [0, 0, 0, 1, 1, 2], [0], [0]>} : vector<2x16x16xf32>, vector<2x16x32xf32>, vector<2x16x32xf32> -> vector<2x16x32xf32>
    "tpu.trace_stop"() : () -> ()
    %110 = math.tanh %109 : vector<2x16x32xf32>
    %111 = vector.shape_cast %108 : vector<2x16x32xf32> to vector<32x32xf32>
    %112 = vector.shape_cast %110 : vector<2x16x32xf32> to vector<32x32xf32>
    %c2_94 = arith.constant 2 : index
    %c0_95 = arith.constant 0 : index
    %c0_96 = arith.constant 0 : index
    %113 = vector.load %arg14[%c2_94, %c0_95, %c0_96] : memref<3x32x32xf32, #tpu.memory_space<vmem>>, vector<1x32x32xf32>
    %114 = vector.shape_cast %113 : vector<1x32x32xf32> to vector<32x32xf32>
    %cst_97 = arith.constant dense<0.000000e+00> : vector<32x32xf32>
    %115 = tpu.matmul %111, %114, %cst_97 {dimension_numbers = #tpu.dot_dimension_numbers<[1], [0], [0], [1], [0, 0, 1, 1], [], []>} : vector<32x32xf32>, vector<32x32xf32>, vector<32x32xf32> -> vector<32x32xf32>
    %c2_98 = arith.constant 2 : index
    %c0_99 = arith.constant 0 : index
    %c0_100 = arith.constant 0 : index
    %116 = vector.load %arg15[%c2_98, %c0_99, %c0_100] : memref<3x32x32xf32, #tpu.memory_space<vmem>>, vector<1x32x32xf32>
    %117 = vector.shape_cast %116 : vector<1x32x32xf32> to vector<32x32xf32>
    %cst_101 = arith.constant dense<0.000000e+00> : vector<32x32xf32>
    %118 = tpu.matmul %112, %117, %cst_101 {dimension_numbers = #tpu.dot_dimension_numbers<[1], [0], [0], [1], [0, 0, 1, 1], [], []>} : vector<32x32xf32>, vector<32x32xf32>, vector<32x32xf32> -> vector<32x32xf32>
    %119 = arith.addf %115, %118 : vector<32x32xf32>
    %c2_102 = arith.constant 2 : index
    %c0_103 = arith.constant 0 : index
    %c0_104 = arith.constant 0 : index
    %120 = vector.load %arg16[%c2_102, %c0_103, %c0_104] : memref<3x1x32xf32, #tpu.memory_space<vmem>>, vector<1x1x32xf32>
    %121 = vector.shape_cast %120 : vector<1x1x32xf32> to vector<1x32xf32>
    %122 = vector.broadcast %121 : vector<1x32xf32> to vector<32x32xf32>
    %123 = arith.addf %119, %122 : vector<32x32xf32>
    %124 = math.tanh %123 : vector<32x32xf32>
    %c3 = arith.constant 3 : index
    %c0_105 = arith.constant 0 : index
    %c0_106 = arith.constant 0 : index
    %125 = vector.load %arg17[%c3, %c0_105, %c0_106] : memref<4x32x128xf32, #tpu.memory_space<vmem>>, vector<1x32x128xf32>
    %126 = vector.shape_cast %125 : vector<1x32x128xf32> to vector<32x128xf32>
    %cst_107 = arith.constant dense<0.000000e+00> : vector<32x128xf32>
    %127 = tpu.matmul %124, %126, %cst_107 {dimension_numbers = #tpu.dot_dimension_numbers<[1], [0], [0], [1], [0, 0, 1, 1], [], []>} : vector<32x32xf32>, vector<32x128xf32>, vector<32x128xf32> -> vector<32x128xf32>
    %128 = arith.addf %98, %127 : vector<32x128xf32>
    %c3_108 = arith.constant 3 : index
    %c0_109 = arith.constant 0 : index
    %c0_110 = arith.constant 0 : index
    %129 = vector.load %arg21[%c3_108, %c0_109, %c0_110] : memref<4x32x128xf32, #tpu.memory_space<vmem>>, vector<1x32x128xf32>
    %130 = vector.shape_cast %129 : vector<1x32x128xf32> to vector<32x128xf32>
    %cst_111 = arith.constant dense<0.000000e+00> : vector<32x128xf32>
    %131 = tpu.matmul %124, %130, %cst_111 {dimension_numbers = #tpu.dot_dimension_numbers<[1], [0], [0], [1], [0, 0, 1, 1], [], []>} : vector<32x32xf32>, vector<32x128xf32>, vector<32x128xf32> -> vector<32x128xf32>
    %132 = arith.addf %102, %131 : vector<32x128xf32>
    %133 = math.tanh %128 : vector<32x128xf32>
    %c0_112 = arith.constant 0 : index
    %c0_113 = arith.constant 0 : index
    %134 = vector.load %arg19[%c0_112, %c0_113] : memref<128x32xf32, #tpu.memory_space<vmem>>, vector<128x32xf32>
    %cst_114 = arith.constant dense<0.000000e+00> : vector<32x32xf32>
    %135 = tpu.matmul %133, %134, %cst_114 {dimension_numbers = #tpu.dot_dimension_numbers<[1], [0], [0], [1], [0, 0, 1, 1], [], []>} : vector<32x128xf32>, vector<128x32xf32>, vector<32x32xf32> -> vector<32x32xf32>
    %c0_115 = arith.constant 0 : index
    %c0_116 = arith.constant 0 : index
    %136 = vector.load %arg20[%c0_115, %c0_116] : memref<1x32xf32, #tpu.memory_space<vmem>>, vector<1x32xf32>
    %137 = vector.broadcast %136 : vector<1x32xf32> to vector<32x32xf32>
    %138 = arith.addf %135, %137 : vector<32x32xf32>
    %139 = math.tanh %132 : vector<32x128xf32>
    %c0_117 = arith.constant 0 : index
    %c0_118 = arith.constant 0 : index
    %140 = vector.load %arg23[%c0_117, %c0_118] : memref<128x32xf32, #tpu.memory_space<vmem>>, vector<128x32xf32>
    %cst_119 = arith.constant dense<0.000000e+00> : vector<32x32xf32>
    %141 = tpu.matmul %139, %140, %cst_119 {dimension_numbers = #tpu.dot_dimension_numbers<[1], [0], [0], [1], [0, 0, 1, 1], [], []>} : vector<32x128xf32>, vector<128x32xf32>, vector<32x32xf32> -> vector<32x32xf32>
    %c0_120 = arith.constant 0 : index
    %c0_121 = arith.constant 0 : index
    %142 = vector.load %arg24[%c0_120, %c0_121] : memref<1x32xf32, #tpu.memory_space<vmem>>, vector<1x32xf32>
    %143 = vector.broadcast %142 : vector<1x32xf32> to vector<32x32xf32>
    %144 = arith.addf %141, %143 : vector<32x32xf32>
    %145 = math.exp %144 : vector<32x32xf32>
    %146 = arith.mulf %1, %145 : vector<32x32xf32>
    %147 = arith.addf %146, %138 : vector<32x32xf32>
    %148 = tpu.concatenate %147, %138, %144 in 1 : vector<32x32xf32>, vector<32x32xf32>, vector<32x32xf32> -> vector<32x96xf32>
    %c0_122 = arith.constant 0 : index
    %c0_123 = arith.constant 0 : index
    %149 = vector.load %arg25[%c0_122, %c0_123] : memref<32x96xf32, #tpu.memory_space<vmem>>, vector<32x96xf32>
    tpu.vector_store %arg25[%c0_122, %c0_123], %148 {strides = array<i32>} : memref<32x96xf32, #tpu.memory_space<vmem>>, vector<32x96xf32>,
    return
  }
  func.func @transform_0(%arg0: i32) -> (i32, i32, i32) {
    %c0_i32 = arith.constant 0 : i32
    %c0_i32_0 = arith.constant 0 : i32
    %c0_i32_1 = arith.constant 0 : i32
    return %arg0, %c0_i32, %c0_i32_0 : i32, i32, i32
  }
  func.func @transform_1(%arg0: i32) -> (i32, i32) {
    %c0_i32 = arith.constant 0 : i32
    %c0_i32_0 = arith.constant 0 : i32
    return %arg0, %c0_i32 : i32, i32
  }
  func.func @transform_2(%arg0: i32) -> (i32, i32) {
    %c0_i32 = arith.constant 0 : i32
    %c0_i32_0 = arith.constant 0 : i32
    return %arg0, %c0_i32 : i32, i32
  }
  func.func @transform_3(%arg0: i32) -> (i32, i32) {
    %c0_i32 = arith.constant 0 : i32
    %c0_i32_0 = arith.constant 0 : i32
    return %arg0, %c0_i32 : i32, i32
  }
  func.func @transform_4(%arg0: i32) -> (i32, i32) {
    %c0_i32 = arith.constant 0 : i32
    %c0_i32_0 = arith.constant 0 : i32
    %c0_i32_1 = arith.constant 0 : i32
    return %c0_i32, %c0_i32_0 : i32, i32
  }
  func.func @transform_5(%arg0: i32) -> (i32, i32) {
    %c0_i32 = arith.constant 0 : i32
    %c0_i32_0 = arith.constant 0 : i32
    %c0_i32_1 = arith.constant 0 : i32
    return %c0_i32, %c0_i32_0 : i32, i32
  }
  func.func @transform_6(%arg0: i32) -> (i32, i32) {
    %c0_i32 = arith.constant 0 : i32
    %c0_i32_0 = arith.constant 0 : i32
    %c0_i32_1 = arith.constant 0 : i32
    return %c0_i32, %c0_i32_0 : i32, i32
  }
  func.func @transform_7(%arg0: i32) -> (i32, i32) {
    %c0_i32 = arith.constant 0 : i32
    %c0_i32_0 = arith.constant 0 : i32
    %c0_i32_1 = arith.constant 0 : i32
    return %c0_i32, %c0_i32_0 : i32, i32
  }
  func.func @transform_8(%arg0: i32) -> (i32, i32) {
    %c0_i32 = arith.constant 0 : i32
    %c0_i32_0 = arith.constant 0 : i32
    %c0_i32_1 = arith.constant 0 : i32
    return %c0_i32, %c0_i32_0 : i32, i32
  }
  func.func @transform_9(%arg0: i32) -> (i32, i32) {
    %c0_i32 = arith.constant 0 : i32
    %c0_i32_0 = arith.constant 0 : i32
    %c0_i32_1 = arith.constant 0 : i32
    return %c0_i32, %c0_i32_0 : i32, i32
  }
  func.func @transform_10(%arg0: i32) -> (i32, i32) {
    %c0_i32 = arith.constant 0 : i32
    %c0_i32_0 = arith.constant 0 : i32
    %c0_i32_1 = arith.constant 0 : i32
    return %c0_i32, %c0_i32_0 : i32, i32
  }
  func.func @transform_11(%arg0: i32) -> (i32, i32) {
    %c0_i32 = arith.constant 0 : i32
    %c0_i32_0 = arith.constant 0 : i32
    %c0_i32_1 = arith.constant 0 : i32
    return %c0_i32, %c0_i32_0 : i32, i32
  }
  func.func @transform_12(%arg0: i32) -> (i32, i32, i32) {
    %c0_i32 = arith.constant 0 : i32
    %c0_i32_0 = arith.constant 0 : i32
    %c0_i32_1 = arith.constant 0 : i32
    %c0_i32_2 = arith.constant 0 : i32
    return %c0_i32, %c0_i32_0, %c0_i32_1 : i32, i32, i32
  }
  func.func @transform_13(%arg0: i32) -> (i32, i32, i32) {
    %c0_i32 = arith.constant 0 : i32
    %c0_i32_0 = arith.constant 0 : i32
    %c0_i32_1 = arith.constant 0 : i32
    %c0_i32_2 = arith.constant 0 : i32
    return %c0_i32, %c0_i32_0, %c0_i32_1 : i32, i32, i32
  }
  func.func @transform_14(%arg0: i32) -> (i32, i32, i32) {
    %c0_i32 = arith.constant 0 : i32
    %c0_i32_0 = arith.constant 0 : i32
    %c0_i32_1 = arith.constant 0 : i32
    %c0_i32_2 = arith.constant 0 : i32
    return %c0_i32, %c0_i32_0, %c0_i32_1 : i32, i32, i32
  }
  func.func @transform_15(%arg0: i32) -> (i32, i32, i32) {
    %c0_i32 = arith.constant 0 : i32
    %c0_i32_0 = arith.constant 0 : i32
    %c0_i32_1 = arith.constant 0 : i32
    %c0_i32_2 = arith.constant 0 : i32
    return %c0_i32, %c0_i32_0, %c0_i32_1 : i32, i32, i32
  }
  func.func @transform_16(%arg0: i32) -> (i32, i32, i32) {
    %c0_i32 = arith.constant 0 : i32
    %c0_i32_0 = arith.constant 0 : i32
    %c0_i32_1 = arith.constant 0 : i32
    %c0_i32_2 = arith.constant 0 : i32
    return %c0_i32, %c0_i32_0, %c0_i32_1 : i32, i32, i32
  }
  func.func @transform_17(%arg0: i32) -> (i32, i32) {
    %c0_i32 = arith.constant 0 : i32
    %c0_i32_0 = arith.constant 0 : i32
    %c0_i32_1 = arith.constant 0 : i32
    return %c0_i32, %c0_i32_0 : i32, i32
  }
  func.func @transform_18(%arg0: i32) -> (i32, i32) {
    %c0_i32 = arith.constant 0 : i32
    %c0_i32_0 = arith.constant 0 : i32
    %c0_i32_1 = arith.constant 0 : i32
    return %c0_i32, %c0_i32_0 : i32, i32
  }
  func.func @transform_19(%arg0: i32) -> (i32, i32) {
    %c0_i32 = arith.constant 0 : i32
    %c0_i32_0 = arith.constant 0 : i32
    %c0_i32_1 = arith.constant 0 : i32
    return %c0_i32, %c0_i32_0 : i32, i32
  }
  func.func @transform_20(%arg0: i32) -> (i32, i32, i32) {
    %c0_i32 = arith.constant 0 : i32
    %c0_i32_0 = arith.constant 0 : i32
    %c0_i32_1 = arith.constant 0 : i32
    %c0_i32_2 = arith.constant 0 : i32
    return %c0_i32, %c0_i32_0, %c0_i32_1 : i32, i32, i32
  }
  func.func @transform_21(%arg0: i32) -> (i32, i32) {
    %c0_i32 = arith.constant 0 : i32
    %c0_i32_0 = arith.constant 0 : i32
    %c0_i32_1 = arith.constant 0 : i32
    return %c0_i32, %c0_i32_0 : i32, i32
  }
  func.func @transform_22(%arg0: i32) -> (i32, i32) {
    %c0_i32 = arith.constant 0 : i32
    %c0_i32_0 = arith.constant 0 : i32
    %c0_i32_1 = arith.constant 0 : i32
    return %c0_i32, %c0_i32_0 : i32, i32
  }
  func.func @transform_23(%arg0: i32) -> (i32, i32) {
    %c0_i32 = arith.constant 0 : i32
    %c0_i32_0 = arith.constant 0 : i32
    %c0_i32_1 = arith.constant 0 : i32
    return %c0_i32, %c0_i32_0 : i32, i32
  }
  func.func @transform_24(%arg0: i32) -> (i32, i32) {
    %c0_i32 = arith.constant 0 : i32
    %c0_i32_0 = arith.constant 0 : i32
    return %arg0, %c0_i32 : i32, i32
  }
}

</mosaic_0001>

<llo_original>
// kernel: tpu_custom_call.1
$region0: #{tpu_custom_call.1}
  #allocation0 [shape = 'u32[]', space=smem, size = 0x4, offset = 0x4, fixed_abs, tag = 'smem constant byte address 0x4 - core index']
  #allocation1 [shape = 'u32[144,128]{1,0:T(1,128)}', space=vmem, size = 0x12000, scoped, tag = 'internal scratch']
  %s0 = inlined_call_operand.vmem [shape: f32[2,16,16], index: 0, kind: input, shape index: {}]
  %s1 = inlined_call_operand.vmem [shape: f32[32,8], index: 1, kind: input, shape index: {}]
  %s2 = inlined_call_operand.vmem [shape: f32[512,8], index: 2, kind: input, shape index: {}]
  %s3 = inlined_call_operand.vmem [shape: f32[32,32], index: 3, kind: input, shape index: {}]
  %s4 = inlined_call_operand.vmem [shape: f32[8,128], index: 4, kind: input, shape index: {}]
  %s5 = inlined_call_operand.vmem [shape: f32[1,128], index: 5, kind: input, shape index: {}]
  %s6 = inlined_call_operand.vmem [shape: f32[128,32], index: 6, kind: input, shape index: {}]
  %s7 = inlined_call_operand.vmem [shape: f32[1,32], index: 7, kind: input, shape index: {}]
  %s8 = inlined_call_operand.vmem [shape: f32[8,128], index: 8, kind: input, shape index: {}]
  %s9 = inlined_call_operand.vmem [shape: f32[1,128], index: 9, kind: input, shape index: {}]
  %s10 = inlined_call_operand.vmem [shape: f32[128,32], index: 10, kind: input, shape index: {}]
  %s11 = inlined_call_operand.vmem [shape: f32[1,32], index: 11, kind: input, shape index: {}]
  %s12 = inlined_call_operand.vmem [shape: f32[3,32,32], index: 12, kind: input, shape index: {}]
  %s13 = inlined_call_operand.vmem [shape: f32[3,32,32], index: 13, kind: input, shape index: {}]
  %s14 = inlined_call_operand.vmem [shape: f32[3,32,32], index: 14, kind: input, shape index: {}]
  %s15 = inlined_call_operand.vmem [shape: f32[3,1,32], index: 15, kind: input, shape index: {}]
  %s16 = inlined_call_operand.vmem [shape: f32[4,32,128], index: 16, kind: input, shape index: {}]
  %s17 = inlined_call_operand.vmem [shape: f32[1,128], index: 17, kind: input, shape index: {}]
  %s18 = inlined_call_operand.vmem [shape: f32[128,32], index: 18, kind: input, shape index: {}]
  %s19 = inlined_call_operand.vmem [shape: f32[1,32], index: 19, kind: input, shape index: {}]
  %s20 = inlined_call_operand.vmem [shape: f32[4,32,128], index: 20, kind: input, shape index: {}]
  %s21 = inlined_call_operand.vmem [shape: f32[1,128], index: 21, kind: input, shape index: {}]
  %s22 = inlined_call_operand.vmem [shape: f32[128,32], index: 22, kind: input, shape index: {}]
  %s23 = inlined_call_operand.vmem [shape: f32[1,32], index: 23, kind: input, shape index: {}]
  %s24 = inlined_call_operand.hbm [shape: f32[32,96], index: 24, kind: output, shape index: {}]
  %s25 = sld [smem:[#allocation0]]
  $region106: #{tpu_custom_call.1} parent=0
    _
  %s27 = ssub.s32 1, %s25
  %s28 = scalar_select 0, %s27, %s25
  $region1: #{tpu_custom_call.1} parent=0
    #allocation2 [shape = 'u8[16384]{0}', space=vmem, size = 0x4000, scoped, tag = 'output window, operand 0, single buffered']
    #allocation3 [shape = 's32[1]{0}', space=sflag, size = 0x4, scoped, tag = 'scoped memory for tpu_custom_call.1']
    %29 = vsyncpa [#allocation3], 0
    // Predicated region
    $region2: #{tpu_custom_call.1} parent=1 // pred_check
      _
    $region3: #{tpu_custom_call.1} parent=1 // pred_check_branch
      %31 = sbr.rel (0) target = $region5
    $region4: #{tpu_custom_call.1} parent=1 // pred_region
      _
    $region5: #{tpu_custom_call.1} parent=1 // pred_fallthru
      _
    // Predicated region
    $region6: #{tpu_custom_call.1} parent=1 // pred_check
      _
    $region7: #{tpu_custom_call.1} parent=1 // pred_check_branch
      %33 = sbr.rel (0) target = $region9
    $region8: #{tpu_custom_call.1} parent=1 // pred_region
      _
    $region9: #{tpu_custom_call.1} parent=1 // pred_fallthru
      _
    // Predicated region
    $region10: #{tpu_custom_call.1} parent=1 // pred_check
      _
    $region11: #{tpu_custom_call.1} parent=1 // pred_check_branch
      %35 = sbr.rel (0) target = $region13
    $region12: #{tpu_custom_call.1} parent=1 // pred_region
      _
    $region13: #{tpu_custom_call.1} parent=1 // pred_fallthru
      _
    // Predicated region
    $region14: #{tpu_custom_call.1} parent=1 // pred_check
      _
    $region15: #{tpu_custom_call.1} parent=1 // pred_check_branch
      %37 = sbr.rel (0) target = $region17
    $region16: #{tpu_custom_call.1} parent=1 // pred_region
      _
    $region17: #{tpu_custom_call.1} parent=1 // pred_fallthru
      _
    // Predicated region
    $region18: #{tpu_custom_call.1} parent=1 // pred_check
      _
    $region19: #{tpu_custom_call.1} parent=1 // pred_check_branch
      %39 = sbr.rel (0) target = $region21
    $region20: #{tpu_custom_call.1} parent=1 // pred_region
      _
    $region21: #{tpu_custom_call.1} parent=1 // pred_fallthru
      _
    // Predicated region
    $region22: #{tpu_custom_call.1} parent=1 // pred_check
      _
    $region23: #{tpu_custom_call.1} parent=1 // pred_check_branch
      %41 = sbr.rel (0) target = $region25
    $region24: #{tpu_custom_call.1} parent=1 // pred_region
      _
    $region25: #{tpu_custom_call.1} parent=1 // pred_fallthru
      _
    // Predicated region
    $region26: #{tpu_custom_call.1} parent=1 // pred_check
      _
    $region27: #{tpu_custom_call.1} parent=1 // pred_check_branch
      %43 = sbr.rel (0) target = $region29
    $region28: #{tpu_custom_call.1} parent=1 // pred_region
      _
    $region29: #{tpu_custom_call.1} parent=1 // pred_fallthru
      _
    // Predicated region
    $region30: #{tpu_custom_call.1} parent=1 // pred_check
      _
    $region31: #{tpu_custom_call.1} parent=1 // pred_check_branch
      %45 = sbr.rel (0) target = $region33
    $region32: #{tpu_custom_call.1} parent=1 // pred_region
      _
    $region33: #{tpu_custom_call.1} parent=1 // pred_fallthru
      _
    // Predicated region
    $region34: #{tpu_custom_call.1} parent=1 // pred_check
      _
    $region35: #{tpu_custom_call.1} parent=1 // pred_check_branch
      %47 = sbr.rel (0) target = $region37
    $region36: #{tpu_custom_call.1} parent=1 // pred_region
      _
    $region37: #{tpu_custom_call.1} parent=1 // pred_fallthru
      _
    // Predicated region
    $region38: #{tpu_custom_call.1} parent=1 // pred_check
      _
    $region39: #{tpu_custom_call.1} parent=1 // pred_check_branch
      %49 = sbr.rel (0) target = $region41
    $region40: #{tpu_custom_call.1} parent=1 // pred_region
      _
    $region41: #{tpu_custom_call.1} parent=1 // pred_fallthru
      _
    // Predicated region
    $region42: #{tpu_custom_call.1} parent=1 // pred_check
      _
    $region43: #{tpu_custom_call.1} parent=1 // pred_check_branch
      %51 = sbr.rel (0) target = $region45
    $region44: #{tpu_custom_call.1} parent=1 // pred_region
      _
    $region45: #{tpu_custom_call.1} parent=1 // pred_fallthru
      _
    // Predicated region
    $region46: #{tpu_custom_call.1} parent=1 // pred_check
      _
    $region47: #{tpu_custom_call.1} parent=1 // pred_check_branch
      %53 = sbr.rel (0) target = $region49
    $region48: #{tpu_custom_call.1} parent=1 // pred_region
      _
    $region49: #{tpu_custom_call.1} parent=1 // pred_fallthru
      _
    // Predicated region
    $region50: #{tpu_custom_call.1} parent=1 // pred_check
      _
    $region51: #{tpu_custom_call.1} parent=1 // pred_check_branch
      %55 = sbr.rel (0) target = $region53
    $region52: #{tpu_custom_call.1} parent=1 // pred_region
      _
    $region53: #{tpu_custom_call.1} parent=1 // pred_fallthru
      _
    // Predicated region
    $region54: #{tpu_custom_call.1} parent=1 // pred_check
      _
    $region55: #{tpu_custom_call.1} parent=1 // pred_check_branch
      %57 = sbr.rel (0) target = $region57
    $region56: #{tpu_custom_call.1} parent=1 // pred_region
      _
    $region57: #{tpu_custom_call.1} parent=1 // pred_fallthru
      _
    // Predicated region
    $region58: #{tpu_custom_call.1} parent=1 // pred_check
      _
    $region59: #{tpu_custom_call.1} parent=1 // pred_check_branch
      %59 = sbr.rel (0) target = $region61
    $region60: #{tpu_custom_call.1} parent=1 // pred_region
      _
    $region61: #{tpu_custom_call.1} parent=1 // pred_fallthru
      _
    // Predicated region
    $region62: #{tpu_custom_call.1} parent=1 // pred_check
      _
    $region63: #{tpu_custom_call.1} parent=1 // pred_check_branch
      %61 = sbr.rel (0) target = $region65
    $region64: #{tpu_custom_call.1} parent=1 // pred_region
      _
    $region65: #{tpu_custom_call.1} parent=1 // pred_fallthru
      _
    // Predicated region
    $region66: #{tpu_custom_call.1} parent=1 // pred_check
      _
    $region67: #{tpu_custom_call.1} parent=1 // pred_check_branch
      %63 = sbr.rel (0) target = $region69
    $region68: #{tpu_custom_call.1} parent=1 // pred_region
      _
    $region69: #{tpu_custom_call.1} parent=1 // pred_fallthru
      _
    // Predicated region
    $region70: #{tpu_custom_call.1} parent=1 // pred_check
      _
    $region71: #{tpu_custom_call.1} parent=1 // pred_check_branch
      %65 = sbr.rel (0) target = $region73
    $region72: #{tpu_custom_call.1} parent=1 // pred_region
      _
    $region73: #{tpu_custom_call.1} parent=1 // pred_fallthru
      _
    // Predicated region
    $region74: #{tpu_custom_call.1} parent=1 // pred_check
      _
    $region75: #{tpu_custom_call.1} parent=1 // pred_check_branch
      %67 = sbr.rel (0) target = $region77
    $region76: #{tpu_custom_call.1} parent=1 // pred_region
      _
    $region77: #{tpu_custom_call.1} parent=1 // pred_fallthru
      _
    // Predicated region
    $region78: #{tpu_custom_call.1} parent=1 // pred_check
      _
    $region79: #{tpu_custom_call.1} parent=1 // pred_check_branch
      %69 = sbr.rel (0) target = $region81
    $region80: #{tpu_custom_call.1} parent=1 // pred_region
      _
    $region81: #{tpu_custom_call.1} parent=1 // pred_fallthru
      _
    // Predicated region
    $region82: #{tpu_custom_call.1} parent=1 // pred_check
      _
    $region83: #{tpu_custom_call.1} parent=1 // pred_check_branch
      %71 = sbr.rel (0) target = $region85
    $region84: #{tpu_custom_call.1} parent=1 // pred_region
      _
    $region85: #{tpu_custom_call.1} parent=1 // pred_fallthru
      _
    // Predicated region
    $region86: #{tpu_custom_call.1} parent=1 // pred_check
      _
    $region87: #{tpu_custom_call.1} parent=1 // pred_check_branch
      %73 = sbr.rel (0) target = $region89
    $region88: #{tpu_custom_call.1} parent=1 // pred_region
      _
    $region89: #{tpu_custom_call.1} parent=1 // pred_fallthru
      _
    // Predicated region
    $region90: #{tpu_custom_call.1} parent=1 // pred_check
      _
    $region91: #{tpu_custom_call.1} parent=1 // pred_check_branch
      %75 = sbr.rel (0) target = $region93
    $region92: #{tpu_custom_call.1} parent=1 // pred_region
      _
    $region93: #{tpu_custom_call.1} parent=1 // pred_fallthru
      _
    // Predicated region
    $region94: #{tpu_custom_call.1} parent=1 // pred_check
      _
    $region95: #{tpu_custom_call.1} parent=1 // pred_check_branch
      %77 = sbr.rel (0) target = $region97
    $region96: #{tpu_custom_call.1} parent=1 // pred_region
      _
    $region97: #{tpu_custom_call.1} parent=1 // pred_fallthru
      _
    %v78 = vld [vmem:[%s0] sm:$0xff]
    %v79 = vld [vmem:[%s0 + $0x8] sm:$0xff]
    %v80 = vld [vmem:[%s0 + $0x10] sm:$0xff]
    %v81 = vld [vmem:[%s0 + $0x18] sm:$0xff]
    %v82 = vld [vmem:[%s3] sm:$0xff]
    %v83 = vld [vmem:[%s3 + $0x8] sm:$0xff]
    %v84 = vld [vmem:[%s3 + $0x10] sm:$0xff]
    %v85 = vld [vmem:[%s3 + $0x18] sm:$0xff]
    %v86 = vld [vmem:[%s1] sm:$0xff]
    %v87 = vld [vmem:[%s1 + $0x8] sm:$0xff]
    %v88 = vld [vmem:[%s1 + $0x10] sm:$0xff]
    %v89 = vld [vmem:[%s1 + $0x18] sm:$0xff]
    %v90 = vld [vmem:[%s4] sm:$0xff]
    %v91 = vld [vmem:[%s5] sm:$0x1]
    %v93 = vlaneseq
    %v94 = vshrl.u32 %v93, 7
    %v95 = vsub.s32 0, %v94
    %v96 = vrot.slane %v91, %v95
    %vm98 = vcmask 64512
    %v100 = vsel %vm98, %v86, 0
    %v103 = vsel %vm98, %v87, 0
    %v106 = vsel %vm98, %v88, 0
    %v109 = vsel %vm98, %v89, 0
    %111 = vmatprep.subr.mxu0 0.0
    %112 = vmatpush1.msra.mxu0 %v90
    %113 = vmatprep.subr.mxu0 0.0
    %114 = vmatpush1.msra.mxu0 0.0
    %115 = vmatprep.subr.mxu0 0.0
    %116 = vmatpush1.msra.mxu0 0.0
    %117 = vmatprep.subr.mxu0 0.0
    %118 = vmatpush1.msra.mxu0 0.0
    %119 = vmatprep.subr.mxu0 0.0
    %120 = vmatpush1.msra.mxu0 0.0
    %121 = vmatprep.subr.mxu0 0.0
    %122 = vmatpush1.msra.mxu0 0.0
    %123 = vmatprep.subr.mxu0 0.0
    %124 = vmatpush1.msra.mxu0 0.0
    %125 = vmatprep.subr.mxu0 0.0
    %126 = vmatpush1.msra.mxu0 0.0
    %127 = vmatprep.subr.mxu0 0.0
    %128 = vmatpush1.msra.mxu0 0.0
    %129 = vmatprep.subr.mxu0 0.0
    %130 = vmatpush1.msra.mxu0 0.0
    %131 = vmatprep.subr.mxu0 0.0
    %132 = vmatpush1.msra.mxu0 0.0
    %133 = vmatprep.subr.mxu0 0.0
    %134 = vmatpush1.msra.mxu0 0.0
    %135 = vmatprep.subr.mxu0 0.0
    %136 = vmatpush1.msra.mxu0 0.0
    %137 = vmatprep.subr.mxu0 0.0
    %138 = vmatpush1.msra.mxu0 0.0
    %139 = vmatprep.subr.mxu0 0.0
    %140 = vmatpush1.msra.mxu0 0.0
    %141 = vmatprep.subr.mxu0 0.0
    %142 = vmatpush1.msra.mxu0 0.0
    %143 = vmatprep.subr.mxu0 0.0
    %144 = vmatpush1.msra.mxu0 0.0
    %145 = vmatprep.subr.mxu0 0.0
    %146 = vmatpush1.msra.mxu0 0.0
    %147 = vmatprep.subr.mxu0 0.0
    %148 = vmatpush1.msra.mxu0 0.0
    %149 = vmatprep.subr.mxu0 0.0
    %150 = vmatpush1.msra.mxu0 0.0
    %151 = vmatprep.subr.mxu0 0.0
    %152 = vmatpush1.msra.mxu0 0.0
    %153 = vmatprep.subr.mxu0 0.0
    %154 = vmatpush1.msra.mxu0 0.0
    %155 = vmatprep.subr.mxu0 0.0
    %156 = vmatpush1.msra.mxu0 0.0
    %157 = vmatprep.subr.mxu0 0.0
    %158 = vmatpush1.msra.mxu0 0.0
    %159 = vmatprep.subr.mxu0 0.0
    %160 = vmatpush1.msra.mxu0 0.0
    %161 = vmatprep.subr.mxu0 0.0
    %162 = vmatpush1.msra.mxu0 0.0
    %163 = vmatprep.subr.mxu0 0.0
    %164 = vmatpush1.msra.mxu0 0.0
    %165 = vmatprep.subr.mxu0 0.0
    %166 = vmatpush1.msra.mxu0 0.0
    %167 = vmatprep.subr.mxu0 0.0
    %168 = vmatpush1.msra.mxu0 0.0
    %169 = vmatprep.subr.mxu0 0.0
    %170 = vmatpush1.msra.mxu0 0.0
    %171 = vmatprep.subr.mxu0 0.0
    %172 = vmatpush1.msra.mxu0 0.0
    %173 = vmatprep.subr.mxu0 0.0
    %174 = vmatpush1.msra.mxu0 0.0
    %175 = vmatprep.mubr.f32.mxu0 0.0
    %176 = vmatmul.mubr.f32.gmra.mrb[0].mxu0 %v100
    %v177 = vpop.f32.mrb[0].mxu0
    %v178 = vadd.f32 %v96, %v177
    %v179 = vpop.f32.mrb[0].mxu0
    %180 = vmatprep.mubr.f32.mxu0 0.0
    %181 = vmatmul.mubr.f32.gmra.mrb[0].mxu0 %v103
    %v182 = vpop.f32.mrb[0].mxu0
    %v183 = vadd.f32 %v96, %v182
    %v184 = vpop.f32.mrb[0].mxu0
    %185 = vmatprep.mubr.f32.mxu0 0.0
    %186 = vmatmul.mubr.f32.gmra.mrb[0].mxu0 %v106
    %v187 = vpop.f32.mrb[0].mxu0
    %v188 = vadd.f32 %v96, %v187
    %v189 = vpop.f32.mrb[0].mxu0
    %190 = vmatprep.mubr.f32.mxu0 0.0
    %191 = vmatmul.mubr.f32.gmra.mrb[0].mxu0 %v109
    %v192 = vpop.f32.mrb[0].mxu0
    %v193 = vadd.f32 %v96, %v192
    %v194 = vpop.f32.mrb[0].mxu0
    %195 = vdwg.mxu0
    %v196 = vtanh.pop %v178
    %v197 = vtanh.pop %v183
    %v198 = vtanh.pop %v188
    %v199 = vtanh.pop %v193
    %v200 = vld [vmem:[%s6] sm:$0xff]
    %v201 = vld [vmem:[%s6 + $0x8] sm:$0xff]
    %v202 = vld [vmem:[%s6 + $0x10] sm:$0xff]
    %v203 = vld [vmem:[%s6 + $0x18] sm:$0xff]
    %v204 = vld [vmem:[%s6 + $0x20] sm:$0xff]
    %v205 = vld [vmem:[%s6 + $0x28] sm:$0xff]
    %v206 = vld [vmem:[%s6 + $0x30] sm:$0xff]
    %v207 = vld [vmem:[%s6 + $0x38] sm:$0xff]
    %v208 = vld [vmem:[%s6 + $0x40] sm:$0xff]
    %v209 = vld [vmem:[%s6 + $0x48] sm:$0xff]
    %v210 = vld [vmem:[%s6 + $0x50] sm:$0xff]
    %v211 = vld [vmem:[%s6 + $0x58] sm:$0xff]
    %v212 = vld [vmem:[%s6 + $0x60] sm:$0xff]
    %v213 = vld [vmem:[%s6 + $0x68] sm:$0xff]
    %v214 = vld [vmem:[%s6 + $0x70] sm:$0xff]
    %v215 = vld [vmem:[%s6 + $0x78] sm:$0xff]
    %v216 = vld [vmem:[%s7] sm:$0x1]
    %v218 = vlaneseq
    %v219 = vshrl.u32 %v218, 7
    %v220 = vsub.s32 0, %v219
    %v221 = vrot.slane %v216, %v220
    %223 = vmatprep.subr.mxu0 0.0
    %224 = vmatpush1.msra.mxu0 %v200
    %225 = vmatprep.subr.mxu0 0.0
    %226 = vmatpush1.msra.mxu0 %v201
    %227 = vmatprep.subr.mxu0 0.0
    %228 = vmatpush1.msra.mxu0 %v202
    %229 = vmatprep.subr.mxu0 0.0
    %230 = vmatpush1.msra.mxu0 %v203
    %231 = vmatprep.subr.mxu0 0.0
    %232 = vmatpush1.msra.mxu0 %v204
    %233 = vmatprep.subr.mxu0 0.0
    %234 = vmatpush1.msra.mxu0 %v205
    %235 = vmatprep.subr.mxu0 0.0
    %236 = vmatpush1.msra.mxu0 %v206
    %237 = vmatprep.subr.mxu0 0.0
    %238 = vmatpush1.msra.mxu0 %v207
    %239 = vmatprep.subr.mxu0 0.0
    %240 = vmatpush1.msra.mxu0 %v208
    %241 = vmatprep.subr.mxu0 0.0
    %242 = vmatpush1.msra.mxu0 %v209
    %243 = vmatprep.subr.mxu0 0.0
    %244 = vmatpush1.msra.mxu0 %v210
    %245 = vmatprep.subr.mxu0 0.0
    %246 = vmatpush1.msra.mxu0 %v211
    %247 = vmatprep.subr.mxu0 0.0
    %248 = vmatpush1.msra.mxu0 %v212
    %249 = vmatprep.subr.mxu0 0.0
    %250 = vmatpush1.msra.mxu0 %v213
    %251 = vmatprep.subr.mxu0 0.0
    %252 = vmatpush1.msra.mxu0 %v214
    %253 = vmatprep.subr.mxu0 0.0
    %254 = vmatpush1.msra.mxu0 %v215
    %255 = vmatprep.subr.mxu0 0.0
    %256 = vmatpush1.msra.mxu0 0.0
    %257 = vmatprep.subr.mxu0 0.0
    %258 = vmatpush1.msra.mxu0 0.0
    %259 = vmatprep.subr.mxu0 0.0
    %260 = vmatpush1.msra.mxu0 0.0
    %261 = vmatprep.subr.mxu0 0.0
    %262 = vmatpush1.msra.mxu0 0.0
    %263 = vmatprep.subr.mxu0 0.0
    %264 = vmatpush1.msra.mxu0 0.0
    %265 = vmatprep.subr.mxu0 0.0
    %266 = vmatpush1.msra.mxu0 0.0
    %267 = vmatprep.subr.mxu0 0.0
    %268 = vmatpush1.msra.mxu0 0.0
    %269 = vmatprep.subr.mxu0 0.0
    %270 = vmatpush1.msra.mxu0 0.0
    %271 = vmatprep.subr.mxu0 0.0
    %272 = vmatpush1.msra.mxu0 0.0
    %273 = vmatprep.subr.mxu0 0.0
    %274 = vmatpush1.msra.mxu0 0.0
    %275 = vmatprep.subr.mxu0 0.0
    %276 = vmatpush1.msra.mxu0 0.0
    %277 = vmatprep.subr.mxu0 0.0
    %278 = vmatpush1.msra.mxu0 0.0
    %279 = vmatprep.subr.mxu0 0.0
    %280 = vmatpush1.msra.mxu0 0.0
    %281 = vmatprep.subr.mxu0 0.0
    %282 = vmatpush1.msra.mxu0 0.0
    %283 = vmatprep.subr.mxu0 0.0
    %284 = vmatpush1.msra.mxu0 0.0
    %285 = vmatprep.subr.mxu0 0.0
    %286 = vmatpush1.msra.mxu0 0.0
    %287 = vmatprep.mubr.f32.mxu0 0.0
    %288 = vmatmul.mubr.f32.gmra.mrb[0].mxu0 %v196
    %v289 = vpop.f32.mrb[0].mxu0
    %v290 = vadd.f32 %v221, %v289
    %v291 = vpop.f32.mrb[0].mxu0
    %292 = vmatprep.mubr.f32.mxu0 0.0
    %293 = vmatmul.mubr.f32.gmra.mrb[0].mxu0 %v197
    %v294 = vpop.f32.mrb[0].mxu0
    %v295 = vadd.f32 %v221, %v294
    %v296 = vpop.f32.mrb[0].mxu0
    %297 = vmatprep.mubr.f32.mxu0 0.0
    %298 = vmatmul.mubr.f32.gmra.mrb[0].mxu0 %v198
    %v299 = vpop.f32.mrb[0].mxu0
    %v300 = vadd.f32 %v221, %v299
    %v301 = vpop.f32.mrb[0].mxu0
    %302 = vmatprep.mubr.f32.mxu0 0.0
    %303 = vmatmul.mubr.f32.gmra.mrb[0].mxu0 %v199
    %v304 = vpop.f32.mrb[0].mxu0
    %v305 = vadd.f32 %v221, %v304
    %v306 = vpop.f32.mrb[0].mxu0
    %307 = vdwg.mxu0
    %v308 = vtanh.pop %v290
    %v309 = vtanh.pop %v295
    %v310 = vtanh.pop %v300
    %v311 = vtanh.pop %v305
    %v312 = vld [vmem:[%s2] sm:$0xff]
    %v313 = vld [vmem:[%s2 + $0x8] sm:$0xff]
    %v314 = vld [vmem:[%s2 + $0x10] sm:$0xff]
    %v315 = vld [vmem:[%s2 + $0x18] sm:$0xff]
    %v316 = vld [vmem:[%s2 + $0x20] sm:$0xff]
    %v317 = vld [vmem:[%s2 + $0x28] sm:$0xff]
    %v318 = vld [vmem:[%s2 + $0x30] sm:$0xff]
    %v319 = vld [vmem:[%s2 + $0x38] sm:$0xff]
    %v320 = vld [vmem:[%s2 + $0x40] sm:$0xff]
    %v321 = vld [vmem:[%s2 + $0x48] sm:$0xff]
    %v322 = vld [vmem:[%s2 + $0x50] sm:$0xff]
    %v323 = vld [vmem:[%s2 + $0x58] sm:$0xff]
    %v324 = vld [vmem:[%s2 + $0x60] sm:$0xff]
    %v325 = vld [vmem:[%s2 + $0x68] sm:$0xff]
    %v326 = vld [vmem:[%s2 + $0x70] sm:$0xff]
    %v327 = vld [vmem:[%s2 + $0x78] sm:$0xff]
    %v328 = vld [vmem:[%s2 + $0x80] sm:$0xff]
    %v329 = vld [vmem:[%s2 + $0x88] sm:$0xff]
    %v330 = vld [vmem:[%s2 + $0x90] sm:$0xff]
    %v331 = vld [vmem:[%s2 + $0x98] sm:$0xff]
    %v332 = vld [vmem:[%s2 + $0xa0] sm:$0xff]
    %v333 = vld [vmem:[%s2 + $0xa8] sm:$0xff]
    %v334 = vld [vmem:[%s2 + $0xb0] sm:$0xff]
    %v335 = vld [vmem:[%s2 + $0xb8] sm:$0xff]
    %v336 = vld [vmem:[%s2 + $0xc0] sm:$0xff]
    %v337 = vld [vmem:[%s2 + $0xc8] sm:$0xff]
    %v338 = vld [vmem:[%s2 + $0xd0] sm:$0xff]
    %v339 = vld [vmem:[%s2 + $0xd8] sm:$0xff]
    %v340 = vld [vmem:[%s2 + $0xe0] sm:$0xff]
    %v341 = vld [vmem:[%s2 + $0xe8] sm:$0xff]
    %v342 = vld [vmem:[%s2 + $0xf0] sm:$0xff]
    %v343 = vld [vmem:[%s2 + $0xf8] sm:$0xff]
    %v344 = vld [vmem:[%s2 + $0x100] sm:$0xff]
    %v345 = vld [vmem:[%s2 + $0x108] sm:$0xff]
    %v346 = vld [vmem:[%s2 + $0x110] sm:$0xff]
    %v347 = vld [vmem:[%s2 + $0x118] sm:$0xff]
    %v348 = vld [vmem:[%s2 + $0x120] sm:$0xff]
    %v349 = vld [vmem:[%s2 + $0x128] sm:$0xff]
    %v350 = vld [vmem:[%s2 + $0x130] sm:$0xff]
    %v351 = vld [vmem:[%s2 + $0x138] sm:$0xff]
    %v352 = vld [vmem:[%s2 + $0x140] sm:$0xff]
    %v353 = vld [vmem:[%s2 + $0x148] sm:$0xff]
    %v354 = vld [vmem:[%s2 + $0x150] sm:$0xff]
    %v355 = vld [vmem:[%s2 + $0x158] sm:$0xff]
    %v356 = vld [vmem:[%s2 + $0x160] sm:$0xff]
    %v357 = vld [vmem:[%s2 + $0x168] sm:$0xff]
    %v358 = vld [vmem:[%s2 + $0x170] sm:$0xff]
    %v359 = vld [vmem:[%s2 + $0x178] sm:$0xff]
    %v360 = vld [vmem:[%s2 + $0x180] sm:$0xff]
    %v361 = vld [vmem:[%s2 + $0x188] sm:$0xff]
    %v362 = vld [vmem:[%s2 + $0x190] sm:$0xff]
    %v363 = vld [vmem:[%s2 + $0x198] sm:$0xff]
    %v364 = vld [vmem:[%s2 + $0x1a0] sm:$0xff]
    %v365 = vld [vmem:[%s2 + $0x1a8] sm:$0xff]
    %v366 = vld [vmem:[%s2 + $0x1b0] sm:$0xff]
    %v367 = vld [vmem:[%s2 + $0x1b8] sm:$0xff]
    %v368 = vld [vmem:[%s2 + $0x1c0] sm:$0xff]
    %v369 = vld [vmem:[%s2 + $0x1c8] sm:$0xff]
    %v370 = vld [vmem:[%s2 + $0x1d0] sm:$0xff]
    %v371 = vld [vmem:[%s2 + $0x1d8] sm:$0xff]
    %v372 = vld [vmem:[%s2 + $0x1e0] sm:$0xff]
    %v373 = vld [vmem:[%s2 + $0x1e8] sm:$0xff]
    %v374 = vld [vmem:[%s2 + $0x1f0] sm:$0xff]
    %v375 = vld [vmem:[%s2 + $0x1f8] sm:$0xff]
    %v376 = vld [vmem:[%s8] sm:$0xff]
    %v377 = vld [vmem:[%s9] sm:$0x1]
    %v379 = vlaneseq
    %v380 = vshrl.u32 %v379, 7
    %v381 = vsub.s32 0, %v380
    %v382 = vrot.slane %v377, %v381
    %v385 = vsel %vm98, %v312, 0
    %v388 = vsel %vm98, %v313, 0
    %v391 = vsel %vm98, %v314, 0
    %v394 = vsel %vm98, %v315, 0
    %v397 = vsel %vm98, %v316, 0
    %v400 = vsel %vm98, %v317, 0
    %v403 = vsel %vm98, %v318, 0
    %v406 = vsel %vm98, %v319, 0
    %v409 = vsel %vm98, %v320, 0
    %v412 = vsel %vm98, %v321, 0
    %v415 = vsel %vm98, %v322, 0
    %v418 = vsel %vm98, %v323, 0
    %v421 = vsel %vm98, %v324, 0
    %v424 = vsel %vm98, %v325, 0
    %v427 = vsel %vm98, %v326, 0
    %v430 = vsel %vm98, %v327, 0
    %v433 = vsel %vm98, %v328, 0
    %v436 = vsel %vm98, %v329, 0
    %v439 = vsel %vm98, %v330, 0
    %v442 = vsel %vm98, %v331, 0
    %v445 = vsel %vm98, %v332, 0
    %v448 = vsel %vm98, %v333, 0
    %v451 = vsel %vm98, %v334, 0
    %v454 = vsel %vm98, %v335, 0
    %v457 = vsel %vm98, %v336, 0
    %v460 = vsel %vm98, %v337, 0
    %v463 = vsel %vm98, %v338, 0
    %v466 = vsel %vm98, %v339, 0
    %v469 = vsel %vm98, %v340, 0
    %v472 = vsel %vm98, %v341, 0
    %v475 = vsel %vm98, %v342, 0
    %v478 = vsel %vm98, %v343, 0
    %v481 = vsel %vm98, %v344, 0
    %v484 = vsel %vm98, %v345, 0
    %v487 = vsel %vm98, %v346, 0
    %v490 = vsel %vm98, %v347, 0
    %v493 = vsel %vm98, %v348, 0
    %v496 = vsel %vm98, %v349, 0
    %v499 = vsel %vm98, %v350, 0
    %v502 = vsel %vm98, %v351, 0
    %v505 = vsel %vm98, %v352, 0
    %v508 = vsel %vm98, %v353, 0
    %v511 = vsel %vm98, %v354, 0
    %v514 = vsel %vm98, %v355, 0
    %v517 = vsel %vm98, %v356, 0
    %v520 = vsel %vm98, %v357, 0
    %v523 = vsel %vm98, %v358, 0
    %v526 = vsel %vm98, %v359, 0
    %v529 = vsel %vm98, %v360, 0
    %v532 = vsel %vm98, %v361, 0
    %v535 = vsel %vm98, %v362, 0
    %v538 = vsel %vm98, %v363, 0
    %v541 = vsel %vm98, %v364, 0
    %v544 = vsel %vm98, %v365, 0
    %v547 = vsel %vm98, %v366, 0
    %v550 = vsel %vm98, %v367, 0
    %v553 = vsel %vm98, %v368, 0
    %v556 = vsel %vm98, %v369, 0
    %v559 = vsel %vm98, %v370, 0
    %v562 = vsel %vm98, %v371, 0
    %v565 = vsel %vm98, %v372, 0
    %v568 = vsel %vm98, %v373, 0
    %v571 = vsel %vm98, %v374, 0
    %v574 = vsel %vm98, %v375, 0
    %576 = vmatprep.subr.mxu0 0.0
    %577 = vmatpush1.msra.mxu0 %v376
    %578 = vmatprep.subr.mxu0 0.0
    %579 = vmatpush1.msra.mxu0 0.0
    %580 = vmatprep.subr.mxu0 0.0
    %581 = vmatpush1.msra.mxu0 0.0
    %582 = vmatprep.subr.mxu0 0.0
    %583 = vmatpush1.msra.mxu0 0.0
    %584 = vmatprep.subr.mxu0 0.0
    %585 = vmatpush1.msra.mxu0 0.0
    %586 = vmatprep.subr.mxu0 0.0
    %587 = vmatpush1.msra.mxu0 0.0
    %588 = vmatprep.subr.mxu0 0.0
    %589 = vmatpush1.msra.mxu0 0.0
    %590 = vmatprep.subr.mxu0 0.0
    %591 = vmatpush1.msra.mxu0 0.0
    %592 = vmatprep.subr.mxu0 0.0
    %593 = vmatpush1.msra.mxu0 0.0
    %594 = vmatprep.subr.mxu0 0.0
    %595 = vmatpush1.msra.mxu0 0.0
    %596 = vmatprep.subr.mxu0 0.0
    %597 = vmatpush1.msra.mxu0 0.0
    %598 = vmatprep.subr.mxu0 0.0
    %599 = vmatpush1.msra.mxu0 0.0
    %600 = vmatprep.subr.mxu0 0.0
    %601 = vmatpush1.msra.mxu0 0.0
    %602 = vmatprep.subr.mxu0 0.0
    %603 = vmatpush1.msra.mxu0 0.0
    %604 = vmatprep.subr.mxu0 0.0
    %605 = vmatpush1.msra.mxu0 0.0
    %606 = vmatprep.subr.mxu0 0.0
    %607 = vmatpush1.msra.mxu0 0.0
    %608 = vmatprep.subr.mxu0 0.0
    %609 = vmatpush1.msra.mxu0 0.0
    %610 = vmatprep.subr.mxu0 0.0
    %611 = vmatpush1.msra.mxu0 0.0
    %612 = vmatprep.subr.mxu0 0.0
    %613 = vmatpush1.msra.mxu0 0.0
    %614 = vmatprep.subr.mxu0 0.0
    %615 = vmatpush1.msra.mxu0 0.0
    %616 = vmatprep.subr.mxu0 0.0
    %617 = vmatpush1.msra.mxu0 0.0
    %618 = vmatprep.subr.mxu0 0.0
    %619 = vmatpush1.msra.mxu0 0.0
    %620 = vmatprep.subr.mxu0 0.0
    %621 = vmatpush1.msra.mxu0 0.0
    %622 = vmatprep.subr.mxu0 0.0
    %623 = vmatpush1.msra.mxu0 0.0
    %624 = vmatprep.subr.mxu0 0.0
    %625 = vmatpush1.msra.mxu0 0.0
    %626 = vmatprep.subr.mxu0 0.0
    %627 = vmatpush1.msra.mxu0 0.0
    %628 = vmatprep.subr.mxu0 0.0
    %629 = vmatpush1.msra.mxu0 0.0
    %630 = vmatprep.subr.mxu0 0.0
    %631 = vmatpush1.msra.mxu0 0.0
    %632 = vmatprep.subr.mxu0 0.0
    %633 = vmatpush1.msra.mxu0 0.0
    %634 = vmatprep.subr.mxu0 0.0
    %635 = vmatpush1.msra.mxu0 0.0
    %636 = vmatprep.subr.mxu0 0.0
    %637 = vmatpush1.msra.mxu0 0.0
    %638 = vmatprep.subr.mxu0 0.0
    %639 = vmatpush1.msra.mxu0 0.0
    %640 = vmatprep.mubr.f32.mxu0 0.0
    %641 = vmatmul.mubr.f32.gmra.mrb[0].mxu0 %v385
    %v642 = vpop.f32.mrb[0].mxu0
    %v643 = vadd.f32 %v382, %v642
    %v644 = vpop.f32.mrb[0].mxu0
    %645 = vmatprep.mubr.f32.mxu0 0.0
    %646 = vmatmul.mubr.f32.gmra.mrb[0].mxu0 %v388
    %v647 = vpop.f32.mrb[0].mxu0
    %v648 = vadd.f32 %v382, %v647
    %v649 = vpop.f32.mrb[0].mxu0
    %650 = vmatprep.mubr.f32.mxu0 0.0
    %651 = vmatmul.mubr.f32.gmra.mrb[0].mxu0 %v391
    %v652 = vpop.f32.mrb[0].mxu0
    %v653 = vadd.f32 %v382, %v652
    %v654 = vpop.f32.mrb[0].mxu0
    %655 = vmatprep.mubr.f32.mxu0 0.0
    %656 = vmatmul.mubr.f32.gmra.mrb[0].mxu0 %v394
    %v657 = vpop.f32.mrb[0].mxu0
    %v658 = vadd.f32 %v382, %v657
    %v659 = vpop.f32.mrb[0].mxu0
    %660 = vmatprep.mubr.f32.mxu0 0.0
    %661 = vmatmul.mubr.f32.gmra.mrb[0].mxu0 %v397
    %v662 = vpop.f32.mrb[0].mxu0
    %v663 = vadd.f32 %v382, %v662
    %v664 = vpop.f32.mrb[0].mxu0
    %665 = vmatprep.mubr.f32.mxu0 0.0
    %666 = vmatmul.mubr.f32.gmra.mrb[0].mxu0 %v400
    %v667 = vpop.f32.mrb[0].mxu0
    %v668 = vadd.f32 %v382, %v667
    %v669 = vpop.f32.mrb[0].mxu0
    %670 = vmatprep.mubr.f32.mxu0 0.0
    %671 = vmatmul.mubr.f32.gmra.mrb[0].mxu0 %v403
    %v672 = vpop.f32.mrb[0].mxu0
    %v673 = vadd.f32 %v382, %v672
    %v674 = vpop.f32.mrb[0].mxu0
    %675 = vmatprep.mubr.f32.mxu0 0.0
    %676 = vmatmul.mubr.f32.gmra.mrb[0].mxu0 %v406
    %v677 = vpop.f32.mrb[0].mxu0
    %v678 = vadd.f32 %v382, %v677
    %v679 = vpop.f32.mrb[0].mxu0
    %680 = vmatprep.mubr.f32.mxu0 0.0
    %681 = vmatmul.mubr.f32.gmra.mrb[0].mxu0 %v409
    %v682 = vpop.f32.mrb[0].mxu0
    %v683 = vadd.f32 %v382, %v682
    %v684 = vpop.f32.mrb[0].mxu0
    %685 = vmatprep.mubr.f32.mxu0 0.0
    %686 = vmatmul.mubr.f32.gmra.mrb[0].mxu0 %v412
    %v687 = vpop.f32.mrb[0].mxu0
    %v688 = vadd.f32 %v382, %v687
    %v689 = vpop.f32.mrb[0].mxu0
    %690 = vmatprep.mubr.f32.mxu0 0.0
    %691 = vmatmul.mubr.f32.gmra.mrb[0].mxu0 %v415
    %v692 = vpop.f32.mrb[0].mxu0
    %v693 = vadd.f32 %v382, %v692
    %v694 = vpop.f32.mrb[0].mxu0
    %695 = vmatprep.mubr.f32.mxu0 0.0
    %696 = vmatmul.mubr.f32.gmra.mrb[0].mxu0 %v418
    %v697 = vpop.f32.mrb[0].mxu0
    %v698 = vadd.f32 %v382, %v697
    %v699 = vpop.f32.mrb[0].mxu0
    %700 = vmatprep.mubr.f32.mxu0 0.0
    %701 = vmatmul.mubr.f32.gmra.mrb[0].mxu0 %v421
    %v702 = vpop.f32.mrb[0].mxu0
    %v703 = vadd.f32 %v382, %v702
    %v704 = vpop.f32.mrb[0].mxu0
    %705 = vmatprep.mubr.f32.mxu0 0.0
    %706 = vmatmul.mubr.f32.gmra.mrb[0].mxu0 %v424
    %v707 = vpop.f32.mrb[0].mxu0
    %v708 = vadd.f32 %v382, %v707
    %v709 = vpop.f32.mrb[0].mxu0
    %710 = vmatprep.mubr.f32.mxu0 0.0
    %711 = vmatmul.mubr.f32.gmra.mrb[0].mxu0 %v427
    %v712 = vpop.f32.mrb[0].mxu0
    %v713 = vadd.f32 %v382, %v712
    %v714 = vpop.f32.mrb[0].mxu0
    %715 = vmatprep.mubr.f32.mxu0 0.0
    %716 = vmatmul.mubr.f32.gmra.mrb[0].mxu0 %v430
    %v717 = vpop.f32.mrb[0].mxu0
    %v718 = vadd.f32 %v382, %v717
    %v719 = vpop.f32.mrb[0].mxu0
    %720 = vmatprep.mubr.f32.mxu0 0.0
    %721 = vmatmul.mubr.f32.gmra.mrb[0].mxu0 %v433
    %v722 = vpop.f32.mrb[0].mxu0
    %v723 = vadd.f32 %v382, %v722
    %v724 = vpop.f32.mrb[0].mxu0
    %725 = vmatprep.mubr.f32.mxu0 0.0
    %726 = vmatmul.mubr.f32.gmra.mrb[0].mxu0 %v436
    %v727 = vpop.f32.mrb[0].mxu0
    %v728 = vadd.f32 %v382, %v727
    %v729 = vpop.f32.mrb[0].mxu0
    %730 = vmatprep.mubr.f32.mxu0 0.0
    %731 = vmatmul.mubr.f32.gmra.mrb[0].mxu0 %v439
    %v732 = vpop.f32.mrb[0].mxu0
    %v733 = vadd.f32 %v382, %v732
    %v734 = vpop.f32.mrb[0].mxu0
    %735 = vmatprep.mubr.f32.mxu0 0.0
    %736 = vmatmul.mubr.f32.gmra.mrb[0].mxu0 %v442
    %v737 = vpop.f32.mrb[0].mxu0
    %v738 = vadd.f32 %v382, %v737
    %v739 = vpop.f32.mrb[0].mxu0
    %740 = vmatprep.mubr.f32.mxu0 0.0
    %741 = vmatmul.mubr.f32.gmra.mrb[0].mxu0 %v445
    %v742 = vpop.f32.mrb[0].mxu0
    %v743 = vadd.f32 %v382, %v742
    %v744 = vpop.f32.mrb[0].mxu0
    %745 = vmatprep.mubr.f32.mxu0 0.0
    %746 = vmatmul.mubr.f32.gmra.mrb[0].mxu0 %v448
    %v747 = vpop.f32.mrb[0].mxu0
    %v748 = vadd.f32 %v382, %v747
    %v749 = vpop.f32.mrb[0].mxu0
    %750 = vmatprep.mubr.f32.mxu0 0.0
    %751 = vmatmul.mubr.f32.gmra.mrb[0].mxu0 %v451
    %v752 = vpop.f32.mrb[0].mxu0
    %v753 = vadd.f32 %v382, %v752
    %v754 = vpop.f32.mrb[0].mxu0
    %755 = vmatprep.mubr.f32.mxu0 0.0
    %756 = vmatmul.mubr.f32.gmra.mrb[0].mxu0 %v454
    %v757 = vpop.f32.mrb[0].mxu0
    %v758 = vadd.f32 %v382, %v757
    %v759 = vpop.f32.mrb[0].mxu0
    %760 = vmatprep.mubr.f32.mxu0 0.0
    %761 = vmatmul.mubr.f32.gmra.mrb[0].mxu0 %v457
    %v762 = vpop.f32.mrb[0].mxu0
    %v763 = vadd.f32 %v382, %v762
    %v764 = vpop.f32.mrb[0].mxu0
    %765 = vmatprep.mubr.f32.mxu0 0.0
    %766 = vmatmul.mubr.f32.gmra.mrb[0].mxu0 %v460
    %v767 = vpop.f32.mrb[0].mxu0
    %v768 = vadd.f32 %v382, %v767
    %v769 = vpop.f32.mrb[0].mxu0
    %770 = vmatprep.mubr.f32.mxu0 0.0
    %771 = vmatmul.mubr.f32.gmra.mrb[0].mxu0 %v463
    %v772 = vpop.f32.mrb[0].mxu0
    %v773 = vadd.f32 %v382, %v772
    %v774 = vpop.f32.mrb[0].mxu0
    %775 = vmatprep.mubr.f32.mxu0 0.0
    %776 = vmatmul.mubr.f32.gmra.mrb[0].mxu0 %v466
    %v777 = vpop.f32.mrb[0].mxu0
    %v778 = vadd.f32 %v382, %v777
    %v779 = vpop.f32.mrb[0].mxu0
    %780 = vmatprep.mubr.f32.mxu0 0.0
    %781 = vmatmul.mubr.f32.gmra.mrb[0].mxu0 %v469
    %v782 = vpop.f32.mrb[0].mxu0
    %v783 = vadd.f32 %v382, %v782
    %v784 = vpop.f32.mrb[0].mxu0
    %785 = vmatprep.mubr.f32.mxu0 0.0
    %786 = vmatmul.mubr.f32.gmra.mrb[0].mxu0 %v472
    %v787 = vpop.f32.mrb[0].mxu0
    %v788 = vadd.f32 %v382, %v787
    %v789 = vpop.f32.mrb[0].mxu0
    %790 = vmatprep.mubr.f32.mxu0 0.0
    %791 = vmatmul.mubr.f32.gmra.mrb[0].mxu0 %v475
    %v792 = vpop.f32.mrb[0].mxu0
    %v793 = vadd.f32 %v382, %v792
    %v794 = vpop.f32.mrb[0].mxu0
    %795 = vmatprep.mubr.f32.mxu0 0.0
    %796 = vmatmul.mubr.f32.gmra.mrb[0].mxu0 %v478
    %v797 = vpop.f32.mrb[0].mxu0
    %v798 = vadd.f32 %v382, %v797
    %v799 = vpop.f32.mrb[0].mxu0
    %800 = vmatprep.mubr.f32.mxu0 0.0
    %801 = vmatmul.mubr.f32.gmra.mrb[0].mxu0 %v481
    %v802 = vpop.f32.mrb[0].mxu0
    %v803 = vadd.f32 %v382, %v802
    %v804 = vpop.f32.mrb[0].mxu0
    %805 = vmatprep.mubr.f32.mxu0 0.0
    %806 = vmatmul.mubr.f32.gmra.mrb[0].mxu0 %v484
    %v807 = vpop.f32.mrb[0].mxu0
    %v808 = vadd.f32 %v382, %v807
    %v809 = vpop.f32.mrb[0].mxu0
    %810 = vmatprep.mubr.f32.mxu0 0.0
    %811 = vmatmul.mubr.f32.gmra.mrb[0].mxu0 %v487
    %v812 = vpop.f32.mrb[0].mxu0
    %v813 = vadd.f32 %v382, %v812
    %v814 = vpop.f32.mrb[0].mxu0
    %815 = vmatprep.mubr.f32.mxu0 0.0
    %816 = vmatmul.mubr.f32.gmra.mrb[0].mxu0 %v490
    %v817 = vpop.f32.mrb[0].mxu0
    %v818 = vadd.f32 %v382, %v817
    %v819 = vpop.f32.mrb[0].mxu0
    %820 = vmatprep.mubr.f32.mxu0 0.0
    %821 = vmatmul.mubr.f32.gmra.mrb[0].mxu0 %v493
    %v822 = vpop.f32.mrb[0].mxu0
    %v823 = vadd.f32 %v382, %v822
    %v824 = vpop.f32.mrb[0].mxu0
    %825 = vmatprep.mubr.f32.mxu0 0.0
    %826 = vmatmul.mubr.f32.gmra.mrb[0].mxu0 %v496
    %v827 = vpop.f32.mrb[0].mxu0
    %v828 = vadd.f32 %v382, %v827
    %v829 = vpop.f32.mrb[0].mxu0
    %830 = vmatprep.mubr.f32.mxu0 0.0
    %831 = vmatmul.mubr.f32.gmra.mrb[0].mxu0 %v499
    %v832 = vpop.f32.mrb[0].mxu0
    %v833 = vadd.f32 %v382, %v832
    %v834 = vpop.f32.mrb[0].mxu0
    %835 = vmatprep.mubr.f32.mxu0 0.0
    %836 = vmatmul.mubr.f32.gmra.mrb[0].mxu0 %v502
    %v837 = vpop.f32.mrb[0].mxu0
    %v838 = vadd.f32 %v382, %v837
    %v839 = vpop.f32.mrb[0].mxu0
    %840 = vmatprep.mubr.f32.mxu0 0.0
    %841 = vmatmul.mubr.f32.gmra.mrb[0].mxu0 %v505
    %v842 = vpop.f32.mrb[0].mxu0
    %v843 = vadd.f32 %v382, %v842
    %v844 = vpop.f32.mrb[0].mxu0
    %845 = vmatprep.mubr.f32.mxu0 0.0
    %846 = vmatmul.mubr.f32.gmra.mrb[0].mxu0 %v508
    %v847 = vpop.f32.mrb[0].mxu0
    %v848 = vadd.f32 %v382, %v847
    %v849 = vpop.f32.mrb[0].mxu0
    %850 = vmatprep.mubr.f32.mxu0 0.0
    %851 = vmatmul.mubr.f32.gmra.mrb[0].mxu0 %v511
    %v852 = vpop.f32.mrb[0].mxu0
    %v853 = vadd.f32 %v382, %v852
    %v854 = vpop.f32.mrb[0].mxu0
    %855 = vmatprep.mubr.f32.mxu0 0.0
    %856 = vmatmul.mubr.f32.gmra.mrb[0].mxu0 %v514
    %v857 = vpop.f32.mrb[0].mxu0
    %v858 = vadd.f32 %v382, %v857
    %v859 = vpop.f32.mrb[0].mxu0
    %860 = vmatprep.mubr.f32.mxu0 0.0
    %861 = vmatmul.mubr.f32.gmra.mrb[0].mxu0 %v517
    %v862 = vpop.f32.mrb[0].mxu0
    %v863 = vadd.f32 %v382, %v862
    %v864 = vpop.f32.mrb[0].mxu0
    %865 = vmatprep.mubr.f32.mxu0 0.0
    %866 = vmatmul.mubr.f32.gmra.mrb[0].mxu0 %v520
    %v867 = vpop.f32.mrb[0].mxu0
    %v868 = vadd.f32 %v382, %v867
    %v869 = vpop.f32.mrb[0].mxu0
    %870 = vmatprep.mubr.f32.mxu0 0.0
    %871 = vmatmul.mubr.f32.gmra.mrb[0].mxu0 %v523
    %v872 = vpop.f32.mrb[0].mxu0
    %v873 = vadd.f32 %v382, %v872
    %v874 = vpop.f32.mrb[0].mxu0
    %875 = vmatprep.mubr.f32.mxu0 0.0
    %876 = vmatmul.mubr.f32.gmra.mrb[0].mxu0 %v526
    %v877 = vpop.f32.mrb[0].mxu0
    %v878 = vadd.f32 %v382, %v877
    %v879 = vpop.f32.mrb[0].mxu0
    %880 = vmatprep.mubr.f32.mxu0 0.0
    %881 = vmatmul.mubr.f32.gmra.mrb[0].mxu0 %v529
    %v882 = vpop.f32.mrb[0].mxu0
    %v883 = vadd.f32 %v382, %v882
    %v884 = vpop.f32.mrb[0].mxu0
    %885 = vmatprep.mubr.f32.mxu0 0.0
    %886 = vmatmul.mubr.f32.gmra.mrb[0].mxu0 %v532
    %v887 = vpop.f32.mrb[0].mxu0
    %v888 = vadd.f32 %v382, %v887
    %v889 = vpop.f32.mrb[0].mxu0
    %890 = vmatprep.mubr.f32.mxu0 0.0
    %891 = vmatmul.mubr.f32.gmra.mrb[0].mxu0 %v535
    %v892 = vpop.f32.mrb[0].mxu0
    %v893 = vadd.f32 %v382, %v892
    %v894 = vpop.f32.mrb[0].mxu0
    %895 = vmatprep.mubr.f32.mxu0 0.0
    %896 = vmatmul.mubr.f32.gmra.mrb[0].mxu0 %v538
    %v897 = vpop.f32.mrb[0].mxu0
    %v898 = vadd.f32 %v382, %v897
    %v899 = vpop.f32.mrb[0].mxu0
    %900 = vmatprep.mubr.f32.mxu0 0.0
    %901 = vmatmul.mubr.f32.gmra.mrb[0].mxu0 %v541
    %v902 = vpop.f32.mrb[0].mxu0
    %v903 = vadd.f32 %v382, %v902
    %v904 = vpop.f32.mrb[0].mxu0
    %905 = vmatprep.mubr.f32.mxu0 0.0
    %906 = vmatmul.mubr.f32.gmra.mrb[0].mxu0 %v544
    %v907 = vpop.f32.mrb[0].mxu0
    %v908 = vadd.f32 %v382, %v907
    %v909 = vpop.f32.mrb[0].mxu0
    %910 = vmatprep.mubr.f32.mxu0 0.0
    %911 = vmatmul.mubr.f32.gmra.mrb[0].mxu0 %v547
    %v912 = vpop.f32.mrb[0].mxu0
    %v913 = vadd.f32 %v382, %v912
    %v914 = vpop.f32.mrb[0].mxu0
    %915 = vmatprep.mubr.f32.mxu0 0.0
    %916 = vmatmul.mubr.f32.gmra.mrb[0].mxu0 %v550
    %v917 = vpop.f32.mrb[0].mxu0
    %v918 = vadd.f32 %v382, %v917
    %v919 = vpop.f32.mrb[0].mxu0
    %920 = vmatprep.mubr.f32.mxu0 0.0
    %921 = vmatmul.mubr.f32.gmra.mrb[0].mxu0 %v553
    %v922 = vpop.f32.mrb[0].mxu0
    %v923 = vadd.f32 %v382, %v922
    %v924 = vpop.f32.mrb[0].mxu0
    %925 = vmatprep.mubr.f32.mxu0 0.0
    %926 = vmatmul.mubr.f32.gmra.mrb[0].mxu0 %v556
    %v927 = vpop.f32.mrb[0].mxu0
    %v928 = vadd.f32 %v382, %v927
    %v929 = vpop.f32.mrb[0].mxu0
    %930 = vmatprep.mubr.f32.mxu0 0.0
    %931 = vmatmul.mubr.f32.gmra.mrb[0].mxu0 %v559
    %v932 = vpop.f32.mrb[0].mxu0
    %v933 = vadd.f32 %v382, %v932
    %v934 = vpop.f32.mrb[0].mxu0
    %935 = vmatprep.mubr.f32.mxu0 0.0
    %936 = vmatmul.mubr.f32.gmra.mrb[0].mxu0 %v562
    %v937 = vpop.f32.mrb[0].mxu0
    %v938 = vadd.f32 %v382, %v937
    %v939 = vpop.f32.mrb[0].mxu0
    %940 = vmatprep.mubr.f32.mxu0 0.0
    %941 = vmatmul.mubr.f32.gmra.mrb[0].mxu0 %v565
    %v942 = vpop.f32.mrb[0].mxu0
    %v943 = vadd.f32 %v382, %v942
    %v944 = vpop.f32.mrb[0].mxu0
    %945 = vmatprep.mubr.f32.mxu0 0.0
    %946 = vmatmul.mubr.f32.gmra.mrb[0].mxu0 %v568
    %v947 = vpop.f32.mrb[0].mxu0
    %v948 = vadd.f32 %v382, %v947
    %v949 = vpop.f32.mrb[0].mxu0
    %950 = vmatprep.mubr.f32.mxu0 0.0
    %951 = vmatmul.mubr.f32.gmra.mrb[0].mxu0 %v571
    %v952 = vpop.f32.mrb[0].mxu0
    %v953 = vadd.f32 %v382, %v952
    %v954 = vpop.f32.mrb[0].mxu0
    %955 = vmatprep.mubr.f32.mxu0 0.0
    %956 = vmatmul.mubr.f32.gmra.mrb[0].mxu0 %v574
    %v957 = vpop.f32.mrb[0].mxu0
    %v958 = vadd.f32 %v382, %v957
    %v959 = vpop.f32.mrb[0].mxu0
    %960 = vdwg.mxu0
    %v961 = vtanh.pop %v643
    %v962 = vtanh.pop %v648
    %v963 = vtanh.pop %v653
    %v964 = vtanh.pop %v658
    %v965 = vtanh.pop %v663
    %v966 = vtanh.pop %v668
    %v967 = vtanh.pop %v673
    %v968 = vtanh.pop %v678
    %v969 = vtanh.pop %v683
    %v970 = vtanh.pop %v688
    %v971 = vtanh.pop %v693
    %v972 = vtanh.pop %v698
    %v973 = vtanh.pop %v703
    %v974 = vtanh.pop %v708
    %v975 = vtanh.pop %v713
    %v976 = vtanh.pop %v718
    %v977 = vtanh.pop %v723
    %v978 = vtanh.pop %v728
    %v979 = vtanh.pop %v733
    %v980 = vtanh.pop %v738
    %v981 = vtanh.pop %v743
    %v982 = vtanh.pop %v748
    %v983 = vtanh.pop %v753
    %v984 = vtanh.pop %v758
    %v985 = vtanh.pop %v763
    %v986 = vtanh.pop %v768
    %v987 = vtanh.pop %v773
    %v988 = vtanh.pop %v778
    %v989 = vtanh.pop %v783
    %v990 = vtanh.pop %v788
    %v991 = vtanh.pop %v793
    %v992 = vtanh.pop %v798
    %v993 = vtanh.pop %v803
    %v994 = vtanh.pop %v808
    %v995 = vtanh.pop %v813
    %v996 = vtanh.pop %v818
    %v997 = vtanh.pop %v823
    %v998 = vtanh.pop %v828
    %v999 = vtanh.pop %v833
    %v1000 = vtanh.pop %v838
    %v1001 = vtanh.pop %v843
    %v1002 = vtanh.pop %v848
    %v1003 = vtanh.pop %v853
    %v1004 = vtanh.pop %v858
    %v1005 = vtanh.pop %v863
    %v1006 = vtanh.pop %v868
    %v1007 = vtanh.pop %v873
    %v1008 = vtanh.pop %v878
    %v1009 = vtanh.pop %v883
    %v1010 = vtanh.pop %v888
    %v1011 = vtanh.pop %v893
    %v1012 = vtanh.pop %v898
    %v1013 = vtanh.pop %v903
    %v1014 = vtanh.pop %v908
    %v1015 = vtanh.pop %v913
    %v1016 = vtanh.pop %v918
    %v1017 = vtanh.pop %v923
    %v1018 = vtanh.pop %v928
    %v1019 = vtanh.pop %v933
    %v1020 = vtanh.pop %v938
    %v1021 = vtanh.pop %v943
    %v1022 = vtanh.pop %v948
    %v1023 = vtanh.pop %v953
    %v1024 = vtanh.pop %v958
    %v1025 = vld [vmem:[%s10] sm:$0xff]
    %v1026 = vld [vmem:[%s10 + $0x8] sm:$0xff]
    %v1027 = vld [vmem:[%s10 + $0x10] sm:$0xff]
    %v1028 = vld [vmem:[%s10 + $0x18] sm:$0xff]
    %v1029 = vld [vmem:[%s10 + $0x20] sm:$0xff]
    %v1030 = vld [vmem:[%s10 + $0x28] sm:$0xff]
    %v1031 = vld [vmem:[%s10 + $0x30] sm:$0xff]
    %v1032 = vld [vmem:[%s10 + $0x38] sm:$0xff]
    %v1033 = vld [vmem:[%s10 + $0x40] sm:$0xff]
    %v1034 = vld [vmem:[%s10 + $0x48] sm:$0xff]
    %v1035 = vld [vmem:[%s10 + $0x50] sm:$0xff]
    %v1036 = vld [vmem:[%s10 + $0x58] sm:$0xff]
    %v1037 = vld [vmem:[%s10 + $0x60] sm:$0xff]
    %v1038 = vld [vmem:[%s10 + $0x68] sm:$0xff]
    %v1039 = vld [vmem:[%s10 + $0x70] sm:$0xff]
    %v1040 = vld [vmem:[%s10 + $0x78] sm:$0xff]
    %v1041 = vld [vmem:[%s11] sm:$0x1]
    %v1043 = vlaneseq
    %v1044 = vshrl.u32 %v1043, 7
    %v1045 = vsub.s32 0, %v1044
    %v1046 = vrot.slane %v1041, %v1045
    %1048 = vmatprep.subr.mxu0 0.0
    %1049 = vmatpush1.msra.mxu0 %v1025
    %1050 = vmatprep.subr.mxu0 0.0
    %1051 = vmatpush1.msra.mxu0 %v1026
    %1052 = vmatprep.subr.mxu0 0.0
    %1053 = vmatpush1.msra.mxu0 %v1027
    %1054 = vmatprep.subr.mxu0 0.0
    %1055 = vmatpush1.msra.mxu0 %v1028
    %1056 = vmatprep.subr.mxu0 0.0
    %1057 = vmatpush1.msra.mxu0 %v1029
    %1058 = vmatprep.subr.mxu0 0.0
    %1059 = vmatpush1.msra.mxu0 %v1030
    %1060 = vmatprep.subr.mxu0 0.0
    %1061 = vmatpush1.msra.mxu0 %v1031
    %1062 = vmatprep.subr.mxu0 0.0
    %1063 = vmatpush1.msra.mxu0 %v1032
    %1064 = vmatprep.subr.mxu0 0.0
    %1065 = vmatpush1.msra.mxu0 %v1033
    %1066 = vmatprep.subr.mxu0 0.0
    %1067 = vmatpush1.msra.mxu0 %v1034
    %1068 = vmatprep.subr.mxu0 0.0
    %1069 = vmatpush1.msra.mxu0 %v1035
    %1070 = vmatprep.subr.mxu0 0.0
    %1071 = vmatpush1.msra.mxu0 %v1036
    %1072 = vmatprep.subr.mxu0 0.0
    %1073 = vmatpush1.msra.mxu0 %v1037
    %1074 = vmatprep.subr.mxu0 0.0
    %1075 = vmatpush1.msra.mxu0 %v1038
    %1076 = vmatprep.subr.mxu0 0.0
    %1077 = vmatpush1.msra.mxu0 %v1039
    %1078 = vmatprep.subr.mxu0 0.0
    %1079 = vmatpush1.msra.mxu0 %v1040
    %1080 = vmatprep.subr.mxu0 0.0
    %1081 = vmatpush1.msra.mxu0 0.0
    %1082 = vmatprep.subr.mxu0 0.0
    %1083 = vmatpush1.msra.mxu0 0.0
    %1084 = vmatprep.subr.mxu0 0.0
    %1085 = vmatpush1.msra.mxu0 0.0
    %1086 = vmatprep.subr.mxu0 0.0
    %1087 = vmatpush1.msra.mxu0 0.0
    %1088 = vmatprep.subr.mxu0 0.0
    %1089 = vmatpush1.msra.mxu0 0.0
    %1090 = vmatprep.subr.mxu0 0.0
    %1091 = vmatpush1.msra.mxu0 0.0
    %1092 = vmatprep.subr.mxu0 0.0
    %1093 = vmatpush1.msra.mxu0 0.0
    %1094 = vmatprep.subr.mxu0 0.0
    %1095 = vmatpush1.msra.mxu0 0.0
    %1096 = vmatprep.subr.mxu0 0.0
    %1097 = vmatpush1.msra.mxu0 0.0
    %1098 = vmatprep.subr.mxu0 0.0
    %1099 = vmatpush1.msra.mxu0 0.0
    %1100 = vmatprep.subr.mxu0 0.0
    %1101 = vmatpush1.msra.mxu0 0.0
    %1102 = vmatprep.subr.mxu0 0.0
    %1103 = vmatpush1.msra.mxu0 0.0
    %1104 = vmatprep.subr.mxu0 0.0
    %1105 = vmatpush1.msra.mxu0 0.0
    %1106 = vmatprep.subr.mxu0 0.0
    %1107 = vmatpush1.msra.mxu0 0.0
    %1108 = vmatprep.subr.mxu0 0.0
    %1109 = vmatpush1.msra.mxu0 0.0
    %1110 = vmatprep.subr.mxu0 0.0
    %1111 = vmatpush1.msra.mxu0 0.0
    %1112 = vmatprep.mubr.f32.mxu0 0.0
    %1113 = vmatmul.mubr.f32.gmra.mrb[0].mxu0 %v961
    %v1114 = vpop.f32.mrb[0].mxu0
    %v1115 = vadd.f32 %v1046, %v1114
    %v1116 = vpop.f32.mrb[0].mxu0
    %1117 = vmatprep.mubr.f32.mxu0 0.0
    %1118 = vmatmul.mubr.f32.gmra.mrb[0].mxu0 %v962
    %v1119 = vpop.f32.mrb[0].mxu0
    %v1120 = vadd.f32 %v1046, %v1119
    %v1121 = vpop.f32.mrb[0].mxu0
    %1122 = vmatprep.mubr.f32.mxu0 0.0
    %1123 = vmatmul.mubr.f32.gmra.mrb[0].mxu0 %v963
    %v1124 = vpop.f32.mrb[0].mxu0
    %v1125 = vadd.f32 %v1046, %v1124
    %v1126 = vpop.f32.mrb[0].mxu0
    %1127 = vmatprep.mubr.f32.mxu0 0.0
    %1128 = vmatmul.mubr.f32.gmra.mrb[0].mxu0 %v964
    %v1129 = vpop.f32.mrb[0].mxu0
    %v1130 = vadd.f32 %v1046, %v1129
    %v1131 = vpop.f32.mrb[0].mxu0
    %1132 = vmatprep.mubr.f32.mxu0 0.0
    %1133 = vmatmul.mubr.f32.gmra.mrb[0].mxu0 %v965
    %v1134 = vpop.f32.mrb[0].mxu0
    %v1135 = vadd.f32 %v1046, %v1134
    %v1136 = vpop.f32.mrb[0].mxu0
    %1137 = vmatprep.mubr.f32.mxu0 0.0
    %1138 = vmatmul.mubr.f32.gmra.mrb[0].mxu0 %v966
    %v1139 = vpop.f32.mrb[0].mxu0
    %v1140 = vadd.f32 %v1046, %v1139
    %v1141 = vpop.f32.mrb[0].mxu0
    %1142 = vmatprep.mubr.f32.mxu0 0.0
    %1143 = vmatmul.mubr.f32.gmra.mrb[0].mxu0 %v967
    %v1144 = vpop.f32.mrb[0].mxu0
    %v1145 = vadd.f32 %v1046, %v1144
    %v1146 = vpop.f32.mrb[0].mxu0
    %1147 = vmatprep.mubr.f32.mxu0 0.0
    %1148 = vmatmul.mubr.f32.gmra.mrb[0].mxu0 %v968
    %v1149 = vpop.f32.mrb[0].mxu0
    %v1150 = vadd.f32 %v1046, %v1149
    %v1151 = vpop.f32.mrb[0].mxu0
    %1152 = vmatprep.mubr.f32.mxu0 0.0
    %1153 = vmatmul.mubr.f32.gmra.mrb[0].mxu0 %v969
    %v1154 = vpop.f32.mrb[0].mxu0
    %v1155 = vadd.f32 %v1046, %v1154
    %v1156 = vpop.f32.mrb[0].mxu0
    %1157 = vmatprep.mubr.f32.mxu0 0.0
    %1158 = vmatmul.mubr.f32.gmra.mrb[0].mxu0 %v970
    %v1159 = vpop.f32.mrb[0].mxu0
    %v1160 = vadd.f32 %v1046, %v1159
    %v1161 = vpop.f32.mrb[0].mxu0
    %1162 = vmatprep.mubr.f32.mxu0 0.0
    %1163 = vmatmul.mubr.f32.gmra.mrb[0].mxu0 %v971
    %v1164 = vpop.f32.mrb[0].mxu0
    %v1165 = vadd.f32 %v1046, %v1164
    %v1166 = vpop.f32.mrb[0].mxu0
    %1167 = vmatprep.mubr.f32.mxu0 0.0
    %1168 = vmatmul.mubr.f32.gmra.mrb[0].mxu0 %v972
    %v1169 = vpop.f32.mrb[0].mxu0
    %v1170 = vadd.f32 %v1046, %v1169
    %v1171 = vpop.f32.mrb[0].mxu0
    %1172 = vmatprep.mubr.f32.mxu0 0.0
    %1173 = vmatmul.mubr.f32.gmra.mrb[0].mxu0 %v973
    %v1174 = vpop.f32.mrb[0].mxu0
    %v1175 = vadd.f32 %v1046, %v1174
    %v1176 = vpop.f32.mrb[0].mxu0
    %1177 = vmatprep.mubr.f32.mxu0 0.0
    %1178 = vmatmul.mubr.f32.gmra.mrb[0].mxu0 %v974
    %v1179 = vpop.f32.mrb[0].mxu0
    %v1180 = vadd.f32 %v1046, %v1179
    %v1181 = vpop.f32.mrb[0].mxu0
    %1182 = vmatprep.mubr.f32.mxu0 0.0
    %1183 = vmatmul.mubr.f32.gmra.mrb[0].mxu0 %v975
    %v1184 = vpop.f32.mrb[0].mxu0
    %v1185 = vadd.f32 %v1046, %v1184
    %v1186 = vpop.f32.mrb[0].mxu0
    %1187 = vmatprep.mubr.f32.mxu0 0.0
    %1188 = vmatmul.mubr.f32.gmra.mrb[0].mxu0 %v976
    %v1189 = vpop.f32.mrb[0].mxu0
    %v1190 = vadd.f32 %v1046, %v1189
    %v1191 = vpop.f32.mrb[0].mxu0
    %1192 = vmatprep.mubr.f32.mxu0 0.0
    %1193 = vmatmul.mubr.f32.gmra.mrb[0].mxu0 %v977
    %v1194 = vpop.f32.mrb[0].mxu0
    %v1195 = vadd.f32 %v1046, %v1194
    %v1196 = vpop.f32.mrb[0].mxu0
    %1197 = vmatprep.mubr.f32.mxu0 0.0
    %1198 = vmatmul.mubr.f32.gmra.mrb[0].mxu0 %v978
    %v1199 = vpop.f32.mrb[0].mxu0
    %v1200 = vadd.f32 %v1046, %v1199
    %v1201 = vpop.f32.mrb[0].mxu0
    %1202 = vmatprep.mubr.f32.mxu0 0.0
    %1203 = vmatmul.mubr.f32.gmra.mrb[0].mxu0 %v979
    %v1204 = vpop.f32.mrb[0].mxu0
    %v1205 = vadd.f32 %v1046, %v1204
    %v1206 = vpop.f32.mrb[0].mxu0
    %1207 = vmatprep.mubr.f32.mxu0 0.0
    %1208 = vmatmul.mubr.f32.gmra.mrb[0].mxu0 %v980
    %v1209 = vpop.f32.mrb[0].mxu0
    %v1210 = vadd.f32 %v1046, %v1209
    %v1211 = vpop.f32.mrb[0].mxu0
    %1212 = vmatprep.mubr.f32.mxu0 0.0
    %1213 = vmatmul.mubr.f32.gmra.mrb[0].mxu0 %v981
    %v1214 = vpop.f32.mrb[0].mxu0
    %v1215 = vadd.f32 %v1046, %v1214
    %v1216 = vpop.f32.mrb[0].mxu0
    %1217 = vmatprep.mubr.f32.mxu0 0.0
    %1218 = vmatmul.mubr.f32.gmra.mrb[0].mxu0 %v982
    %v1219 = vpop.f32.mrb[0].mxu0
    %v1220 = vadd.f32 %v1046, %v1219
    %v1221 = vpop.f32.mrb[0].mxu0
    %1222 = vmatprep.mubr.f32.mxu0 0.0
    %1223 = vmatmul.mubr.f32.gmra.mrb[0].mxu0 %v983
    %v1224 = vpop.f32.mrb[0].mxu0
    %v1225 = vadd.f32 %v1046, %v1224
    %v1226 = vpop.f32.mrb[0].mxu0
    %1227 = vmatprep.mubr.f32.mxu0 0.0
    %1228 = vmatmul.mubr.f32.gmra.mrb[0].mxu0 %v984
    %v1229 = vpop.f32.mrb[0].mxu0
    %v1230 = vadd.f32 %v1046, %v1229
    %v1231 = vpop.f32.mrb[0].mxu0
    %1232 = vmatprep.mubr.f32.mxu0 0.0
    %1233 = vmatmul.mubr.f32.gmra.mrb[0].mxu0 %v985
    %v1234 = vpop.f32.mrb[0].mxu0
    %v1235 = vadd.f32 %v1046, %v1234
    %v1236 = vpop.f32.mrb[0].mxu0
    %1237 = vmatprep.mubr.f32.mxu0 0.0
    %1238 = vmatmul.mubr.f32.gmra.mrb[0].mxu0 %v986
    %v1239 = vpop.f32.mrb[0].mxu0
    %v1240 = vadd.f32 %v1046, %v1239
    %v1241 = vpop.f32.mrb[0].mxu0
    %1242 = vmatprep.mubr.f32.mxu0 0.0
    %1243 = vmatmul.mubr.f32.gmra.mrb[0].mxu0 %v987
    %v1244 = vpop.f32.mrb[0].mxu0
    %v1245 = vadd.f32 %v1046, %v1244
    %v1246 = vpop.f32.mrb[0].mxu0
    %1247 = vmatprep.mubr.f32.mxu0 0.0
    %1248 = vmatmul.mubr.f32.gmra.mrb[0].mxu0 %v988
    %v1249 = vpop.f32.mrb[0].mxu0
    %v1250 = vadd.f32 %v1046, %v1249
    %v1251 = vpop.f32.mrb[0].mxu0
    %1252 = vmatprep.mubr.f32.mxu0 0.0
    %1253 = vmatmul.mubr.f32.gmra.mrb[0].mxu0 %v989
    %v1254 = vpop.f32.mrb[0].mxu0
    %v1255 = vadd.f32 %v1046, %v1254
    %v1256 = vpop.f32.mrb[0].mxu0
    %1257 = vmatprep.mubr.f32.mxu0 0.0
    %1258 = vmatmul.mubr.f32.gmra.mrb[0].mxu0 %v990
    %v1259 = vpop.f32.mrb[0].mxu0
    %v1260 = vadd.f32 %v1046, %v1259
    %v1261 = vpop.f32.mrb[0].mxu0
    %1262 = vmatprep.mubr.f32.mxu0 0.0
    %1263 = vmatmul.mubr.f32.gmra.mrb[0].mxu0 %v991
    %v1264 = vpop.f32.mrb[0].mxu0
    %v1265 = vadd.f32 %v1046, %v1264
    %v1266 = vpop.f32.mrb[0].mxu0
    %1267 = vmatprep.mubr.f32.mxu0 0.0
    %1268 = vmatmul.mubr.f32.gmra.mrb[0].mxu0 %v992
    %v1269 = vpop.f32.mrb[0].mxu0
    %v1270 = vadd.f32 %v1046, %v1269
    %v1271 = vpop.f32.mrb[0].mxu0
    %1272 = vmatprep.mubr.f32.mxu0 0.0
    %1273 = vmatmul.mubr.f32.gmra.mrb[0].mxu0 %v993
    %v1274 = vpop.f32.mrb[0].mxu0
    %v1275 = vadd.f32 %v1046, %v1274
    %v1276 = vpop.f32.mrb[0].mxu0
    %1277 = vmatprep.mubr.f32.mxu0 0.0
    %1278 = vmatmul.mubr.f32.gmra.mrb[0].mxu0 %v994
    %v1279 = vpop.f32.mrb[0].mxu0
    %v1280 = vadd.f32 %v1046, %v1279
    %v1281 = vpop.f32.mrb[0].mxu0
    %1282 = vmatprep.mubr.f32.mxu0 0.0
    %1283 = vmatmul.mubr.f32.gmra.mrb[0].mxu0 %v995
    %v1284 = vpop.f32.mrb[0].mxu0
    %v1285 = vadd.f32 %v1046, %v1284
    %v1286 = vpop.f32.mrb[0].mxu0
    %1287 = vmatprep.mubr.f32.mxu0 0.0
    %1288 = vmatmul.mubr.f32.gmra.mrb[0].mxu0 %v996
    %v1289 = vpop.f32.mrb[0].mxu0
    %v1290 = vadd.f32 %v1046, %v1289
    %v1291 = vpop.f32.mrb[0].mxu0
    %1292 = vmatprep.mubr.f32.mxu0 0.0
    %1293 = vmatmul.mubr.f32.gmra.mrb[0].mxu0 %v997
    %v1294 = vpop.f32.mrb[0].mxu0
    %v1295 = vadd.f32 %v1046, %v1294
    %v1296 = vpop.f32.mrb[0].mxu0
    %1297 = vmatprep.mubr.f32.mxu0 0.0
    %1298 = vmatmul.mubr.f32.gmra.mrb[0].mxu0 %v998
    %v1299 = vpop.f32.mrb[0].mxu0
    %v1300 = vadd.f32 %v1046, %v1299
    %v1301 = vpop.f32.mrb[0].mxu0
    %1302 = vmatprep.mubr.f32.mxu0 0.0
    %1303 = vmatmul.mubr.f32.gmra.mrb[0].mxu0 %v999
    %v1304 = vpop.f32.mrb[0].mxu0
    %v1305 = vadd.f32 %v1046, %v1304
    %v1306 = vpop.f32.mrb[0].mxu0
    %1307 = vmatprep.mubr.f32.mxu0 0.0
    %1308 = vmatmul.mubr.f32.gmra.mrb[0].mxu0 %v1000
    %v1309 = vpop.f32.mrb[0].mxu0
    %v1310 = vadd.f32 %v1046, %v1309
    %v1311 = vpop.f32.mrb[0].mxu0
    %1312 = vmatprep.mubr.f32.mxu0 0.0
    %1313 = vmatmul.mubr.f32.gmra.mrb[0].mxu0 %v1001
    %v1314 = vpop.f32.mrb[0].mxu0
    %v1315 = vadd.f32 %v1046, %v1314
    %v1316 = vpop.f32.mrb[0].mxu0
    %1317 = vmatprep.mubr.f32.mxu0 0.0
    %1318 = vmatmul.mubr.f32.gmra.mrb[0].mxu0 %v1002
    %v1319 = vpop.f32.mrb[0].mxu0
    %v1320 = vadd.f32 %v1046, %v1319
    %v1321 = vpop.f32.mrb[0].mxu0
    %1322 = vmatprep.mubr.f32.mxu0 0.0
    %1323 = vmatmul.mubr.f32.gmra.mrb[0].mxu0 %v1003
    %v1324 = vpop.f32.mrb[0].mxu0
    %v1325 = vadd.f32 %v1046, %v1324
    %v1326 = vpop.f32.mrb[0].mxu0
    %1327 = vmatprep.mubr.f32.mxu0 0.0
    %1328 = vmatmul.mubr.f32.gmra.mrb[0].mxu0 %v1004
    %v1329 = vpop.f32.mrb[0].mxu0
    %v1330 = vadd.f32 %v1046, %v1329
    %v1331 = vpop.f32.mrb[0].mxu0
    %1332 = vmatprep.mubr.f32.mxu0 0.0
    %1333 = vmatmul.mubr.f32.gmra.mrb[0].mxu0 %v1005
    %v1334 = vpop.f32.mrb[0].mxu0
    %v1335 = vadd.f32 %v1046, %v1334
    %v1336 = vpop.f32.mrb[0].mxu0
    %1337 = vmatprep.mubr.f32.mxu0 0.0
    %1338 = vmatmul.mubr.f32.gmra.mrb[0].mxu0 %v1006
    %v1339 = vpop.f32.mrb[0].mxu0
    %v1340 = vadd.f32 %v1046, %v1339
    %v1341 = vpop.f32.mrb[0].mxu0
    %1342 = vmatprep.mubr.f32.mxu0 0.0
    %1343 = vmatmul.mubr.f32.gmra.mrb[0].mxu0 %v1007
    %v1344 = vpop.f32.mrb[0].mxu0
    %v1345 = vadd.f32 %v1046, %v1344
    %v1346 = vpop.f32.mrb[0].mxu0
    %1347 = vmatprep.mubr.f32.mxu0 0.0
    %1348 = vmatmul.mubr.f32.gmra.mrb[0].mxu0 %v1008
    %v1349 = vpop.f32.mrb[0].mxu0
    %v1350 = vadd.f32 %v1046, %v1349
    %v1351 = vpop.f32.mrb[0].mxu0
    %1352 = vmatprep.mubr.f32.mxu0 0.0
    %1353 = vmatmul.mubr.f32.gmra.mrb[0].mxu0 %v1009
    %v1354 = vpop.f32.mrb[0].mxu0
    %v1355 = vadd.f32 %v1046, %v1354
    %v1356 = vpop.f32.mrb[0].mxu0
    %1357 = vmatprep.mubr.f32.mxu0 0.0
    %1358 = vmatmul.mubr.f32.gmra.mrb[0].mxu0 %v1010
    %v1359 = vpop.f32.mrb[0].mxu0
    %v1360 = vadd.f32 %v1046, %v1359
    %v1361 = vpop.f32.mrb[0].mxu0
    %1362 = vmatprep.mubr.f32.mxu0 0.0
    %1363 = vmatmul.mubr.f32.gmra.mrb[0].mxu0 %v1011
    %v1364 = vpop.f32.mrb[0].mxu0
    %v1365 = vadd.f32 %v1046, %v1364
    %v1366 = vpop.f32.mrb[0].mxu0
    %1367 = vmatprep.mubr.f32.mxu0 0.0
    %1368 = vmatmul.mubr.f32.gmra.mrb[0].mxu0 %v1012
    %v1369 = vpop.f32.mrb[0].mxu0
    %v1370 = vadd.f32 %v1046, %v1369
    %v1371 = vpop.f32.mrb[0].mxu0
    %1372 = vmatprep.mubr.f32.mxu0 0.0
    %1373 = vmatmul.mubr.f32.gmra.mrb[0].mxu0 %v1013
    %v1374 = vpop.f32.mrb[0].mxu0
    %v1375 = vadd.f32 %v1046, %v1374
    %v1376 = vpop.f32.mrb[0].mxu0
    %1377 = vmatprep.mubr.f32.mxu0 0.0
    %1378 = vmatmul.mubr.f32.gmra.mrb[0].mxu0 %v1014
    %v1379 = vpop.f32.mrb[0].mxu0
    %v1380 = vadd.f32 %v1046, %v1379
    %v1381 = vpop.f32.mrb[0].mxu0
    %1382 = vmatprep.mubr.f32.mxu0 0.0
    %1383 = vmatmul.mubr.f32.gmra.mrb[0].mxu0 %v1015
    %v1384 = vpop.f32.mrb[0].mxu0
    %v1385 = vadd.f32 %v1046, %v1384
    %v1386 = vpop.f32.mrb[0].mxu0
    %1387 = vmatprep.mubr.f32.mxu0 0.0
    %1388 = vmatmul.mubr.f32.gmra.mrb[0].mxu0 %v1016
    %v1389 = vpop.f32.mrb[0].mxu0
    %v1390 = vadd.f32 %v1046, %v1389
    %v1391 = vpop.f32.mrb[0].mxu0
    %1392 = vmatprep.mubr.f32.mxu0 0.0
    %1393 = vmatmul.mubr.f32.gmra.mrb[0].mxu0 %v1017
    %v1394 = vpop.f32.mrb[0].mxu0
    %v1395 = vadd.f32 %v1046, %v1394
    %v1396 = vpop.f32.mrb[0].mxu0
    %1397 = vmatprep.mubr.f32.mxu0 0.0
    %1398 = vmatmul.mubr.f32.gmra.mrb[0].mxu0 %v1018
    %v1399 = vpop.f32.mrb[0].mxu0
    %v1400 = vadd.f32 %v1046, %v1399
    %v1401 = vpop.f32.mrb[0].mxu0
    %1402 = vmatprep.mubr.f32.mxu0 0.0
    %1403 = vmatmul.mubr.f32.gmra.mrb[0].mxu0 %v1019
    %v1404 = vpop.f32.mrb[0].mxu0
    %v1405 = vadd.f32 %v1046, %v1404
    %v1406 = vpop.f32.mrb[0].mxu0
    %1407 = vmatprep.mubr.f32.mxu0 0.0
    %1408 = vmatmul.mubr.f32.gmra.mrb[0].mxu0 %v1020
    %v1409 = vpop.f32.mrb[0].mxu0
    %v1410 = vadd.f32 %v1046, %v1409
    %v1411 = vpop.f32.mrb[0].mxu0
    %1412 = vmatprep.mubr.f32.mxu0 0.0
    %1413 = vmatmul.mubr.f32.gmra.mrb[0].mxu0 %v1021
    %v1414 = vpop.f32.mrb[0].mxu0
    %v1415 = vadd.f32 %v1046, %v1414
    %v1416 = vpop.f32.mrb[0].mxu0
    %1417 = vmatprep.mubr.f32.mxu0 0.0
    %1418 = vmatmul.mubr.f32.gmra.mrb[0].mxu0 %v1022
    %v1419 = vpop.f32.mrb[0].mxu0
    %v1420 = vadd.f32 %v1046, %v1419
    %v1421 = vpop.f32.mrb[0].mxu0
    %1422 = vmatprep.mubr.f32.mxu0 0.0
    %1423 = vmatmul.mubr.f32.gmra.mrb[0].mxu0 %v1023
    %v1424 = vpop.f32.mrb[0].mxu0
    %v1425 = vadd.f32 %v1046, %v1424
    %v1426 = vpop.f32.mrb[0].mxu0
    %1427 = vmatprep.mubr.f32.mxu0 0.0
    %1428 = vmatmul.mubr.f32.gmra.mrb[0].mxu0 %v1024
    %v1429 = vpop.f32.mrb[0].mxu0
    %v1430 = vadd.f32 %v1046, %v1429
    %v1431 = vpop.f32.mrb[0].mxu0
    %1432 = vdwg.mxu0
    %v1433 = vtanh.pop %v1115
    %v1434 = vtanh.pop %v1120
    %v1435 = vtanh.pop %v1125
    %v1436 = vtanh.pop %v1130
    %v1437 = vtanh.pop %v1135
    %v1438 = vtanh.pop %v1140
    %v1439 = vtanh.pop %v1145
    %v1440 = vtanh.pop %v1150
    %v1441 = vtanh.pop %v1155
    %v1442 = vtanh.pop %v1160
    %v1443 = vtanh.pop %v1165
    %v1444 = vtanh.pop %v1170
    %v1445 = vtanh.pop %v1175
    %v1446 = vtanh.pop %v1180
    %v1447 = vtanh.pop %v1185
    %v1448 = vtanh.pop %v1190
    %v1449 = vtanh.pop %v1195
    %v1450 = vtanh.pop %v1200
    %v1451 = vtanh.pop %v1205
    %v1452 = vtanh.pop %v1210
    %v1453 = vtanh.pop %v1215
    %v1454 = vtanh.pop %v1220
    %v1455 = vtanh.pop %v1225
    %v1456 = vtanh.pop %v1230
    %v1457 = vtanh.pop %v1235
    %v1458 = vtanh.pop %v1240
    %v1459 = vtanh.pop %v1245
    %v1460 = vtanh.pop %v1250
    %v1461 = vtanh.pop %v1255
    %v1462 = vtanh.pop %v1260
    %v1463 = vtanh.pop %v1265
    %v1464 = vtanh.pop %v1270
    %v1465 = vtanh.pop %v1275
    %v1466 = vtanh.pop %v1280
    %v1467 = vtanh.pop %v1285
    %v1468 = vtanh.pop %v1290
    %v1469 = vtanh.pop %v1295
    %v1470 = vtanh.pop %v1300
    %v1471 = vtanh.pop %v1305
    %v1472 = vtanh.pop %v1310
    %v1473 = vtanh.pop %v1315
    %v1474 = vtanh.pop %v1320
    %v1475 = vtanh.pop %v1325
    %v1476 = vtanh.pop %v1330
    %v1477 = vtanh.pop %v1335
    %v1478 = vtanh.pop %v1340
    %v1479 = vtanh.pop %v1345
    %v1480 = vtanh.pop %v1350
    %v1481 = vtanh.pop %v1355
    %v1482 = vtanh.pop %v1360
    %v1483 = vtanh.pop %v1365
    %v1484 = vtanh.pop %v1370
    %v1485 = vtanh.pop %v1375
    %v1486 = vtanh.pop %v1380
    %v1487 = vtanh.pop %v1385
    %v1488 = vtanh.pop %v1390
    %v1489 = vtanh.pop %v1395
    %v1490 = vtanh.pop %v1400
    %v1491 = vtanh.pop %v1405
    %v1492 = vtanh.pop %v1410
    %v1493 = vtanh.pop %v1415
    %v1494 = vtanh.pop %v1420
    %v1495 = vtanh.pop %v1425
    %v1496 = vtanh.pop %v1430
    %vm1497 = vcmask 261120
    %v1498 = vsel %vm1497, %v1433, 0.0
    %1499 = vadd.xlane.f32.xlu0 %v1498
    %v1500 = vpop.xlane.xlu0 %1499
    %v1501 = vsel %vm1497, %v1434, 0.0
    %1502 = vadd.xlane.f32.xlu0 %v1501
    %v1503 = vpop.xlane.xlu0 %1502
    %v1504 = vsel %vm1497, %v1435, 0.0
    %1505 = vadd.xlane.f32.xlu0 %v1504
    %v1506 = vpop.xlane.xlu0 %1505
    %v1507 = vsel %vm1497, %v1436, 0.0
    %1508 = vadd.xlane.f32.xlu0 %v1507
    %v1509 = vpop.xlane.xlu0 %1508
    %v1510 = vsel %vm1497, %v1437, 0.0
    %1511 = vadd.xlane.f32.xlu0 %v1510
    %v1512 = vpop.xlane.xlu0 %1511
    %v1513 = vsel %vm1497, %v1438, 0.0
    %1514 = vadd.xlane.f32.xlu0 %v1513
    %v1515 = vpop.xlane.xlu0 %1514
    %v1516 = vsel %vm1497, %v1439, 0.0
    %1517 = vadd.xlane.f32.xlu0 %v1516
    %v1518 = vpop.xlane.xlu0 %1517
    %v1519 = vsel %vm1497, %v1440, 0.0
    %1520 = vadd.xlane.f32.xlu0 %v1519
    %v1521 = vpop.xlane.xlu0 %1520
    %v1522 = vsel %vm1497, %v1441, 0.0
    %1523 = vadd.xlane.f32.xlu0 %v1522
    %v1524 = vpop.xlane.xlu0 %1523
    %v1525 = vsel %vm1497, %v1442, 0.0
    %1526 = vadd.xlane.f32.xlu0 %v1525
    %v1527 = vpop.xlane.xlu0 %1526
    %v1528 = vsel %vm1497, %v1443, 0.0
    %1529 = vadd.xlane.f32.xlu0 %v1528
    %v1530 = vpop.xlane.xlu0 %1529
    %v1531 = vsel %vm1497, %v1444, 0.0
    %1532 = vadd.xlane.f32.xlu0 %v1531
    %v1533 = vpop.xlane.xlu0 %1532
    %v1534 = vsel %vm1497, %v1445, 0.0
    %1535 = vadd.xlane.f32.xlu0 %v1534
    %v1536 = vpop.xlane.xlu0 %1535
    %v1537 = vsel %vm1497, %v1446, 0.0
    %1538 = vadd.xlane.f32.xlu0 %v1537
    %v1539 = vpop.xlane.xlu0 %1538
    %v1540 = vsel %vm1497, %v1447, 0.0
    %1541 = vadd.xlane.f32.xlu0 %v1540
    %v1542 = vpop.xlane.xlu0 %1541
    %v1543 = vsel %vm1497, %v1448, 0.0
    %1544 = vadd.xlane.f32.xlu0 %v1543
    %v1545 = vpop.xlane.xlu0 %1544
    %v1546 = vsel %vm1497, %v1449, 0.0
    %1547 = vadd.xlane.f32.xlu0 %v1546
    %v1548 = vpop.xlane.xlu0 %1547
    %v1549 = vsel %vm1497, %v1450, 0.0
    %1550 = vadd.xlane.f32.xlu0 %v1549
    %v1551 = vpop.xlane.xlu0 %1550
    %v1552 = vsel %vm1497, %v1451, 0.0
    %1553 = vadd.xlane.f32.xlu0 %v1552
    %v1554 = vpop.xlane.xlu0 %1553
    %v1555 = vsel %vm1497, %v1452, 0.0
    %1556 = vadd.xlane.f32.xlu0 %v1555
    %v1557 = vpop.xlane.xlu0 %1556
    %v1558 = vsel %vm1497, %v1453, 0.0
    %1559 = vadd.xlane.f32.xlu0 %v1558
    %v1560 = vpop.xlane.xlu0 %1559
    %v1561 = vsel %vm1497, %v1454, 0.0
    %1562 = vadd.xlane.f32.xlu0 %v1561
    %v1563 = vpop.xlane.xlu0 %1562
    %v1564 = vsel %vm1497, %v1455, 0.0
    %1565 = vadd.xlane.f32.xlu0 %v1564
    %v1566 = vpop.xlane.xlu0 %1565
    %v1567 = vsel %vm1497, %v1456, 0.0
    %1568 = vadd.xlane.f32.xlu0 %v1567
    %v1569 = vpop.xlane.xlu0 %1568
    %v1570 = vsel %vm1497, %v1457, 0.0
    %1571 = vadd.xlane.f32.xlu0 %v1570
    %v1572 = vpop.xlane.xlu0 %1571
    %v1573 = vsel %vm1497, %v1458, 0.0
    %1574 = vadd.xlane.f32.xlu0 %v1573
    %v1575 = vpop.xlane.xlu0 %1574
    %v1576 = vsel %vm1497, %v1459, 0.0
    %1577 = vadd.xlane.f32.xlu0 %v1576
    %v1578 = vpop.xlane.xlu0 %1577
    %v1579 = vsel %vm1497, %v1460, 0.0
    %1580 = vadd.xlane.f32.xlu0 %v1579
    %v1581 = vpop.xlane.xlu0 %1580
    %v1582 = vsel %vm1497, %v1461, 0.0
    %1583 = vadd.xlane.f32.xlu0 %v1582
    %v1584 = vpop.xlane.xlu0 %1583
    %v1585 = vsel %vm1497, %v1462, 0.0
    %1586 = vadd.xlane.f32.xlu0 %v1585
    %v1587 = vpop.xlane.xlu0 %1586
    %v1588 = vsel %vm1497, %v1463, 0.0
    %1589 = vadd.xlane.f32.xlu0 %v1588
    %v1590 = vpop.xlane.xlu0 %1589
    %v1591 = vsel %vm1497, %v1464, 0.0
    %1592 = vadd.xlane.f32.xlu0 %v1591
    %v1593 = vpop.xlane.xlu0 %1592
    %v1594 = vsel %vm1497, %v1465, 0.0
    %1595 = vadd.xlane.f32.xlu0 %v1594
    %v1596 = vpop.xlane.xlu0 %1595
    %v1597 = vsel %vm1497, %v1466, 0.0
    %1598 = vadd.xlane.f32.xlu0 %v1597
    %v1599 = vpop.xlane.xlu0 %1598
    %v1600 = vsel %vm1497, %v1467, 0.0
    %1601 = vadd.xlane.f32.xlu0 %v1600
    %v1602 = vpop.xlane.xlu0 %1601
    %v1603 = vsel %vm1497, %v1468, 0.0
    %1604 = vadd.xlane.f32.xlu0 %v1603
    %v1605 = vpop.xlane.xlu0 %1604
    %v1606 = vsel %vm1497, %v1469, 0.0
    %1607 = vadd.xlane.f32.xlu0 %v1606
    %v1608 = vpop.xlane.xlu0 %1607
    %v1609 = vsel %vm1497, %v1470, 0.0
    %1610 = vadd.xlane.f32.xlu0 %v1609
    %v1611 = vpop.xlane.xlu0 %1610
    %v1612 = vsel %vm1497, %v1471, 0.0
    %1613 = vadd.xlane.f32.xlu0 %v1612
    %v1614 = vpop.xlane.xlu0 %1613
    %v1615 = vsel %vm1497, %v1472, 0.0
    %1616 = vadd.xlane.f32.xlu0 %v1615
    %v1617 = vpop.xlane.xlu0 %1616
    %v1618 = vsel %vm1497, %v1473, 0.0
    %1619 = vadd.xlane.f32.xlu0 %v1618
    %v1620 = vpop.xlane.xlu0 %1619
    %v1621 = vsel %vm1497, %v1474, 0.0
    %1622 = vadd.xlane.f32.xlu0 %v1621
    %v1623 = vpop.xlane.xlu0 %1622
    %v1624 = vsel %vm1497, %v1475, 0.0
    %1625 = vadd.xlane.f32.xlu0 %v1624
    %v1626 = vpop.xlane.xlu0 %1625
    %v1627 = vsel %vm1497, %v1476, 0.0
    %1628 = vadd.xlane.f32.xlu0 %v1627
    %v1629 = vpop.xlane.xlu0 %1628
    %v1630 = vsel %vm1497, %v1477, 0.0
    %1631 = vadd.xlane.f32.xlu0 %v1630
    %v1632 = vpop.xlane.xlu0 %1631
    %v1633 = vsel %vm1497, %v1478, 0.0
    %1634 = vadd.xlane.f32.xlu0 %v1633
    %v1635 = vpop.xlane.xlu0 %1634
    %v1636 = vsel %vm1497, %v1479, 0.0
    %1637 = vadd.xlane.f32.xlu0 %v1636
    %v1638 = vpop.xlane.xlu0 %1637
    %v1639 = vsel %vm1497, %v1480, 0.0
    %1640 = vadd.xlane.f32.xlu0 %v1639
    %v1641 = vpop.xlane.xlu0 %1640
    %v1642 = vsel %vm1497, %v1481, 0.0
    %1643 = vadd.xlane.f32.xlu0 %v1642
    %v1644 = vpop.xlane.xlu0 %1643
    %v1645 = vsel %vm1497, %v1482, 0.0
    %1646 = vadd.xlane.f32.xlu0 %v1645
    %v1647 = vpop.xlane.xlu0 %1646
    %v1648 = vsel %vm1497, %v1483, 0.0
    %1649 = vadd.xlane.f32.xlu0 %v1648
    %v1650 = vpop.xlane.xlu0 %1649
    %v1651 = vsel %vm1497, %v1484, 0.0
    %1652 = vadd.xlane.f32.xlu0 %v1651
    %v1653 = vpop.xlane.xlu0 %1652
    %v1654 = vsel %vm1497, %v1485, 0.0
    %1655 = vadd.xlane.f32.xlu0 %v1654
    %v1656 = vpop.xlane.xlu0 %1655
    %v1657 = vsel %vm1497, %v1486, 0.0
    %1658 = vadd.xlane.f32.xlu0 %v1657
    %v1659 = vpop.xlane.xlu0 %1658
    %v1660 = vsel %vm1497, %v1487, 0.0
    %1661 = vadd.xlane.f32.xlu0 %v1660
    %v1662 = vpop.xlane.xlu0 %1661
    %v1663 = vsel %vm1497, %v1488, 0.0
    %1664 = vadd.xlane.f32.xlu0 %v1663
    %v1665 = vpop.xlane.xlu0 %1664
    %v1666 = vsel %vm1497, %v1489, 0.0
    %1667 = vadd.xlane.f32.xlu0 %v1666
    %v1668 = vpop.xlane.xlu0 %1667
    %v1669 = vsel %vm1497, %v1490, 0.0
    %1670 = vadd.xlane.f32.xlu0 %v1669
    %v1671 = vpop.xlane.xlu0 %1670
    %v1672 = vsel %vm1497, %v1491, 0.0
    %1673 = vadd.xlane.f32.xlu0 %v1672
    %v1674 = vpop.xlane.xlu0 %1673
    %v1675 = vsel %vm1497, %v1492, 0.0
    %1676 = vadd.xlane.f32.xlu0 %v1675
    %v1677 = vpop.xlane.xlu0 %1676
    %v1678 = vsel %vm1497, %v1493, 0.0
    %1679 = vadd.xlane.f32.xlu0 %v1678
    %v1680 = vpop.xlane.xlu0 %1679
    %v1681 = vsel %vm1497, %v1494, 0.0
    %1682 = vadd.xlane.f32.xlu0 %v1681
    %v1683 = vpop.xlane.xlu0 %1682
    %v1684 = vsel %vm1497, %v1495, 0.0
    %1685 = vadd.xlane.f32.xlu0 %v1684
    %v1686 = vpop.xlane.xlu0 %1685
    %v1687 = vsel %vm1497, %v1496, 0.0
    %1688 = vadd.xlane.f32.xlu0 %v1687
    %v1689 = vpop.xlane.xlu0 %1688
    %v1690 = vld [vmem:[%s16] sm:$0xff]
    %v1691 = vld [vmem:[%s16 + $0x8] sm:$0xff]
    %v1692 = vld [vmem:[%s16 + $0x10] sm:$0xff]
    %v1693 = vld [vmem:[%s16 + $0x18] sm:$0xff]
    %v1694 = vld [vmem:[%s17] sm:$0x1]
    %v1696 = vlaneseq
    %v1697 = vshrl.u32 %v1696, 7
    %v1698 = vsub.s32 0, %v1697
    %v1699 = vrot.slane %v1694, %v1698
    %v1702 = vsel %vm1497, %v308, 0
    %v1705 = vsel %vm1497, %v309, 0
    %v1708 = vsel %vm1497, %v310, 0
    %v1711 = vsel %vm1497, %v311, 0
    %1713 = vmatprep.subr.mxu0 0.0
    %1714 = vmatpush1.msra.mxu0 %v1690
    %1715 = vmatprep.subr.mxu0 0.0
    %1716 = vmatpush1.msra.mxu0 %v1691
    %1717 = vmatprep.subr.mxu0 0.0
    %1718 = vmatpush1.msra.mxu0 %v1692
    %1719 = vmatprep.subr.mxu0 0.0
    %1720 = vmatpush1.msra.mxu0 %v1693
    %1721 = vmatprep.subr.mxu0 0.0
    %1722 = vmatpush1.msra.mxu0 0.0
    %1723 = vmatprep.subr.mxu0 0.0
    %1724 = vmatpush1.msra.mxu0 0.0
    %1725 = vmatprep.subr.mxu0 0.0
    %1726 = vmatpush1.msra.mxu0 0.0
    %1727 = vmatprep.subr.mxu0 0.0
    %1728 = vmatpush1.msra.mxu0 0.0
    %1729 = vmatprep.subr.mxu0 0.0
    %1730 = vmatpush1.msra.mxu0 0.0
    %1731 = vmatprep.subr.mxu0 0.0
    %1732 = vmatpush1.msra.mxu0 0.0
    %1733 = vmatprep.subr.mxu0 0.0
    %1734 = vmatpush1.msra.mxu0 0.0
    %1735 = vmatprep.subr.mxu0 0.0
    %1736 = vmatpush1.msra.mxu0 0.0
    %1737 = vmatprep.subr.mxu0 0.0
    %1738 = vmatpush1.msra.mxu0 0.0
    %1739 = vmatprep.subr.mxu0 0.0
    %1740 = vmatpush1.msra.mxu0 0.0
    %1741 = vmatprep.subr.mxu0 0.0
    %1742 = vmatpush1.msra.mxu0 0.0
    %1743 = vmatprep.subr.mxu0 0.0
    %1744 = vmatpush1.msra.mxu0 0.0
    %1745 = vmatprep.subr.mxu0 0.0
    %1746 = vmatpush1.msra.mxu0 0.0
    %1747 = vmatprep.subr.mxu0 0.0
    %1748 = vmatpush1.msra.mxu0 0.0
    %1749 = vmatprep.subr.mxu0 0.0
    %1750 = vmatpush1.msra.mxu0 0.0
    %1751 = vmatprep.subr.mxu0 0.0
    %1752 = vmatpush1.msra.mxu0 0.0
    %1753 = vmatprep.subr.mxu0 0.0
    %1754 = vmatpush1.msra.mxu0 0.0
    %1755 = vmatprep.subr.mxu0 0.0
    %1756 = vmatpush1.msra.mxu0 0.0
    %1757 = vmatprep.subr.mxu0 0.0
    %1758 = vmatpush1.msra.mxu0 0.0
    %1759 = vmatprep.subr.mxu0 0.0
    %1760 = vmatpush1.msra.mxu0 0.0
    %1761 = vmatprep.subr.mxu0 0.0
    %1762 = vmatpush1.msra.mxu0 0.0
    %1763 = vmatprep.subr.mxu0 0.0
    %1764 = vmatpush1.msra.mxu0 0.0
    %1765 = vmatprep.subr.mxu0 0.0
    %1766 = vmatpush1.msra.mxu0 0.0
    %1767 = vmatprep.subr.mxu0 0.0
    %1768 = vmatpush1.msra.mxu0 0.0
    %1769 = vmatprep.subr.mxu0 0.0
    %1770 = vmatpush1.msra.mxu0 0.0
    %1771 = vmatprep.subr.mxu0 0.0
    %1772 = vmatpush1.msra.mxu0 0.0
    %1773 = vmatprep.subr.mxu0 0.0
    %1774 = vmatpush1.msra.mxu0 0.0
    %1775 = vmatprep.subr.mxu0 0.0
    %1776 = vmatpush1.msra.mxu0 0.0
    %1777 = vmatprep.mubr.f32.mxu0 0.0
    %1778 = vmatmul.mubr.f32.gmra.mrb[0].mxu0 %v1702
    %v1779 = vpop.f32.mrb[0].mxu0
    %v1780 = vadd.f32 %v1699, %v1779
    %v1781 = vpop.f32.mrb[0].mxu0
    %1782 = vmatprep.mubr.f32.mxu0 0.0
    %1783 = vmatmul.mubr.f32.gmra.mrb[0].mxu0 %v1705
    %v1784 = vpop.f32.mrb[0].mxu0
    %v1785 = vadd.f32 %v1699, %v1784
    %v1786 = vpop.f32.mrb[0].mxu0
    %1787 = vmatprep.mubr.f32.mxu0 0.0
    %1788 = vmatmul.mubr.f32.gmra.mrb[0].mxu0 %v1708
    %v1789 = vpop.f32.mrb[0].mxu0
    %v1790 = vadd.f32 %v1699, %v1789
    %v1791 = vpop.f32.mrb[0].mxu0
    %1792 = vmatprep.mubr.f32.mxu0 0.0
    %1793 = vmatmul.mubr.f32.gmra.mrb[0].mxu0 %v1711
    %v1794 = vpop.f32.mrb[0].mxu0
    %v1795 = vadd.f32 %v1699, %v1794
    %v1796 = vpop.f32.mrb[0].mxu0
    %1797 = vdwg.mxu0
    %v1798 = vld [vmem:[%s20] sm:$0xff]
    %v1799 = vld [vmem:[%s20 + $0x8] sm:$0xff]
    %v1800 = vld [vmem:[%s20 + $0x10] sm:$0xff]
    %v1801 = vld [vmem:[%s20 + $0x18] sm:$0xff]
    %v1802 = vld [vmem:[%s21] sm:$0x1]
    %v1804 = vlaneseq
    %v1805 = vshrl.u32 %v1804, 7
    %v1806 = vsub.s32 0, %v1805
    %v1807 = vrot.slane %v1802, %v1806
    %1809 = vmatprep.subr.mxu0 0.0
    %1810 = vmatpush1.msra.mxu0 %v1798
    %1811 = vmatprep.subr.mxu0 0.0
    %1812 = vmatpush1.msra.mxu0 %v1799
    %1813 = vmatprep.subr.mxu0 0.0
    %1814 = vmatpush1.msra.mxu0 %v1800
    %1815 = vmatprep.subr.mxu0 0.0
    %1816 = vmatpush1.msra.mxu0 %v1801
    %1817 = vmatprep.subr.mxu0 0.0
    %1818 = vmatpush1.msra.mxu0 0.0
    %1819 = vmatprep.subr.mxu0 0.0
    %1820 = vmatpush1.msra.mxu0 0.0
    %1821 = vmatprep.subr.mxu0 0.0
    %1822 = vmatpush1.msra.mxu0 0.0
    %1823 = vmatprep.subr.mxu0 0.0
    %1824 = vmatpush1.msra.mxu0 0.0
    %1825 = vmatprep.subr.mxu0 0.0
    %1826 = vmatpush1.msra.mxu0 0.0
    %1827 = vmatprep.subr.mxu0 0.0
    %1828 = vmatpush1.msra.mxu0 0.0
    %1829 = vmatprep.subr.mxu0 0.0
    %1830 = vmatpush1.msra.mxu0 0.0
    %1831 = vmatprep.subr.mxu0 0.0
    %1832 = vmatpush1.msra.mxu0 0.0
    %1833 = vmatprep.subr.mxu0 0.0
    %1834 = vmatpush1.msra.mxu0 0.0
    %1835 = vmatprep.subr.mxu0 0.0
    %1836 = vmatpush1.msra.mxu0 0.0
    %1837 = vmatprep.subr.mxu0 0.0
    %1838 = vmatpush1.msra.mxu0 0.0
    %1839 = vmatprep.subr.mxu0 0.0
    %1840 = vmatpush1.msra.mxu0 0.0
    %1841 = vmatprep.subr.mxu0 0.0
    %1842 = vmatpush1.msra.mxu0 0.0
    %1843 = vmatprep.subr.mxu0 0.0
    %1844 = vmatpush1.msra.mxu0 0.0
    %1845 = vmatprep.subr.mxu0 0.0
    %1846 = vmatpush1.msra.mxu0 0.0
    %1847 = vmatprep.subr.mxu0 0.0
    %1848 = vmatpush1.msra.mxu0 0.0
    %1849 = vmatprep.subr.mxu0 0.0
    %1850 = vmatpush1.msra.mxu0 0.0
    %1851 = vmatprep.subr.mxu0 0.0
    %1852 = vmatpush1.msra.mxu0 0.0
    %1853 = vmatprep.subr.mxu0 0.0
    %1854 = vmatpush1.msra.mxu0 0.0
    %1855 = vmatprep.subr.mxu0 0.0
    %1856 = vmatpush1.msra.mxu0 0.0
    %1857 = vmatprep.subr.mxu0 0.0
    %1858 = vmatpush1.msra.mxu0 0.0
    %1859 = vmatprep.subr.mxu0 0.0
    %1860 = vmatpush1.msra.mxu0 0.0
    %1861 = vmatprep.subr.mxu0 0.0
    %1862 = vmatpush1.msra.mxu0 0.0
    %1863 = vmatprep.subr.mxu0 0.0
    %1864 = vmatpush1.msra.mxu0 0.0
    %1865 = vmatprep.subr.mxu0 0.0
    %1866 = vmatpush1.msra.mxu0 0.0
    %1867 = vmatprep.subr.mxu0 0.0
    %1868 = vmatpush1.msra.mxu0 0.0
    %1869 = vmatprep.subr.mxu0 0.0
    %1870 = vmatpush1.msra.mxu0 0.0
    %1871 = vmatprep.subr.mxu0 0.0
    %1872 = vmatpush1.msra.mxu0 0.0
    %1873 = vmatprep.mubr.f32.mxu0 0.0
    %1874 = vmatmul.mubr.f32.gmra.mrb[0].mxu0 %v1702
    %v1875 = vpop.f32.mrb[0].mxu0
    %v1876 = vadd.f32 %v1807, %v1875
    %v1877 = vpop.f32.mrb[0].mxu0
    %1878 = vmatprep.mubr.f32.mxu0 0.0
    %1879 = vmatmul.mubr.f32.gmra.mrb[0].mxu0 %v1705
    %v1880 = vpop.f32.mrb[0].mxu0
    %v1881 = vadd.f32 %v1807, %v1880
    %v1882 = vpop.f32.mrb[0].mxu0
    %1883 = vmatprep.mubr.f32.mxu0 0.0
    %1884 = vmatmul.mubr.f32.gmra.mrb[0].mxu0 %v1708
    %v1885 = vpop.f32.mrb[0].mxu0
    %v1886 = vadd.f32 %v1807, %v1885
    %v1887 = vpop.f32.mrb[0].mxu0
    %1888 = vmatprep.mubr.f32.mxu0 0.0
    %1889 = vmatmul.mubr.f32.gmra.mrb[0].mxu0 %v1711
    %v1890 = vpop.f32.mrb[0].mxu0
    %v1891 = vadd.f32 %v1807, %v1890
    %v1892 = vpop.f32.mrb[0].mxu0
    %1893 = vdwg.mxu0
    %v1894 = vld [vmem:[%s12] sm:$0xff]
    %v1895 = vld [vmem:[%s12 + $0x8] sm:$0xff]
    %v1896 = vld [vmem:[%s12 + $0x10] sm:$0xff]
    %v1897 = vld [vmem:[%s12 + $0x18] sm:$0xff]
    %1898 = vmatprep.subr.mxu0 0.0
    %1899 = vmatpush1.msra.mxu0 %v1894
    %1900 = vmatprep.subr.mxu0 0.0
    %1901 = vmatpush1.msra.mxu0 %v1895
    %1902 = vmatprep.subr.mxu0 0.0
    %1903 = vmatpush1.msra.mxu0 %v1896
    %1904 = vmatprep.subr.mxu0 0.0
    %1905 = vmatpush1.msra.mxu0 %v1897
    %1906 = vmatprep.subr.mxu0 0.0
    %1907 = vmatpush1.msra.mxu0 0.0
    %1908 = vmatprep.subr.mxu0 0.0
    %1909 = vmatpush1.msra.mxu0 0.0
    %1910 = vmatprep.subr.mxu0 0.0
    %1911 = vmatpush1.msra.mxu0 0.0
    %1912 = vmatprep.subr.mxu0 0.0
    %1913 = vmatpush1.msra.mxu0 0.0
    %1914 = vmatprep.subr.mxu0 0.0
    %1915 = vmatpush1.msra.mxu0 0.0
    %1916 = vmatprep.subr.mxu0 0.0
    %1917 = vmatpush1.msra.mxu0 0.0
    %1918 = vmatprep.subr.mxu0 0.0
    %1919 = vmatpush1.msra.mxu0 0.0
    %1920 = vmatprep.subr.mxu0 0.0
    %1921 = vmatpush1.msra.mxu0 0.0
    %1922 = vmatprep.subr.mxu0 0.0
    %1923 = vmatpush1.msra.mxu0 0.0
    %1924 = vmatprep.subr.mxu0 0.0
    %1925 = vmatpush1.msra.mxu0 0.0
    %1926 = vmatprep.subr.mxu0 0.0
    %1927 = vmatpush1.msra.mxu0 0.0
    %1928 = vmatprep.subr.mxu0 0.0
    %1929 = vmatpush1.msra.mxu0 0.0
    %1930 = vmatprep.subr.mxu0 0.0
    %1931 = vmatpush1.msra.mxu0 0.0
    %1932 = vmatprep.subr.mxu0 0.0
    %1933 = vmatpush1.msra.mxu0 0.0
    %1934 = vmatprep.subr.mxu0 0.0
    %1935 = vmatpush1.msra.mxu0 0.0
    %1936 = vmatprep.subr.mxu0 0.0
    %1937 = vmatpush1.msra.mxu0 0.0
    %1938 = vmatprep.subr.mxu0 0.0
    %1939 = vmatpush1.msra.mxu0 0.0
    %1940 = vmatprep.subr.mxu0 0.0
    %1941 = vmatpush1.msra.mxu0 0.0
    %1942 = vmatprep.subr.mxu0 0.0
    %1943 = vmatpush1.msra.mxu0 0.0
    %1944 = vmatprep.subr.mxu0 0.0
    %1945 = vmatpush1.msra.mxu0 0.0
    %1946 = vmatprep.subr.mxu0 0.0
    %1947 = vmatpush1.msra.mxu0 0.0
    %1948 = vmatprep.subr.mxu0 0.0
    %1949 = vmatpush1.msra.mxu0 0.0
    %1950 = vmatprep.subr.mxu0 0.0
    %1951 = vmatpush1.msra.mxu0 0.0
    %1952 = vmatprep.subr.mxu0 0.0
    %1953 = vmatpush1.msra.mxu0 0.0
    %1954 = vmatprep.subr.mxu0 0.0
    %1955 = vmatpush1.msra.mxu0 0.0
    %1956 = vmatprep.subr.mxu0 0.0
    %1957 = vmatpush1.msra.mxu0 0.0
    %1958 = vmatprep.subr.mxu0 0.0
    %1959 = vmatpush1.msra.mxu0 0.0
    %1960 = vmatprep.subr.mxu0 0.0
    %1961 = vmatpush1.msra.mxu0 0.0
    %1962 = vmatprep.mubr.f32.mxu0 0.0
    %1963 = vmatmul.mubr.f32.gmra.mrb[0].mxu0 %v1702
    %v1964 = vpop.f32.mrb[0].mxu0
    %v1965 = vadd.f32 0.0, %v1964
    %v1966 = vpop.f32.mrb[0].mxu0
    %1967 = vmatprep.mubr.f32.mxu0 0.0
    %1968 = vmatmul.mubr.f32.gmra.mrb[0].mxu0 %v1705
    %v1969 = vpop.f32.mrb[0].mxu0
    %v1970 = vadd.f32 0.0, %v1969
    %v1971 = vpop.f32.mrb[0].mxu0
    %1972 = vmatprep.mubr.f32.mxu0 0.0
    %1973 = vmatmul.mubr.f32.gmra.mrb[0].mxu0 %v1708
    %v1974 = vpop.f32.mrb[0].mxu0
    %v1975 = vadd.f32 0.0, %v1974
    %v1976 = vpop.f32.mrb[0].mxu0
    %1977 = vmatprep.mubr.f32.mxu0 0.0
    %1978 = vmatmul.mubr.f32.gmra.mrb[0].mxu0 %v1711
    %v1979 = vpop.f32.mrb[0].mxu0
    %v1980 = vadd.f32 0.0, %v1979
    %v1981 = vpop.f32.mrb[0].mxu0
    %1982 = vdwg.mxu0
    %vm1983 = vcmask 130048
    %v1985 = vsel %vm1983, %v78, 0
    %v1988 = vsel %vm1983, %v79, 0
    %1990 = vmatprep.subr.mxu0 0.0
    %1991 = vmatpush1.msra.mxu0 %v1965
    %1992 = vmatprep.subr.mxu0 0.0
    %1993 = vmatpush1.msra.mxu0 %v1970
    %1994 = vmatprep.subr.mxu0 0.0
    %1995 = vmatpush1.msra.mxu0 0.0
    %1996 = vmatprep.subr.mxu0 0.0
    %1997 = vmatpush1.msra.mxu0 0.0
    %1998 = vmatprep.subr.mxu0 0.0
    %1999 = vmatpush1.msra.mxu0 0.0
    %2000 = vmatprep.subr.mxu0 0.0
    %2001 = vmatpush1.msra.mxu0 0.0
    %2002 = vmatprep.subr.mxu0 0.0
    %2003 = vmatpush1.msra.mxu0 0.0
    %2004 = vmatprep.subr.mxu0 0.0
    %2005 = vmatpush1.msra.mxu0 0.0
    %2006 = vmatprep.subr.mxu0 0.0
    %2007 = vmatpush1.msra.mxu0 0.0
    %2008 = vmatprep.subr.mxu0 0.0
    %2009 = vmatpush1.msra.mxu0 0.0
    %2010 = vmatprep.subr.mxu0 0.0
    %2011 = vmatpush1.msra.mxu0 0.0
    %2012 = vmatprep.subr.mxu0 0.0
    %2013 = vmatpush1.msra.mxu0 0.0
    %2014 = vmatprep.subr.mxu0 0.0
    %2015 = vmatpush1.msra.mxu0 0.0
    %2016 = vmatprep.subr.mxu0 0.0
    %2017 = vmatpush1.msra.mxu0 0.0
    %2018 = vmatprep.subr.mxu0 0.0
    %2019 = vmatpush1.msra.mxu0 0.0
    %2020 = vmatprep.subr.mxu0 0.0
    %2021 = vmatpush1.msra.mxu0 0.0
    %2022 = vmatprep.subr.mxu0 0.0
    %2023 = vmatpush1.msra.mxu0 0.0
    %2024 = vmatprep.subr.mxu0 0.0
    %2025 = vmatpush1.msra.mxu0 0.0
    %2026 = vmatprep.subr.mxu0 0.0
    %2027 = vmatpush1.msra.mxu0 0.0
    %2028 = vmatprep.subr.mxu0 0.0
    %2029 = vmatpush1.msra.mxu0 0.0
    %2030 = vmatprep.subr.mxu0 0.0
    %2031 = vmatpush1.msra.mxu0 0.0
    %2032 = vmatprep.subr.mxu0 0.0
    %2033 = vmatpush1.msra.mxu0 0.0
    %2034 = vmatprep.subr.mxu0 0.0
    %2035 = vmatpush1.msra.mxu0 0.0
    %2036 = vmatprep.subr.mxu0 0.0
    %2037 = vmatpush1.msra.mxu0 0.0
    %2038 = vmatprep.subr.mxu0 0.0
    %2039 = vmatpush1.msra.mxu0 0.0
    %2040 = vmatprep.subr.mxu0 0.0
    %2041 = vmatpush1.msra.mxu0 0.0
    %2042 = vmatprep.subr.mxu0 0.0
    %2043 = vmatpush1.msra.mxu0 0.0
    %2044 = vmatprep.subr.mxu0 0.0
    %2045 = vmatpush1.msra.mxu0 0.0
    %2046 = vmatprep.subr.mxu0 0.0
    %2047 = vmatpush1.msra.mxu0 0.0
    %2048 = vmatprep.subr.mxu0 0.0
    %2049 = vmatpush1.msra.mxu0 0.0
    %2050 = vmatprep.subr.mxu0 0.0
    %2051 = vmatpush1.msra.mxu0 0.0
    %2052 = vmatprep.subr.mxu0 0.0
    %2053 = vmatpush1.msra.mxu0 0.0
    %2054 = vmatprep.mubr.f32.mxu0 0.0
    %2055 = vmatmul.mubr.f32.gmra.mrb[0].mxu0 %v1985
    %v2056 = vpop.f32.mrb[0].mxu0
    %v2057 = vadd.f32 0.0, %v2056
    %v2058 = vpop.f32.mrb[0].mxu0
    %2059 = vmatprep.mubr.f32.mxu0 0.0
    %2060 = vmatmul.mubr.f32.gmra.mrb[0].mxu0 %v1988
    %v2061 = vpop.f32.mrb[0].mxu0
    %v2062 = vadd.f32 0.0, %v2061
    %v2063 = vpop.f32.mrb[0].mxu0
    %2064 = vdwg.mxu0
    %v2066 = vsel %vm1983, %v80, 0
    %v2069 = vsel %vm1983, %v81, 0
    %2071 = vmatprep.subr.mxu0 0.0
    %2072 = vmatpush1.msra.mxu0 %v1975
    %2073 = vmatprep.subr.mxu0 0.0
    %2074 = vmatpush1.msra.mxu0 %v1980
    %2075 = vmatprep.subr.mxu0 0.0
    %2076 = vmatpush1.msra.mxu0 0.0
    %2077 = vmatprep.subr.mxu0 0.0
    %2078 = vmatpush1.msra.mxu0 0.0
    %2079 = vmatprep.subr.mxu0 0.0
    %2080 = vmatpush1.msra.mxu0 0.0
    %2081 = vmatprep.subr.mxu0 0.0
    %2082 = vmatpush1.msra.mxu0 0.0
    %2083 = vmatprep.subr.mxu0 0.0
    %2084 = vmatpush1.msra.mxu0 0.0
    %2085 = vmatprep.subr.mxu0 0.0
    %2086 = vmatpush1.msra.mxu0 0.0
    %2087 = vmatprep.subr.mxu0 0.0
    %2088 = vmatpush1.msra.mxu0 0.0
    %2089 = vmatprep.subr.mxu0 0.0
    %2090 = vmatpush1.msra.mxu0 0.0
    %2091 = vmatprep.subr.mxu0 0.0
    %2092 = vmatpush1.msra.mxu0 0.0
    %2093 = vmatprep.subr.mxu0 0.0
    %2094 = vmatpush1.msra.mxu0 0.0
    %2095 = vmatprep.subr.mxu0 0.0
    %2096 = vmatpush1.msra.mxu0 0.0
    %2097 = vmatprep.subr.mxu0 0.0
    %2098 = vmatpush1.msra.mxu0 0.0
    %2099 = vmatprep.subr.mxu0 0.0
    %2100 = vmatpush1.msra.mxu0 0.0
    %2101 = vmatprep.subr.mxu0 0.0
    %2102 = vmatpush1.msra.mxu0 0.0
    %2103 = vmatprep.subr.mxu0 0.0
    %2104 = vmatpush1.msra.mxu0 0.0
    %2105 = vmatprep.subr.mxu0 0.0
    %2106 = vmatpush1.msra.mxu0 0.0
    %2107 = vmatprep.subr.mxu0 0.0
    %2108 = vmatpush1.msra.mxu0 0.0
    %2109 = vmatprep.subr.mxu0 0.0
    %2110 = vmatpush1.msra.mxu0 0.0
    %2111 = vmatprep.subr.mxu0 0.0
    %2112 = vmatpush1.msra.mxu0 0.0
    %2113 = vmatprep.subr.mxu0 0.0
    %2114 = vmatpush1.msra.mxu0 0.0
    %2115 = vmatprep.subr.mxu0 0.0
    %2116 = vmatpush1.msra.mxu0 0.0
    %2117 = vmatprep.subr.mxu0 0.0
    %2118 = vmatpush1.msra.mxu0 0.0
    %2119 = vmatprep.subr.mxu0 0.0
    %2120 = vmatpush1.msra.mxu0 0.0
    %2121 = vmatprep.subr.mxu0 0.0
    %2122 = vmatpush1.msra.mxu0 0.0
    %2123 = vmatprep.subr.mxu0 0.0
    %2124 = vmatpush1.msra.mxu0 0.0
    %2125 = vmatprep.subr.mxu0 0.0
    %2126 = vmatpush1.msra.mxu0 0.0
    %2127 = vmatprep.subr.mxu0 0.0
    %2128 = vmatpush1.msra.mxu0 0.0
    %2129 = vmatprep.subr.mxu0 0.0
    %2130 = vmatpush1.msra.mxu0 0.0
    %2131 = vmatprep.subr.mxu0 0.0
    %2132 = vmatpush1.msra.mxu0 0.0
    %2133 = vmatprep.subr.mxu0 0.0
    %2134 = vmatpush1.msra.mxu0 0.0
    %2135 = vmatprep.mubr.f32.mxu0 0.0
    %2136 = vmatmul.mubr.f32.gmra.mrb[0].mxu0 %v2066
    %v2137 = vpop.f32.mrb[0].mxu0
    %v2138 = vadd.f32 0.0, %v2137
    %v2139 = vpop.f32.mrb[0].mxu0
    %2140 = vmatprep.mubr.f32.mxu0 0.0
    %2141 = vmatmul.mubr.f32.gmra.mrb[0].mxu0 %v2069
    %v2142 = vpop.f32.mrb[0].mxu0
    %v2143 = vadd.f32 0.0, %v2142
    %v2144 = vpop.f32.mrb[0].mxu0
    %2145 = vdwg.mxu0
    %v2146 = vtanh.pop %v2057
    %v2147 = vtanh.pop %v2062
    %v2148 = vtanh.pop %v2138
    %v2149 = vtanh.pop %v2143
    %v2182 = vlaneseq
    %v2183 = vand.u32 %v2182, 127
    %v2184 = vlaneseq
    %v2185 = vshrl.u32 %v2184, 7
    %v2186 = vsub.s32 %v2183, %v2185
    %v2187 = vrot.slane %v1500, %v2186
    %v2188 = vadd.s32 %v2183, 4294967288
    %v2189 = vlaneseq
    %v2190 = vshrl.u32 %v2189, 7
    %v2191 = vsub.s32 %v2188, %v2190
    %v2192 = vrot.slane %v1503, %v2191
    %vm2193 = vcmask 130112
    %v2194 = vsel %vm2193, %v2192, %v2187
    %v2195 = vlaneseq
    %v2196 = vshrl.u32 %v2195, 7
    %v2197 = vsub.s32 %v2183, %v2196
    %v2198 = vrot.slane %v1506, %v2197
    %v2199 = vlaneseq
    %v2200 = vshrl.u32 %v2199, 7
    %v2201 = vsub.s32 %v2188, %v2200
    %v2202 = vrot.slane %v1509, %v2201
    %v2203 = vsel %vm2193, %v2202, %v2198
    %v2204 = vlaneseq
    %v2205 = vshrl.u32 %v2204, 7
    %v2206 = vsub.s32 %v2183, %v2205
    %v2207 = vrot.slane %v1512, %v2206
    %v2208 = vlaneseq
    %v2209 = vshrl.u32 %v2208, 7
    %v2210 = vsub.s32 %v2188, %v2209
    %v2211 = vrot.slane %v1515, %v2210
    %v2212 = vsel %vm2193, %v2211, %v2207
    %v2213 = vlaneseq
    %v2214 = vshrl.u32 %v2213, 7
    %v2215 = vsub.s32 %v2183, %v2214
    %v2216 = vrot.slane %v1518, %v2215
    %v2217 = vlaneseq
    %v2218 = vshrl.u32 %v2217, 7
    %v2219 = vsub.s32 %v2188, %v2218
    %v2220 = vrot.slane %v1521, %v2219
    %v2221 = vsel %vm2193, %v2220, %v2216
    %v2222 = vlaneseq
    %v2223 = vshrl.u32 %v2222, 7
    %v2224 = vsub.s32 %v2183, %v2223
    %v2225 = vrot.slane %v1524, %v2224
    %v2226 = vlaneseq
    %v2227 = vshrl.u32 %v2226, 7
    %v2228 = vsub.s32 %v2188, %v2227
    %v2229 = vrot.slane %v1527, %v2228
    %v2230 = vsel %vm2193, %v2229, %v2225
    %v2231 = vlaneseq
    %v2232 = vshrl.u32 %v2231, 7
    %v2233 = vsub.s32 %v2183, %v2232
    %v2234 = vrot.slane %v1530, %v2233
    %v2235 = vlaneseq
    %v2236 = vshrl.u32 %v2235, 7
    %v2237 = vsub.s32 %v2188, %v2236
    %v2238 = vrot.slane %v1533, %v2237
    %v2239 = vsel %vm2193, %v2238, %v2234
    %v2240 = vlaneseq
    %v2241 = vshrl.u32 %v2240, 7
    %v2242 = vsub.s32 %v2183, %v2241
    %v2243 = vrot.slane %v1536, %v2242
    %v2244 = vlaneseq
    %v2245 = vshrl.u32 %v2244, 7
    %v2246 = vsub.s32 %v2188, %v2245
    %v2247 = vrot.slane %v1539, %v2246
    %v2248 = vsel %vm2193, %v2247, %v2243
    %v2249 = vlaneseq
    %v2250 = vshrl.u32 %v2249, 7
    %v2251 = vsub.s32 %v2183, %v2250
    %v2252 = vrot.slane %v1542, %v2251
    %v2253 = vlaneseq
    %v2254 = vshrl.u32 %v2253, 7
    %v2255 = vsub.s32 %v2188, %v2254
    %v2256 = vrot.slane %v1545, %v2255
    %v2257 = vsel %vm2193, %v2256, %v2252
    %v2258 = vlaneseq
    %v2259 = vshrl.u32 %v2258, 7
    %v2260 = vsub.s32 %v2183, %v2259
    %v2261 = vrot.slane %v1548, %v2260
    %v2262 = vlaneseq
    %v2263 = vshrl.u32 %v2262, 7
    %v2264 = vsub.s32 %v2188, %v2263
    %v2265 = vrot.slane %v1551, %v2264
    %v2266 = vsel %vm2193, %v2265, %v2261
    %v2267 = vlaneseq
    %v2268 = vshrl.u32 %v2267, 7
    %v2269 = vsub.s32 %v2183, %v2268
    %v2270 = vrot.slane %v1554, %v2269
    %v2271 = vlaneseq
    %v2272 = vshrl.u32 %v2271, 7
    %v2273 = vsub.s32 %v2188, %v2272
    %v2274 = vrot.slane %v1557, %v2273
    %v2275 = vsel %vm2193, %v2274, %v2270
    %v2276 = vlaneseq
    %v2277 = vshrl.u32 %v2276, 7
    %v2278 = vsub.s32 %v2183, %v2277
    %v2279 = vrot.slane %v1560, %v2278
    %v2280 = vlaneseq
    %v2281 = vshrl.u32 %v2280, 7
    %v2282 = vsub.s32 %v2188, %v2281
    %v2283 = vrot.slane %v1563, %v2282
    %v2284 = vsel %vm2193, %v2283, %v2279
    %v2285 = vlaneseq
    %v2286 = vshrl.u32 %v2285, 7
    %v2287 = vsub.s32 %v2183, %v2286
    %v2288 = vrot.slane %v1566, %v2287
    %v2289 = vlaneseq
    %v2290 = vshrl.u32 %v2289, 7
    %v2291 = vsub.s32 %v2188, %v2290
    %v2292 = vrot.slane %v1569, %v2291
    %v2293 = vsel %vm2193, %v2292, %v2288
    %v2294 = vlaneseq
    %v2295 = vshrl.u32 %v2294, 7
    %v2296 = vsub.s32 %v2183, %v2295
    %v2297 = vrot.slane %v1572, %v2296
    %v2298 = vlaneseq
    %v2299 = vshrl.u32 %v2298, 7
    %v2300 = vsub.s32 %v2188, %v2299
    %v2301 = vrot.slane %v1575, %v2300
    %v2302 = vsel %vm2193, %v2301, %v2297
    %v2303 = vlaneseq
    %v2304 = vshrl.u32 %v2303, 7
    %v2305 = vsub.s32 %v2183, %v2304
    %v2306 = vrot.slane %v1578, %v2305
    %v2307 = vlaneseq
    %v2308 = vshrl.u32 %v2307, 7
    %v2309 = vsub.s32 %v2188, %v2308
    %v2310 = vrot.slane %v1581, %v2309
    %v2311 = vsel %vm2193, %v2310, %v2306
    %v2312 = vlaneseq
    %v2313 = vshrl.u32 %v2312, 7
    %v2314 = vsub.s32 %v2183, %v2313
    %v2315 = vrot.slane %v1584, %v2314
    %v2316 = vlaneseq
    %v2317 = vshrl.u32 %v2316, 7
    %v2318 = vsub.s32 %v2188, %v2317
    %v2319 = vrot.slane %v1587, %v2318
    %v2320 = vsel %vm2193, %v2319, %v2315
    %v2321 = vlaneseq
    %v2322 = vshrl.u32 %v2321, 7
    %v2323 = vsub.s32 %v2183, %v2322
    %v2324 = vrot.slane %v1590, %v2323
    %v2325 = vlaneseq
    %v2326 = vshrl.u32 %v2325, 7
    %v2327 = vsub.s32 %v2188, %v2326
    %v2328 = vrot.slane %v1593, %v2327
    %v2329 = vsel %vm2193, %v2328, %v2324
    %vm2330 = vcmask 1041409
    %v2331 = vsel %vm2330, %v2203, %v2194
    %vm2332 = vcmask 1042434
    %v2333 = vsel %vm2332, %v2212, %v2331
    %vm2334 = vcmask 1043459
    %v2335 = vsel %vm2334, %v2221, %v2333
    %vm2336 = vcmask 1044484
    %v2337 = vsel %vm2336, %v2230, %v2335
    %vm2338 = vcmask 1045509
    %v2339 = vsel %vm2338, %v2239, %v2337
    %vm2340 = vcmask 1046534
    %v2341 = vsel %vm2340, %v2248, %v2339
    %vm2342 = vcmask 1047559
    %v2343 = vsel %vm2342, %v2257, %v2341
    %v2344 = vsel %vm2330, %v2275, %v2266
    %v2345 = vsel %vm2332, %v2284, %v2344
    %v2346 = vsel %vm2334, %v2293, %v2345
    %v2347 = vsel %vm2336, %v2302, %v2346
    %v2348 = vsel %vm2338, %v2311, %v2347
    %v2349 = vsel %vm2340, %v2320, %v2348
    %v2350 = vsel %vm2342, %v2329, %v2349
    %v2351 = vsel %vm1983, %v2343, 0
    %v2353 = vsel %vm1983, %v2350, 0
    %2355 = vmatprep.subr.mxu0 0.0
    %2356 = vmatpush1.msra.mxu0 %v2146
    %2357 = vmatprep.subr.mxu0 0.0
    %2358 = vmatpush1.msra.mxu0 %v2147
    %2359 = vmatprep.subr.mxu0 0.0
    %2360 = vmatpush1.msra.mxu0 0.0
    %2361 = vmatprep.subr.mxu0 0.0
    %2362 = vmatpush1.msra.mxu0 0.0
    %2363 = vmatprep.subr.mxu0 0.0
    %2364 = vmatpush1.msra.mxu0 0.0
    %2365 = vmatprep.subr.mxu0 0.0
    %2366 = vmatpush1.msra.mxu0 0.0
    %2367 = vmatprep.subr.mxu0 0.0
    %2368 = vmatpush1.msra.mxu0 0.0
    %2369 = vmatprep.subr.mxu0 0.0
    %2370 = vmatpush1.msra.mxu0 0.0
    %2371 = vmatprep.subr.mxu0 0.0
    %2372 = vmatpush1.msra.mxu0 0.0
    %2373 = vmatprep.subr.mxu0 0.0
    %2374 = vmatpush1.msra.mxu0 0.0
    %2375 = vmatprep.subr.mxu0 0.0
    %2376 = vmatpush1.msra.mxu0 0.0
    %2377 = vmatprep.subr.mxu0 0.0
    %2378 = vmatpush1.msra.mxu0 0.0
    %2379 = vmatprep.subr.mxu0 0.0
    %2380 = vmatpush1.msra.mxu0 0.0
    %2381 = vmatprep.subr.mxu0 0.0
    %2382 = vmatpush1.msra.mxu0 0.0
    %2383 = vmatprep.subr.mxu0 0.0
    %2384 = vmatpush1.msra.mxu0 0.0
    %2385 = vmatprep.subr.mxu0 0.0
    %2386 = vmatpush1.msra.mxu0 0.0
    %2387 = vmatprep.subr.mxu0 0.0
    %2388 = vmatpush1.msra.mxu0 0.0
    %2389 = vmatprep.subr.mxu0 0.0
    %2390 = vmatpush1.msra.mxu0 0.0
    %2391 = vmatprep.subr.mxu0 0.0
    %2392 = vmatpush1.msra.mxu0 0.0
    %2393 = vmatprep.subr.mxu0 0.0
    %2394 = vmatpush1.msra.mxu0 0.0
    %2395 = vmatprep.subr.mxu0 0.0
    %2396 = vmatpush1.msra.mxu0 0.0
    %2397 = vmatprep.subr.mxu0 0.0
    %2398 = vmatpush1.msra.mxu0 0.0
    %2399 = vmatprep.subr.mxu0 0.0
    %2400 = vmatpush1.msra.mxu0 0.0
    %2401 = vmatprep.subr.mxu0 0.0
    %2402 = vmatpush1.msra.mxu0 0.0
    %2403 = vmatprep.subr.mxu0 0.0
    %2404 = vmatpush1.msra.mxu0 0.0
    %2405 = vmatprep.subr.mxu0 0.0
    %2406 = vmatpush1.msra.mxu0 0.0
    %2407 = vmatprep.subr.mxu0 0.0
    %2408 = vmatpush1.msra.mxu0 0.0
    %2409 = vmatprep.subr.mxu0 0.0
    %2410 = vmatpush1.msra.mxu0 0.0
    %2411 = vmatprep.subr.mxu0 0.0
    %2412 = vmatpush1.msra.mxu0 0.0
    %2413 = vmatprep.subr.mxu0 0.0
    %2414 = vmatpush1.msra.mxu0 0.0
    %2415 = vmatprep.subr.mxu0 0.0
    %2416 = vmatpush1.msra.mxu0 0.0
    %2417 = vmatprep.subr.mxu0 0.0
    %2418 = vmatpush1.msra.mxu0 0.0
    %2419 = vmatprep.mubr.f32.mxu0 0.0
    %2420 = vmatmul.mubr.f32.gmra.mrb[0].mxu0 %v2351
    %v2421 = vpop.f32.mrb[0].mxu0
    %v2422 = vadd.f32 0.0, %v2421
    %v2423 = vpop.f32.mrb[0].mxu0
    %2424 = vmatprep.mubr.f32.mxu0 0.0
    %2425 = vmatmul.mubr.f32.gmra.mrb[0].mxu0 %v2353
    %v2426 = vpop.f32.mrb[0].mxu0
    %v2427 = vadd.f32 0.0, %v2426
    %v2428 = vpop.f32.mrb[0].mxu0
    %2429 = vdwg.mxu0
    %v2462 = vlaneseq
    %v2463 = vshrl.u32 %v2462, 7
    %v2464 = vsub.s32 %v2183, %v2463
    %v2465 = vrot.slane %v1596, %v2464
    %v2466 = vlaneseq
    %v2467 = vshrl.u32 %v2466, 7
    %v2468 = vsub.s32 %v2188, %v2467
    %v2469 = vrot.slane %v1599, %v2468
    %v2470 = vsel %vm2193, %v2469, %v2465
    %v2471 = vlaneseq
    %v2472 = vshrl.u32 %v2471, 7
    %v2473 = vsub.s32 %v2183, %v2472
    %v2474 = vrot.slane %v1602, %v2473
    %v2475 = vlaneseq
    %v2476 = vshrl.u32 %v2475, 7
    %v2477 = vsub.s32 %v2188, %v2476
    %v2478 = vrot.slane %v1605, %v2477
    %v2479 = vsel %vm2193, %v2478, %v2474
    %v2480 = vlaneseq
    %v2481 = vshrl.u32 %v2480, 7
    %v2482 = vsub.s32 %v2183, %v2481
    %v2483 = vrot.slane %v1608, %v2482
    %v2484 = vlaneseq
    %v2485 = vshrl.u32 %v2484, 7
    %v2486 = vsub.s32 %v2188, %v2485
    %v2487 = vrot.slane %v1611, %v2486
    %v2488 = vsel %vm2193, %v2487, %v2483
    %v2489 = vlaneseq
    %v2490 = vshrl.u32 %v2489, 7
    %v2491 = vsub.s32 %v2183, %v2490
    %v2492 = vrot.slane %v1614, %v2491
    %v2493 = vlaneseq
    %v2494 = vshrl.u32 %v2493, 7
    %v2495 = vsub.s32 %v2188, %v2494
    %v2496 = vrot.slane %v1617, %v2495
    %v2497 = vsel %vm2193, %v2496, %v2492
    %v2498 = vlaneseq
    %v2499 = vshrl.u32 %v2498, 7
    %v2500 = vsub.s32 %v2183, %v2499
    %v2501 = vrot.slane %v1620, %v2500
    %v2502 = vlaneseq
    %v2503 = vshrl.u32 %v2502, 7
    %v2504 = vsub.s32 %v2188, %v2503
    %v2505 = vrot.slane %v1623, %v2504
    %v2506 = vsel %vm2193, %v2505, %v2501
    %v2507 = vlaneseq
    %v2508 = vshrl.u32 %v2507, 7
    %v2509 = vsub.s32 %v2183, %v2508
    %v2510 = vrot.slane %v1626, %v2509
    %v2511 = vlaneseq
    %v2512 = vshrl.u32 %v2511, 7
    %v2513 = vsub.s32 %v2188, %v2512
    %v2514 = vrot.slane %v1629, %v2513
    %v2515 = vsel %vm2193, %v2514, %v2510
    %v2516 = vlaneseq
    %v2517 = vshrl.u32 %v2516, 7
    %v2518 = vsub.s32 %v2183, %v2517
    %v2519 = vrot.slane %v1632, %v2518
    %v2520 = vlaneseq
    %v2521 = vshrl.u32 %v2520, 7
    %v2522 = vsub.s32 %v2188, %v2521
    %v2523 = vrot.slane %v1635, %v2522
    %v2524 = vsel %vm2193, %v2523, %v2519
    %v2525 = vlaneseq
    %v2526 = vshrl.u32 %v2525, 7
    %v2527 = vsub.s32 %v2183, %v2526
    %v2528 = vrot.slane %v1638, %v2527
    %v2529 = vlaneseq
    %v2530 = vshrl.u32 %v2529, 7
    %v2531 = vsub.s32 %v2188, %v2530
    %v2532 = vrot.slane %v1641, %v2531
    %v2533 = vsel %vm2193, %v2532, %v2528
    %v2534 = vlaneseq
    %v2535 = vshrl.u32 %v2534, 7
    %v2536 = vsub.s32 %v2183, %v2535
    %v2537 = vrot.slane %v1644, %v2536
    %v2538 = vlaneseq
    %v2539 = vshrl.u32 %v2538, 7
    %v2540 = vsub.s32 %v2188, %v2539
    %v2541 = vrot.slane %v1647, %v2540
    %v2542 = vsel %vm2193, %v2541, %v2537
    %v2543 = vlaneseq
    %v2544 = vshrl.u32 %v2543, 7
    %v2545 = vsub.s32 %v2183, %v2544
    %v2546 = vrot.slane %v1650, %v2545
    %v2547 = vlaneseq
    %v2548 = vshrl.u32 %v2547, 7
    %v2549 = vsub.s32 %v2188, %v2548
    %v2550 = vrot.slane %v1653, %v2549
    %v2551 = vsel %vm2193, %v2550, %v2546
    %v2552 = vlaneseq
    %v2553 = vshrl.u32 %v2552, 7
    %v2554 = vsub.s32 %v2183, %v2553
    %v2555 = vrot.slane %v1656, %v2554
    %v2556 = vlaneseq
    %v2557 = vshrl.u32 %v2556, 7
    %v2558 = vsub.s32 %v2188, %v2557
    %v2559 = vrot.slane %v1659, %v2558
    %v2560 = vsel %vm2193, %v2559, %v2555
    %v2561 = vlaneseq
    %v2562 = vshrl.u32 %v2561, 7
    %v2563 = vsub.s32 %v2183, %v2562
    %v2564 = vrot.slane %v1662, %v2563
    %v2565 = vlaneseq
    %v2566 = vshrl.u32 %v2565, 7
    %v2567 = vsub.s32 %v2188, %v2566
    %v2568 = vrot.slane %v1665, %v2567
    %v2569 = vsel %vm2193, %v2568, %v2564
    %v2570 = vlaneseq
    %v2571 = vshrl.u32 %v2570, 7
    %v2572 = vsub.s32 %v2183, %v2571
    %v2573 = vrot.slane %v1668, %v2572
    %v2574 = vlaneseq
    %v2575 = vshrl.u32 %v2574, 7
    %v2576 = vsub.s32 %v2188, %v2575
    %v2577 = vrot.slane %v1671, %v2576
    %v2578 = vsel %vm2193, %v2577, %v2573
    %v2579 = vlaneseq
    %v2580 = vshrl.u32 %v2579, 7
    %v2581 = vsub.s32 %v2183, %v2580
    %v2582 = vrot.slane %v1674, %v2581
    %v2583 = vlaneseq
    %v2584 = vshrl.u32 %v2583, 7
    %v2585 = vsub.s32 %v2188, %v2584
    %v2586 = vrot.slane %v1677, %v2585
    %v2587 = vsel %vm2193, %v2586, %v2582
    %v2588 = vlaneseq
    %v2589 = vshrl.u32 %v2588, 7
    %v2590 = vsub.s32 %v2183, %v2589
    %v2591 = vrot.slane %v1680, %v2590
    %v2592 = vlaneseq
    %v2593 = vshrl.u32 %v2592, 7
    %v2594 = vsub.s32 %v2188, %v2593
    %v2595 = vrot.slane %v1683, %v2594
    %v2596 = vsel %vm2193, %v2595, %v2591
    %v2597 = vlaneseq
    %v2598 = vshrl.u32 %v2597, 7
    %v2599 = vsub.s32 %v2183, %v2598
    %v2600 = vrot.slane %v1686, %v2599
    %v2601 = vlaneseq
    %v2602 = vshrl.u32 %v2601, 7
    %v2603 = vsub.s32 %v2188, %v2602
    %v2604 = vrot.slane %v1689, %v2603
    %v2605 = vsel %vm2193, %v2604, %v2600
    %v2606 = vsel %vm2330, %v2479, %v2470
    %v2607 = vsel %vm2332, %v2488, %v2606
    %v2608 = vsel %vm2334, %v2497, %v2607
    %v2609 = vsel %vm2336, %v2506, %v2608
    %v2610 = vsel %vm2338, %v2515, %v2609
    %v2611 = vsel %vm2340, %v2524, %v2610
    %v2612 = vsel %vm2342, %v2533, %v2611
    %v2613 = vsel %vm2330, %v2551, %v2542
    %v2614 = vsel %vm2332, %v2560, %v2613
    %v2615 = vsel %vm2334, %v2569, %v2614
    %v2616 = vsel %vm2336, %v2578, %v2615
    %v2617 = vsel %vm2338, %v2587, %v2616
    %v2618 = vsel %vm2340, %v2596, %v2617
    %v2619 = vsel %vm2342, %v2605, %v2618
    %v2620 = vsel %vm1983, %v2612, 0
    %v2622 = vsel %vm1983, %v2619, 0
    %2624 = vmatprep.subr.mxu0 0.0
    %2625 = vmatpush1.msra.mxu0 %v2148
    %2626 = vmatprep.subr.mxu0 0.0
    %2627 = vmatpush1.msra.mxu0 %v2149
    %2628 = vmatprep.subr.mxu0 0.0
    %2629 = vmatpush1.msra.mxu0 0.0
    %2630 = vmatprep.subr.mxu0 0.0
    %2631 = vmatpush1.msra.mxu0 0.0
    %2632 = vmatprep.subr.mxu0 0.0
    %2633 = vmatpush1.msra.mxu0 0.0
    %2634 = vmatprep.subr.mxu0 0.0
    %2635 = vmatpush1.msra.mxu0 0.0
    %2636 = vmatprep.subr.mxu0 0.0
    %2637 = vmatpush1.msra.mxu0 0.0
    %2638 = vmatprep.subr.mxu0 0.0
    %2639 = vmatpush1.msra.mxu0 0.0
    %2640 = vmatprep.subr.mxu0 0.0
    %2641 = vmatpush1.msra.mxu0 0.0
    %2642 = vmatprep.subr.mxu0 0.0
    %2643 = vmatpush1.msra.mxu0 0.0
    %2644 = vmatprep.subr.mxu0 0.0
    %2645 = vmatpush1.msra.mxu0 0.0
    %2646 = vmatprep.subr.mxu0 0.0
    %2647 = vmatpush1.msra.mxu0 0.0
    %2648 = vmatprep.subr.mxu0 0.0
    %2649 = vmatpush1.msra.mxu0 0.0
    %2650 = vmatprep.subr.mxu0 0.0
    %2651 = vmatpush1.msra.mxu0 0.0
    %2652 = vmatprep.subr.mxu0 0.0
    %2653 = vmatpush1.msra.mxu0 0.0
    %2654 = vmatprep.subr.mxu0 0.0
    %2655 = vmatpush1.msra.mxu0 0.0
    %2656 = vmatprep.subr.mxu0 0.0
    %2657 = vmatpush1.msra.mxu0 0.0
    %2658 = vmatprep.subr.mxu0 0.0
    %2659 = vmatpush1.msra.mxu0 0.0
    %2660 = vmatprep.subr.mxu0 0.0
    %2661 = vmatpush1.msra.mxu0 0.0
    %2662 = vmatprep.subr.mxu0 0.0
    %2663 = vmatpush1.msra.mxu0 0.0
    %2664 = vmatprep.subr.mxu0 0.0
    %2665 = vmatpush1.msra.mxu0 0.0
    %2666 = vmatprep.subr.mxu0 0.0
    %2667 = vmatpush1.msra.mxu0 0.0
    %2668 = vmatprep.subr.mxu0 0.0
    %2669 = vmatpush1.msra.mxu0 0.0
    %2670 = vmatprep.subr.mxu0 0.0
    %2671 = vmatpush1.msra.mxu0 0.0
    %2672 = vmatprep.subr.mxu0 0.0
    %2673 = vmatpush1.msra.mxu0 0.0
    %2674 = vmatprep.subr.mxu0 0.0
    %2675 = vmatpush1.msra.mxu0 0.0
    %2676 = vmatprep.subr.mxu0 0.0
    %2677 = vmatpush1.msra.mxu0 0.0
    %2678 = vmatprep.subr.mxu0 0.0
    %2679 = vmatpush1.msra.mxu0 0.0
    %2680 = vmatprep.subr.mxu0 0.0
    %2681 = vmatpush1.msra.mxu0 0.0
    %2682 = vmatprep.subr.mxu0 0.0
    %2683 = vmatpush1.msra.mxu0 0.0
    %2684 = vmatprep.subr.mxu0 0.0
    %2685 = vmatpush1.msra.mxu0 0.0
    %2686 = vmatprep.subr.mxu0 0.0
    %2687 = vmatpush1.msra.mxu0 0.0
    %2688 = vmatprep.mubr.f32.mxu0 0.0
    %2689 = vmatmul.mubr.f32.gmra.mrb[0].mxu0 %v2620
    %v2690 = vpop.f32.mrb[0].mxu0
    %v2691 = vadd.f32 0.0, %v2690
    %v2692 = vpop.f32.mrb[0].mxu0
    %2693 = vmatprep.mubr.f32.mxu0 0.0
    %2694 = vmatmul.mubr.f32.gmra.mrb[0].mxu0 %v2622
    %v2695 = vpop.f32.mrb[0].mxu0
    %v2696 = vadd.f32 0.0, %v2695
    %v2697 = vpop.f32.mrb[0].mxu0
    %2698 = vdwg.mxu0
    %v2699 = vtanh.pop %v2422
    %v2700 = vtanh.pop %v2427
    %v2701 = vtanh.pop %v2691
    %v2702 = vtanh.pop %v2696
    %v2703 = vld [vmem:[%s13] sm:$0xff]
    %v2704 = vld [vmem:[%s13 + $0x8] sm:$0xff]
    %v2705 = vld [vmem:[%s13 + $0x10] sm:$0xff]
    %v2706 = vld [vmem:[%s13 + $0x18] sm:$0xff]
    %v2707 = vld [vmem:[%s14] sm:$0xff]
    %v2708 = vld [vmem:[%s14 + $0x8] sm:$0xff]
    %v2709 = vld [vmem:[%s14 + $0x10] sm:$0xff]
    %v2710 = vld [vmem:[%s14 + $0x18] sm:$0xff]
    %v2712 = vsel %vm1497, %v2699, 0
    %v2715 = vsel %vm1497, %v2700, 0
    %v2718 = vsel %vm1497, %v2701, 0
    %v2721 = vsel %vm1497, %v2702, 0
    %2723 = vmatprep.subr.mxu0 0.0
    %2724 = vmatpush1.msra.mxu0 %v2707
    %2725 = vmatprep.subr.mxu0 0.0
    %2726 = vmatpush1.msra.mxu0 %v2708
    %2727 = vmatprep.subr.mxu0 0.0
    %2728 = vmatpush1.msra.mxu0 %v2709
    %2729 = vmatprep.subr.mxu0 0.0
    %2730 = vmatpush1.msra.mxu0 %v2710
    %2731 = vmatprep.subr.mxu0 0.0
    %2732 = vmatpush1.msra.mxu0 0.0
    %2733 = vmatprep.subr.mxu0 0.0
    %2734 = vmatpush1.msra.mxu0 0.0
    %2735 = vmatprep.subr.mxu0 0.0
    %2736 = vmatpush1.msra.mxu0 0.0
    %2737 = vmatprep.subr.mxu0 0.0
    %2738 = vmatpush1.msra.mxu0 0.0
    %2739 = vmatprep.subr.mxu0 0.0
    %2740 = vmatpush1.msra.mxu0 0.0
    %2741 = vmatprep.subr.mxu0 0.0
    %2742 = vmatpush1.msra.mxu0 0.0
    %2743 = vmatprep.subr.mxu0 0.0
    %2744 = vmatpush1.msra.mxu0 0.0
    %2745 = vmatprep.subr.mxu0 0.0
    %2746 = vmatpush1.msra.mxu0 0.0
    %2747 = vmatprep.subr.mxu0 0.0
    %2748 = vmatpush1.msra.mxu0 0.0
    %2749 = vmatprep.subr.mxu0 0.0
    %2750 = vmatpush1.msra.mxu0 0.0
    %2751 = vmatprep.subr.mxu0 0.0
    %2752 = vmatpush1.msra.mxu0 0.0
    %2753 = vmatprep.subr.mxu0 0.0
    %2754 = vmatpush1.msra.mxu0 0.0
    %2755 = vmatprep.subr.mxu0 0.0
    %2756 = vmatpush1.msra.mxu0 0.0
    %2757 = vmatprep.subr.mxu0 0.0
    %2758 = vmatpush1.msra.mxu0 0.0
    %2759 = vmatprep.subr.mxu0 0.0
    %2760 = vmatpush1.msra.mxu0 0.0
    %2761 = vmatprep.subr.mxu0 0.0
    %2762 = vmatpush1.msra.mxu0 0.0
    %2763 = vmatprep.subr.mxu0 0.0
    %2764 = vmatpush1.msra.mxu0 0.0
    %2765 = vmatprep.subr.mxu0 0.0
    %2766 = vmatpush1.msra.mxu0 0.0
    %2767 = vmatprep.subr.mxu0 0.0
    %2768 = vmatpush1.msra.mxu0 0.0
    %2769 = vmatprep.subr.mxu0 0.0
    %2770 = vmatpush1.msra.mxu0 0.0
    %2771 = vmatprep.subr.mxu0 0.0
    %2772 = vmatpush1.msra.mxu0 0.0
    %2773 = vmatprep.subr.mxu0 0.0
    %2774 = vmatpush1.msra.mxu0 0.0
    %2775 = vmatprep.subr.mxu0 0.0
    %2776 = vmatpush1.msra.mxu0 0.0
    %2777 = vmatprep.subr.mxu0 0.0
    %2778 = vmatpush1.msra.mxu0 0.0
    %2779 = vmatprep.subr.mxu0 0.0
    %2780 = vmatpush1.msra.mxu0 0.0
    %2781 = vmatprep.subr.mxu0 0.0
    %2782 = vmatpush1.msra.mxu0 0.0
    %2783 = vmatprep.subr.mxu0 0.0
    %2784 = vmatpush1.msra.mxu0 0.0
    %2785 = vmatprep.subr.mxu0 0.0
    %2786 = vmatpush1.msra.mxu0 0.0
    %2787 = vmatprep.mubr.f32.mxu0 0.0
    %2788 = vmatmul.mubr.f32.gmra.mrb[0].mxu0 %v2712
    %v2789 = vpop.f32.mrb[0].mxu0
    %v2790 = vadd.f32 0.0, %v2789
    %v2791 = vpop.f32.mrb[0].mxu0
    %2792 = vmatprep.mubr.f32.mxu0 0.0
    %2793 = vmatmul.mubr.f32.gmra.mrb[0].mxu0 %v2715
    %v2794 = vpop.f32.mrb[0].mxu0
    %v2795 = vadd.f32 0.0, %v2794
    %v2796 = vpop.f32.mrb[0].mxu0
    %2797 = vmatprep.mubr.f32.mxu0 0.0
    %2798 = vmatmul.mubr.f32.gmra.mrb[0].mxu0 %v2718
    %v2799 = vpop.f32.mrb[0].mxu0
    %v2800 = vadd.f32 0.0, %v2799
    %v2801 = vpop.f32.mrb[0].mxu0
    %2802 = vmatprep.mubr.f32.mxu0 0.0
    %2803 = vmatmul.mubr.f32.gmra.mrb[0].mxu0 %v2721
    %v2804 = vpop.f32.mrb[0].mxu0
    %v2805 = vadd.f32 0.0, %v2804
    %v2806 = vpop.f32.mrb[0].mxu0
    %2807 = vdwg.mxu0
    %v2809 = vsel %vm1497, %v2146, 0
    %v2812 = vsel %vm1497, %v2147, 0
    %v2815 = vsel %vm1497, %v2148, 0
    %v2818 = vsel %vm1497, %v2149, 0
    %2820 = vmatprep.subr.mxu0 0.0
    %2821 = vmatpush1.msra.mxu0 %v2703
    %2822 = vmatprep.subr.mxu0 0.0
    %2823 = vmatpush1.msra.mxu0 %v2704
    %2824 = vmatprep.subr.mxu0 0.0
    %2825 = vmatpush1.msra.mxu0 %v2705
    %2826 = vmatprep.subr.mxu0 0.0
    %2827 = vmatpush1.msra.mxu0 %v2706
    %2828 = vmatprep.subr.mxu0 0.0
    %2829 = vmatpush1.msra.mxu0 0.0
    %2830 = vmatprep.subr.mxu0 0.0
    %2831 = vmatpush1.msra.mxu0 0.0
    %2832 = vmatprep.subr.mxu0 0.0
    %2833 = vmatpush1.msra.mxu0 0.0
    %2834 = vmatprep.subr.mxu0 0.0
    %2835 = vmatpush1.msra.mxu0 0.0
    %2836 = vmatprep.subr.mxu0 0.0
    %2837 = vmatpush1.msra.mxu0 0.0
    %2838 = vmatprep.subr.mxu0 0.0
    %2839 = vmatpush1.msra.mxu0 0.0
    %2840 = vmatprep.subr.mxu0 0.0
    %2841 = vmatpush1.msra.mxu0 0.0
    %2842 = vmatprep.subr.mxu0 0.0
    %2843 = vmatpush1.msra.mxu0 0.0
    %2844 = vmatprep.subr.mxu0 0.0
    %2845 = vmatpush1.msra.mxu0 0.0
    %2846 = vmatprep.subr.mxu0 0.0
    %2847 = vmatpush1.msra.mxu0 0.0
    %2848 = vmatprep.subr.mxu0 0.0
    %2849 = vmatpush1.msra.mxu0 0.0
    %2850 = vmatprep.subr.mxu0 0.0
    %2851 = vmatpush1.msra.mxu0 0.0
    %2852 = vmatprep.subr.mxu0 0.0
    %2853 = vmatpush1.msra.mxu0 0.0
    %2854 = vmatprep.subr.mxu0 0.0
    %2855 = vmatpush1.msra.mxu0 0.0
    %2856 = vmatprep.subr.mxu0 0.0
    %2857 = vmatpush1.msra.mxu0 0.0
    %2858 = vmatprep.subr.mxu0 0.0
    %2859 = vmatpush1.msra.mxu0 0.0
    %2860 = vmatprep.subr.mxu0 0.0
    %2861 = vmatpush1.msra.mxu0 0.0
    %2862 = vmatprep.subr.mxu0 0.0
    %2863 = vmatpush1.msra.mxu0 0.0
    %2864 = vmatprep.subr.mxu0 0.0
    %2865 = vmatpush1.msra.mxu0 0.0
    %2866 = vmatprep.subr.mxu0 0.0
    %2867 = vmatpush1.msra.mxu0 0.0
    %2868 = vmatprep.subr.mxu0 0.0
    %2869 = vmatpush1.msra.mxu0 0.0
    %2870 = vmatprep.subr.mxu0 0.0
    %2871 = vmatpush1.msra.mxu0 0.0
    %2872 = vmatprep.subr.mxu0 0.0
    %2873 = vmatpush1.msra.mxu0 0.0
    %2874 = vmatprep.subr.mxu0 0.0
    %2875 = vmatpush1.msra.mxu0 0.0
    %2876 = vmatprep.subr.mxu0 0.0
    %2877 = vmatpush1.msra.mxu0 0.0
    %2878 = vmatprep.subr.mxu0 0.0
    %2879 = vmatpush1.msra.mxu0 0.0
    %2880 = vmatprep.subr.mxu0 0.0
    %2881 = vmatpush1.msra.mxu0 0.0
    %2882 = vmatprep.subr.mxu0 0.0
    %2883 = vmatpush1.msra.mxu0 0.0
    %2884 = vmatprep.mubr.f32.mxu0 0.0
    %2885 = vmatmul.mubr.f32.gmra.mrb[0].mxu0 %v2809
    %v2886 = vpop.f32.mrb[0].mxu0
    %v2887 = vadd.f32 %v2790, %v2886
    %v2888 = vpop.f32.mrb[0].mxu0
    %2889 = vmatprep.mubr.f32.mxu0 0.0
    %2890 = vmatmul.mubr.f32.gmra.mrb[0].mxu0 %v2812
    %v2891 = vpop.f32.mrb[0].mxu0
    %v2892 = vadd.f32 %v2795, %v2891
    %v2893 = vpop.f32.mrb[0].mxu0
    %2894 = vmatprep.mubr.f32.mxu0 0.0
    %2895 = vmatmul.mubr.f32.gmra.mrb[0].mxu0 %v2815
    %v2896 = vpop.f32.mrb[0].mxu0
    %v2897 = vadd.f32 %v2800, %v2896
    %v2898 = vpop.f32.mrb[0].mxu0
    %2899 = vmatprep.mubr.f32.mxu0 0.0
    %2900 = vmatmul.mubr.f32.gmra.mrb[0].mxu0 %v2818
    %v2901 = vpop.f32.mrb[0].mxu0
    %v2902 = vadd.f32 %v2805, %v2901
    %v2903 = vpop.f32.mrb[0].mxu0
    %2904 = vdwg.mxu0
    %v2905 = vld [vmem:[%s15] sm:$0x1]
    %v2907 = vlaneseq
    %v2908 = vshrl.u32 %v2907, 7
    %v2909 = vsub.s32 0, %v2908
    %v2910 = vrot.slane %v2905, %v2909
    %v2912 = vadd.f32 %v2887, %v2910
    %v2913 = vadd.f32 %v2892, %v2910
    %v2914 = vadd.f32 %v2897, %v2910
    %v2915 = vadd.f32 %v2902, %v2910
    %v2916 = vtanh.pop %v2912
    %v2917 = vtanh.pop %v2913
    %v2918 = vtanh.pop %v2914
    %v2919 = vtanh.pop %v2915
    %s2920 = scalar_lea.vmem %s16, 32
    %v2921 = vld [vmem:[%s2920] sm:$0xff]
    %v2922 = vld [vmem:[%s2920 + $0x8] sm:$0xff]
    %v2923 = vld [vmem:[%s2920 + $0x10] sm:$0xff]
    %v2924 = vld [vmem:[%s2920 + $0x18] sm:$0xff]
    %v2926 = vsel %vm1497, %v2916, 0
    %v2929 = vsel %vm1497, %v2917, 0
    %v2932 = vsel %vm1497, %v2918, 0
    %v2935 = vsel %vm1497, %v2919, 0
    %2937 = vmatprep.subr.mxu0 0.0
    %2938 = vmatpush1.msra.mxu0 %v2921
    %2939 = vmatprep.subr.mxu0 0.0
    %2940 = vmatpush1.msra.mxu0 %v2922
    %2941 = vmatprep.subr.mxu0 0.0
    %2942 = vmatpush1.msra.mxu0 %v2923
    %2943 = vmatprep.subr.mxu0 0.0
    %2944 = vmatpush1.msra.mxu0 %v2924
    %2945 = vmatprep.subr.mxu0 0.0
    %2946 = vmatpush1.msra.mxu0 0.0
    %2947 = vmatprep.subr.mxu0 0.0
    %2948 = vmatpush1.msra.mxu0 0.0
    %2949 = vmatprep.subr.mxu0 0.0
    %2950 = vmatpush1.msra.mxu0 0.0
    %2951 = vmatprep.subr.mxu0 0.0
    %2952 = vmatpush1.msra.mxu0 0.0
    %2953 = vmatprep.subr.mxu0 0.0
    %2954 = vmatpush1.msra.mxu0 0.0
    %2955 = vmatprep.subr.mxu0 0.0
    %2956 = vmatpush1.msra.mxu0 0.0
    %2957 = vmatprep.subr.mxu0 0.0
    %2958 = vmatpush1.msra.mxu0 0.0
    %2959 = vmatprep.subr.mxu0 0.0
    %2960 = vmatpush1.msra.mxu0 0.0
    %2961 = vmatprep.subr.mxu0 0.0
    %2962 = vmatpush1.msra.mxu0 0.0
    %2963 = vmatprep.subr.mxu0 0.0
    %2964 = vmatpush1.msra.mxu0 0.0
    %2965 = vmatprep.subr.mxu0 0.0
    %2966 = vmatpush1.msra.mxu0 0.0
    %2967 = vmatprep.subr.mxu0 0.0
    %2968 = vmatpush1.msra.mxu0 0.0
    %2969 = vmatprep.subr.mxu0 0.0
    %2970 = vmatpush1.msra.mxu0 0.0
    %2971 = vmatprep.subr.mxu0 0.0
    %2972 = vmatpush1.msra.mxu0 0.0
    %2973 = vmatprep.subr.mxu0 0.0
    %2974 = vmatpush1.msra.mxu0 0.0
    %2975 = vmatprep.subr.mxu0 0.0
    %2976 = vmatpush1.msra.mxu0 0.0
    %2977 = vmatprep.subr.mxu0 0.0
    %2978 = vmatpush1.msra.mxu0 0.0
    %2979 = vmatprep.subr.mxu0 0.0
    %2980 = vmatpush1.msra.mxu0 0.0
    %2981 = vmatprep.subr.mxu0 0.0
    %2982 = vmatpush1.msra.mxu0 0.0
    %2983 = vmatprep.subr.mxu0 0.0
    %2984 = vmatpush1.msra.mxu0 0.0
    %2985 = vmatprep.subr.mxu0 0.0
    %2986 = vmatpush1.msra.mxu0 0.0
    %2987 = vmatprep.subr.mxu0 0.0
    %2988 = vmatpush1.msra.mxu0 0.0
    %2989 = vmatprep.subr.mxu0 0.0
    %2990 = vmatpush1.msra.mxu0 0.0
    %2991 = vmatprep.subr.mxu0 0.0
    %2992 = vmatpush1.msra.mxu0 0.0
    %2993 = vmatprep.subr.mxu0 0.0
    %2994 = vmatpush1.msra.mxu0 0.0
    %2995 = vmatprep.subr.mxu0 0.0
    %2996 = vmatpush1.msra.mxu0 0.0
    %2997 = vmatprep.subr.mxu0 0.0
    %2998 = vmatpush1.msra.mxu0 0.0
    %2999 = vmatprep.subr.mxu0 0.0
    %3000 = vmatpush1.msra.mxu0 0.0
    %3001 = vmatprep.mubr.f32.mxu0 0.0
    %3002 = vmatmul.mubr.f32.gmra.mrb[0].mxu0 %v2926
    %v3003 = vpop.f32.mrb[0].mxu0
    %v3004 = vadd.f32 0.0, %v3003
    %v3005 = vpop.f32.mrb[0].mxu0
    %3006 = vmatprep.mubr.f32.mxu0 0.0
    %3007 = vmatmul.mubr.f32.gmra.mrb[0].mxu0 %v2929
    %v3008 = vpop.f32.mrb[0].mxu0
    %v3009 = vadd.f32 0.0, %v3008
    %v3010 = vpop.f32.mrb[0].mxu0
    %3011 = vmatprep.mubr.f32.mxu0 0.0
    %3012 = vmatmul.mubr.f32.gmra.mrb[0].mxu0 %v2932
    %v3013 = vpop.f32.mrb[0].mxu0
    %v3014 = vadd.f32 0.0, %v3013
    %v3015 = vpop.f32.mrb[0].mxu0
    %3016 = vmatprep.mubr.f32.mxu0 0.0
    %3017 = vmatmul.mubr.f32.gmra.mrb[0].mxu0 %v2935
    %v3018 = vpop.f32.mrb[0].mxu0
    %v3019 = vadd.f32 0.0, %v3018
    %v3020 = vpop.f32.mrb[0].mxu0
    %3021 = vdwg.mxu0
    %v3022 = vadd.f32 %v1780, %v3004
    %v3023 = vadd.f32 %v1785, %v3009
    %v3024 = vadd.f32 %v1790, %v3014
    %v3025 = vadd.f32 %v1795, %v3019
    %s3026 = scalar_lea.vmem %s20, 32
    %v3027 = vld [vmem:[%s3026] sm:$0xff]
    %v3028 = vld [vmem:[%s3026 + $0x8] sm:$0xff]
    %v3029 = vld [vmem:[%s3026 + $0x10] sm:$0xff]
    %v3030 = vld [vmem:[%s3026 + $0x18] sm:$0xff]
    %3031 = vmatprep.subr.mxu0 0.0
    %3032 = vmatpush1.msra.mxu0 %v3027
    %3033 = vmatprep.subr.mxu0 0.0
    %3034 = vmatpush1.msra.mxu0 %v3028
    %3035 = vmatprep.subr.mxu0 0.0
    %3036 = vmatpush1.msra.mxu0 %v3029
    %3037 = vmatprep.subr.mxu0 0.0
    %3038 = vmatpush1.msra.mxu0 %v3030
    %3039 = vmatprep.subr.mxu0 0.0
    %3040 = vmatpush1.msra.mxu0 0.0
    %3041 = vmatprep.subr.mxu0 0.0
    %3042 = vmatpush1.msra.mxu0 0.0
    %3043 = vmatprep.subr.mxu0 0.0
    %3044 = vmatpush1.msra.mxu0 0.0
    %3045 = vmatprep.subr.mxu0 0.0
    %3046 = vmatpush1.msra.mxu0 0.0
    %3047 = vmatprep.subr.mxu0 0.0
    %3048 = vmatpush1.msra.mxu0 0.0
    %3049 = vmatprep.subr.mxu0 0.0
    %3050 = vmatpush1.msra.mxu0 0.0
    %3051 = vmatprep.subr.mxu0 0.0
    %3052 = vmatpush1.msra.mxu0 0.0
    %3053 = vmatprep.subr.mxu0 0.0
    %3054 = vmatpush1.msra.mxu0 0.0
    %3055 = vmatprep.subr.mxu0 0.0
    %3056 = vmatpush1.msra.mxu0 0.0
    %3057 = vmatprep.subr.mxu0 0.0
    %3058 = vmatpush1.msra.mxu0 0.0
    %3059 = vmatprep.subr.mxu0 0.0
    %3060 = vmatpush1.msra.mxu0 0.0
    %3061 = vmatprep.subr.mxu0 0.0
    %3062 = vmatpush1.msra.mxu0 0.0
    %3063 = vmatprep.subr.mxu0 0.0
    %3064 = vmatpush1.msra.mxu0 0.0
    %3065 = vmatprep.subr.mxu0 0.0
    %3066 = vmatpush1.msra.mxu0 0.0
    %3067 = vmatprep.subr.mxu0 0.0
    %3068 = vmatpush1.msra.mxu0 0.0
    %3069 = vmatprep.subr.mxu0 0.0
    %3070 = vmatpush1.msra.mxu0 0.0
    %3071 = vmatprep.subr.mxu0 0.0
    %3072 = vmatpush1.msra.mxu0 0.0
    %3073 = vmatprep.subr.mxu0 0.0
    %3074 = vmatpush1.msra.mxu0 0.0
    %3075 = vmatprep.subr.mxu0 0.0
    %3076 = vmatpush1.msra.mxu0 0.0
    %3077 = vmatprep.subr.mxu0 0.0
    %3078 = vmatpush1.msra.mxu0 0.0
    %3079 = vmatprep.subr.mxu0 0.0
    %3080 = vmatpush1.msra.mxu0 0.0
    %3081 = vmatprep.subr.mxu0 0.0
    %3082 = vmatpush1.msra.mxu0 0.0
    %3083 = vmatprep.subr.mxu0 0.0
    %3084 = vmatpush1.msra.mxu0 0.0
    %3085 = vmatprep.subr.mxu0 0.0
    %3086 = vmatpush1.msra.mxu0 0.0
    %3087 = vmatprep.subr.mxu0 0.0
    %3088 = vmatpush1.msra.mxu0 0.0
    %3089 = vmatprep.subr.mxu0 0.0
    %3090 = vmatpush1.msra.mxu0 0.0
    %3091 = vmatprep.subr.mxu0 0.0
    %3092 = vmatpush1.msra.mxu0 0.0
    %3093 = vmatprep.subr.mxu0 0.0
    %3094 = vmatpush1.msra.mxu0 0.0
    %3095 = vmatprep.mubr.f32.mxu0 0.0
    %3096 = vmatmul.mubr.f32.gmra.mrb[0].mxu0 %v2926
    %v3097 = vpop.f32.mrb[0].mxu0
    %v3098 = vadd.f32 0.0, %v3097
    %v3099 = vpop.f32.mrb[0].mxu0
    %3100 = vmatprep.mubr.f32.mxu0 0.0
    %3101 = vmatmul.mubr.f32.gmra.mrb[0].mxu0 %v2929
    %v3102 = vpop.f32.mrb[0].mxu0
    %v3103 = vadd.f32 0.0, %v3102
    %v3104 = vpop.f32.mrb[0].mxu0
    %3105 = vmatprep.mubr.f32.mxu0 0.0
    %3106 = vmatmul.mubr.f32.gmra.mrb[0].mxu0 %v2932
    %v3107 = vpop.f32.mrb[0].mxu0
    %v3108 = vadd.f32 0.0, %v3107
    %v3109 = vpop.f32.mrb[0].mxu0
    %3110 = vmatprep.mubr.f32.mxu0 0.0
    %3111 = vmatmul.mubr.f32.gmra.mrb[0].mxu0 %v2935
    %v3112 = vpop.f32.mrb[0].mxu0
    %v3113 = vadd.f32 0.0, %v3112
    %v3114 = vpop.f32.mrb[0].mxu0
    %3115 = vdwg.mxu0
    %v3116 = vadd.f32 %v1876, %v3098
    %v3117 = vadd.f32 %v1881, %v3103
    %v3118 = vadd.f32 %v1886, %v3108
    %v3119 = vadd.f32 %v1891, %v3113
    %s3120 = scalar_lea.vmem %s12, 32
    %v3121 = vld [vmem:[%s3120] sm:$0xff]
    %v3122 = vld [vmem:[%s3120 + $0x8] sm:$0xff]
    %v3123 = vld [vmem:[%s3120 + $0x10] sm:$0xff]
    %v3124 = vld [vmem:[%s3120 + $0x18] sm:$0xff]
    %3125 = vmatprep.subr.mxu0 0.0
    %3126 = vmatpush1.msra.mxu0 %v3121
    %3127 = vmatprep.subr.mxu0 0.0
    %3128 = vmatpush1.msra.mxu0 %v3122
    %3129 = vmatprep.subr.mxu0 0.0
    %3130 = vmatpush1.msra.mxu0 %v3123
    %3131 = vmatprep.subr.mxu0 0.0
    %3132 = vmatpush1.msra.mxu0 %v3124
    %3133 = vmatprep.subr.mxu0 0.0
    %3134 = vmatpush1.msra.mxu0 0.0
    %3135 = vmatprep.subr.mxu0 0.0
    %3136 = vmatpush1.msra.mxu0 0.0
    %3137 = vmatprep.subr.mxu0 0.0
    %3138 = vmatpush1.msra.mxu0 0.0
    %3139 = vmatprep.subr.mxu0 0.0
    %3140 = vmatpush1.msra.mxu0 0.0
    %3141 = vmatprep.subr.mxu0 0.0
    %3142 = vmatpush1.msra.mxu0 0.0
    %3143 = vmatprep.subr.mxu0 0.0
    %3144 = vmatpush1.msra.mxu0 0.0
    %3145 = vmatprep.subr.mxu0 0.0
    %3146 = vmatpush1.msra.mxu0 0.0
    %3147 = vmatprep.subr.mxu0 0.0
    %3148 = vmatpush1.msra.mxu0 0.0
    %3149 = vmatprep.subr.mxu0 0.0
    %3150 = vmatpush1.msra.mxu0 0.0
    %3151 = vmatprep.subr.mxu0 0.0
    %3152 = vmatpush1.msra.mxu0 0.0
    %3153 = vmatprep.subr.mxu0 0.0
    %3154 = vmatpush1.msra.mxu0 0.0
    %3155 = vmatprep.subr.mxu0 0.0
    %3156 = vmatpush1.msra.mxu0 0.0
    %3157 = vmatprep.subr.mxu0 0.0
    %3158 = vmatpush1.msra.mxu0 0.0
    %3159 = vmatprep.subr.mxu0 0.0
    %3160 = vmatpush1.msra.mxu0 0.0
    %3161 = vmatprep.subr.mxu0 0.0
    %3162 = vmatpush1.msra.mxu0 0.0
    %3163 = vmatprep.subr.mxu0 0.0
    %3164 = vmatpush1.msra.mxu0 0.0
    %3165 = vmatprep.subr.mxu0 0.0
    %3166 = vmatpush1.msra.mxu0 0.0
    %3167 = vmatprep.subr.mxu0 0.0
    %3168 = vmatpush1.msra.mxu0 0.0
    %3169 = vmatprep.subr.mxu0 0.0
    %3170 = vmatpush1.msra.mxu0 0.0
    %3171 = vmatprep.subr.mxu0 0.0
    %3172 = vmatpush1.msra.mxu0 0.0
    %3173 = vmatprep.subr.mxu0 0.0
    %3174 = vmatpush1.msra.mxu0 0.0
    %3175 = vmatprep.subr.mxu0 0.0
    %3176 = vmatpush1.msra.mxu0 0.0
    %3177 = vmatprep.subr.mxu0 0.0
    %3178 = vmatpush1.msra.mxu0 0.0
    %3179 = vmatprep.subr.mxu0 0.0
    %3180 = vmatpush1.msra.mxu0 0.0
    %3181 = vmatprep.subr.mxu0 0.0
    %3182 = vmatpush1.msra.mxu0 0.0
    %3183 = vmatprep.subr.mxu0 0.0
    %3184 = vmatpush1.msra.mxu0 0.0
    %3185 = vmatprep.subr.mxu0 0.0
    %3186 = vmatpush1.msra.mxu0 0.0
    %3187 = vmatprep.subr.mxu0 0.0
    %3188 = vmatpush1.msra.mxu0 0.0
    %3189 = vmatprep.mubr.f32.mxu0 0.0
    %3190 = vmatmul.mubr.f32.gmra.mrb[0].mxu0 %v2926
    %v3191 = vpop.f32.mrb[0].mxu0
    %v3192 = vadd.f32 0.0, %v3191
    %v3193 = vpop.f32.mrb[0].mxu0
    %3194 = vmatprep.mubr.f32.mxu0 0.0
    %3195 = vmatmul.mubr.f32.gmra.mrb[0].mxu0 %v2929
    %v3196 = vpop.f32.mrb[0].mxu0
    %v3197 = vadd.f32 0.0, %v3196
    %v3198 = vpop.f32.mrb[0].mxu0
    %3199 = vmatprep.mubr.f32.mxu0 0.0
    %3200 = vmatmul.mubr.f32.gmra.mrb[0].mxu0 %v2932
    %v3201 = vpop.f32.mrb[0].mxu0
    %v3202 = vadd.f32 0.0, %v3201
    %v3203 = vpop.f32.mrb[0].mxu0
    %3204 = vmatprep.mubr.f32.mxu0 0.0
    %3205 = vmatmul.mubr.f32.gmra.mrb[0].mxu0 %v2935
    %v3206 = vpop.f32.mrb[0].mxu0
    %v3207 = vadd.f32 0.0, %v3206
    %v3208 = vpop.f32.mrb[0].mxu0
    %3209 = vdwg.mxu0
    %3210 = vmatprep.subr.mxu0 0.0
    %3211 = vmatpush1.msra.mxu0 %v3192
    %3212 = vmatprep.subr.mxu0 0.0
    %3213 = vmatpush1.msra.mxu0 %v3197
    %3214 = vmatprep.subr.mxu0 0.0
    %3215 = vmatpush1.msra.mxu0 0.0
    %3216 = vmatprep.subr.mxu0 0.0
    %3217 = vmatpush1.msra.mxu0 0.0
    %3218 = vmatprep.subr.mxu0 0.0
    %3219 = vmatpush1.msra.mxu0 0.0
    %3220 = vmatprep.subr.mxu0 0.0
    %3221 = vmatpush1.msra.mxu0 0.0
    %3222 = vmatprep.subr.mxu0 0.0
    %3223 = vmatpush1.msra.mxu0 0.0
    %3224 = vmatprep.subr.mxu0 0.0
    %3225 = vmatpush1.msra.mxu0 0.0
    %3226 = vmatprep.subr.mxu0 0.0
    %3227 = vmatpush1.msra.mxu0 0.0
    %3228 = vmatprep.subr.mxu0 0.0
    %3229 = vmatpush1.msra.mxu0 0.0
    %3230 = vmatprep.subr.mxu0 0.0
    %3231 = vmatpush1.msra.mxu0 0.0
    %3232 = vmatprep.subr.mxu0 0.0
    %3233 = vmatpush1.msra.mxu0 0.0
    %3234 = vmatprep.subr.mxu0 0.0
    %3235 = vmatpush1.msra.mxu0 0.0
    %3236 = vmatprep.subr.mxu0 0.0
    %3237 = vmatpush1.msra.mxu0 0.0
    %3238 = vmatprep.subr.mxu0 0.0
    %3239 = vmatpush1.msra.mxu0 0.0
    %3240 = vmatprep.subr.mxu0 0.0
    %3241 = vmatpush1.msra.mxu0 0.0
    %3242 = vmatprep.subr.mxu0 0.0
    %3243 = vmatpush1.msra.mxu0 0.0
    %3244 = vmatprep.subr.mxu0 0.0
    %3245 = vmatpush1.msra.mxu0 0.0
    %3246 = vmatprep.subr.mxu0 0.0
    %3247 = vmatpush1.msra.mxu0 0.0
    %3248 = vmatprep.subr.mxu0 0.0
    %3249 = vmatpush1.msra.mxu0 0.0
    %3250 = vmatprep.subr.mxu0 0.0
    %3251 = vmatpush1.msra.mxu0 0.0
    %3252 = vmatprep.subr.mxu0 0.0
    %3253 = vmatpush1.msra.mxu0 0.0
    %3254 = vmatprep.subr.mxu0 0.0
    %3255 = vmatpush1.msra.mxu0 0.0
    %3256 = vmatprep.subr.mxu0 0.0
    %3257 = vmatpush1.msra.mxu0 0.0
    %3258 = vmatprep.subr.mxu0 0.0
    %3259 = vmatpush1.msra.mxu0 0.0
    %3260 = vmatprep.subr.mxu0 0.0
    %3261 = vmatpush1.msra.mxu0 0.0
    %3262 = vmatprep.subr.mxu0 0.0
    %3263 = vmatpush1.msra.mxu0 0.0
    %3264 = vmatprep.subr.mxu0 0.0
    %3265 = vmatpush1.msra.mxu0 0.0
    %3266 = vmatprep.subr.mxu0 0.0
    %3267 = vmatpush1.msra.mxu0 0.0
    %3268 = vmatprep.subr.mxu0 0.0
    %3269 = vmatpush1.msra.mxu0 0.0
    %3270 = vmatprep.subr.mxu0 0.0
    %3271 = vmatpush1.msra.mxu0 0.0
    %3272 = vmatprep.subr.mxu0 0.0
    %3273 = vmatpush1.msra.mxu0 0.0
    %3274 = vmatprep.mubr.f32.mxu0 0.0
    %3275 = vmatmul.mubr.f32.gmra.mrb[0].mxu0 %v1985
    %v3276 = vpop.f32.mrb[0].mxu0
    %v3277 = vadd.f32 0.0, %v3276
    %v3278 = vpop.f32.mrb[0].mxu0
    %3279 = vmatprep.mubr.f32.mxu0 0.0
    %3280 = vmatmul.mubr.f32.gmra.mrb[0].mxu0 %v1988
    %v3281 = vpop.f32.mrb[0].mxu0
    %v3282 = vadd.f32 0.0, %v3281
    %v3283 = vpop.f32.mrb[0].mxu0
    %3284 = vdwg.mxu0
    %3285 = vmatprep.subr.mxu0 0.0
    %3286 = vmatpush1.msra.mxu0 %v3202
    %3287 = vmatprep.subr.mxu0 0.0
    %3288 = vmatpush1.msra.mxu0 %v3207
    %3289 = vmatprep.subr.mxu0 0.0
    %3290 = vmatpush1.msra.mxu0 0.0
    %3291 = vmatprep.subr.mxu0 0.0
    %3292 = vmatpush1.msra.mxu0 0.0
    %3293 = vmatprep.subr.mxu0 0.0
    %3294 = vmatpush1.msra.mxu0 0.0
    %3295 = vmatprep.subr.mxu0 0.0
    %3296 = vmatpush1.msra.mxu0 0.0
    %3297 = vmatprep.subr.mxu0 0.0
    %3298 = vmatpush1.msra.mxu0 0.0
    %3299 = vmatprep.subr.mxu0 0.0
    %3300 = vmatpush1.msra.mxu0 0.0
    %3301 = vmatprep.subr.mxu0 0.0
    %3302 = vmatpush1.msra.mxu0 0.0
    %3303 = vmatprep.subr.mxu0 0.0
    %3304 = vmatpush1.msra.mxu0 0.0
    %3305 = vmatprep.subr.mxu0 0.0
    %3306 = vmatpush1.msra.mxu0 0.0
    %3307 = vmatprep.subr.mxu0 0.0
    %3308 = vmatpush1.msra.mxu0 0.0
    %3309 = vmatprep.subr.mxu0 0.0
    %3310 = vmatpush1.msra.mxu0 0.0
    %3311 = vmatprep.subr.mxu0 0.0
    %3312 = vmatpush1.msra.mxu0 0.0
    %3313 = vmatprep.subr.mxu0 0.0
    %3314 = vmatpush1.msra.mxu0 0.0
    %3315 = vmatprep.subr.mxu0 0.0
    %3316 = vmatpush1.msra.mxu0 0.0
    %3317 = vmatprep.subr.mxu0 0.0
    %3318 = vmatpush1.msra.mxu0 0.0
    %3319 = vmatprep.subr.mxu0 0.0
    %3320 = vmatpush1.msra.mxu0 0.0
    %3321 = vmatprep.subr.mxu0 0.0
    %3322 = vmatpush1.msra.mxu0 0.0
    %3323 = vmatprep.subr.mxu0 0.0
    %3324 = vmatpush1.msra.mxu0 0.0
    %3325 = vmatprep.subr.mxu0 0.0
    %3326 = vmatpush1.msra.mxu0 0.0
    %3327 = vmatprep.subr.mxu0 0.0
    %3328 = vmatpush1.msra.mxu0 0.0
    %3329 = vmatprep.subr.mxu0 0.0
    %3330 = vmatpush1.msra.mxu0 0.0
    %3331 = vmatprep.subr.mxu0 0.0
    %3332 = vmatpush1.msra.mxu0 0.0
    %3333 = vmatprep.subr.mxu0 0.0
    %3334 = vmatpush1.msra.mxu0 0.0
    %3335 = vmatprep.subr.mxu0 0.0
    %3336 = vmatpush1.msra.mxu0 0.0
    %3337 = vmatprep.subr.mxu0 0.0
    %3338 = vmatpush1.msra.mxu0 0.0
    %3339 = vmatprep.subr.mxu0 0.0
    %3340 = vmatpush1.msra.mxu0 0.0
    %3341 = vmatprep.subr.mxu0 0.0
    %3342 = vmatpush1.msra.mxu0 0.0
    %3343 = vmatprep.subr.mxu0 0.0
    %3344 = vmatpush1.msra.mxu0 0.0
    %3345 = vmatprep.subr.mxu0 0.0
    %3346 = vmatpush1.msra.mxu0 0.0
    %3347 = vmatprep.subr.mxu0 0.0
    %3348 = vmatpush1.msra.mxu0 0.0
    %3349 = vmatprep.mubr.f32.mxu0 0.0
    %3350 = vmatmul.mubr.f32.gmra.mrb[0].mxu0 %v2066
    %v3351 = vpop.f32.mrb[0].mxu0
    %v3352 = vadd.f32 0.0, %v3351
    %v3353 = vpop.f32.mrb[0].mxu0
    %3354 = vmatprep.mubr.f32.mxu0 0.0
    %3355 = vmatmul.mubr.f32.gmra.mrb[0].mxu0 %v2069
    %v3356 = vpop.f32.mrb[0].mxu0
    %v3357 = vadd.f32 0.0, %v3356
    %v3358 = vpop.f32.mrb[0].mxu0
    %3359 = vdwg.mxu0
    %v3360 = vtanh.pop %v3277
    %v3361 = vtanh.pop %v3282
    %v3362 = vtanh.pop %v3352
    %v3363 = vtanh.pop %v3357
    %3364 = vmatprep.subr.mxu0 0.0
    %3365 = vmatpush1.msra.mxu0 %v3360
    %3366 = vmatprep.subr.mxu0 0.0
    %3367 = vmatpush1.msra.mxu0 %v3361
    %3368 = vmatprep.subr.mxu0 0.0
    %3369 = vmatpush1.msra.mxu0 0.0
    %3370 = vmatprep.subr.mxu0 0.0
    %3371 = vmatpush1.msra.mxu0 0.0
    %3372 = vmatprep.subr.mxu0 0.0
    %3373 = vmatpush1.msra.mxu0 0.0
    %3374 = vmatprep.subr.mxu0 0.0
    %3375 = vmatpush1.msra.mxu0 0.0
    %3376 = vmatprep.subr.mxu0 0.0
    %3377 = vmatpush1.msra.mxu0 0.0
    %3378 = vmatprep.subr.mxu0 0.0
    %3379 = vmatpush1.msra.mxu0 0.0
    %3380 = vmatprep.subr.mxu0 0.0
    %3381 = vmatpush1.msra.mxu0 0.0
    %3382 = vmatprep.subr.mxu0 0.0
    %3383 = vmatpush1.msra.mxu0 0.0
    %3384 = vmatprep.subr.mxu0 0.0
    %3385 = vmatpush1.msra.mxu0 0.0
    %3386 = vmatprep.subr.mxu0 0.0
    %3387 = vmatpush1.msra.mxu0 0.0
    %3388 = vmatprep.subr.mxu0 0.0
    %3389 = vmatpush1.msra.mxu0 0.0
    %3390 = vmatprep.subr.mxu0 0.0
    %3391 = vmatpush1.msra.mxu0 0.0
    %3392 = vmatprep.subr.mxu0 0.0
    %3393 = vmatpush1.msra.mxu0 0.0
    %3394 = vmatprep.subr.mxu0 0.0
    %3395 = vmatpush1.msra.mxu0 0.0
    %3396 = vmatprep.subr.mxu0 0.0
    %3397 = vmatpush1.msra.mxu0 0.0
    %3398 = vmatprep.subr.mxu0 0.0
    %3399 = vmatpush1.msra.mxu0 0.0
    %3400 = vmatprep.subr.mxu0 0.0
    %3401 = vmatpush1.msra.mxu0 0.0
    %3402 = vmatprep.subr.mxu0 0.0
    %3403 = vmatpush1.msra.mxu0 0.0
    %3404 = vmatprep.subr.mxu0 0.0
    %3405 = vmatpush1.msra.mxu0 0.0
    %3406 = vmatprep.subr.mxu0 0.0
    %3407 = vmatpush1.msra.mxu0 0.0
    %3408 = vmatprep.subr.mxu0 0.0
    %3409 = vmatpush1.msra.mxu0 0.0
    %3410 = vmatprep.subr.mxu0 0.0
    %3411 = vmatpush1.msra.mxu0 0.0
    %3412 = vmatprep.subr.mxu0 0.0
    %3413 = vmatpush1.msra.mxu0 0.0
    %3414 = vmatprep.subr.mxu0 0.0
    %3415 = vmatpush1.msra.mxu0 0.0
    %3416 = vmatprep.subr.mxu0 0.0
    %3417 = vmatpush1.msra.mxu0 0.0
    %3418 = vmatprep.subr.mxu0 0.0
    %3419 = vmatpush1.msra.mxu0 0.0
    %3420 = vmatprep.subr.mxu0 0.0
    %3421 = vmatpush1.msra.mxu0 0.0
    %3422 = vmatprep.subr.mxu0 0.0
    %3423 = vmatpush1.msra.mxu0 0.0
    %3424 = vmatprep.subr.mxu0 0.0
    %3425 = vmatpush1.msra.mxu0 0.0
    %3426 = vmatprep.subr.mxu0 0.0
    %3427 = vmatpush1.msra.mxu0 0.0
    %3428 = vmatprep.mubr.f32.mxu0 0.0
    %3429 = vmatmul.mubr.f32.gmra.mrb[0].mxu0 %v2351
    %v3430 = vpop.f32.mrb[0].mxu0
    %v3431 = vadd.f32 0.0, %v3430
    %v3432 = vpop.f32.mrb[0].mxu0
    %3433 = vmatprep.mubr.f32.mxu0 0.0
    %3434 = vmatmul.mubr.f32.gmra.mrb[0].mxu0 %v2353
    %v3435 = vpop.f32.mrb[0].mxu0
    %v3436 = vadd.f32 0.0, %v3435
    %v3437 = vpop.f32.mrb[0].mxu0
    %3438 = vdwg.mxu0
    %3439 = vmatprep.subr.mxu0 0.0
    %3440 = vmatpush1.msra.mxu0 %v3362
    %3441 = vmatprep.subr.mxu0 0.0
    %3442 = vmatpush1.msra.mxu0 %v3363
    %3443 = vmatprep.subr.mxu0 0.0
    %3444 = vmatpush1.msra.mxu0 0.0
    %3445 = vmatprep.subr.mxu0 0.0
    %3446 = vmatpush1.msra.mxu0 0.0
    %3447 = vmatprep.subr.mxu0 0.0
    %3448 = vmatpush1.msra.mxu0 0.0
    %3449 = vmatprep.subr.mxu0 0.0
    %3450 = vmatpush1.msra.mxu0 0.0
    %3451 = vmatprep.subr.mxu0 0.0
    %3452 = vmatpush1.msra.mxu0 0.0
    %3453 = vmatprep.subr.mxu0 0.0
    %3454 = vmatpush1.msra.mxu0 0.0
    %3455 = vmatprep.subr.mxu0 0.0
    %3456 = vmatpush1.msra.mxu0 0.0
    %3457 = vmatprep.subr.mxu0 0.0
    %3458 = vmatpush1.msra.mxu0 0.0
    %3459 = vmatprep.subr.mxu0 0.0
    %3460 = vmatpush1.msra.mxu0 0.0
    %3461 = vmatprep.subr.mxu0 0.0
    %3462 = vmatpush1.msra.mxu0 0.0
    %3463 = vmatprep.subr.mxu0 0.0
    %3464 = vmatpush1.msra.mxu0 0.0
    %3465 = vmatprep.subr.mxu0 0.0
    %3466 = vmatpush1.msra.mxu0 0.0
    %3467 = vmatprep.subr.mxu0 0.0
    %3468 = vmatpush1.msra.mxu0 0.0
    %3469 = vmatprep.subr.mxu0 0.0
    %3470 = vmatpush1.msra.mxu0 0.0
    %3471 = vmatprep.subr.mxu0 0.0
    %3472 = vmatpush1.msra.mxu0 0.0
    %3473 = vmatprep.subr.mxu0 0.0
    %3474 = vmatpush1.msra.mxu0 0.0
    %3475 = vmatprep.subr.mxu0 0.0
    %3476 = vmatpush1.msra.mxu0 0.0
    %3477 = vmatprep.subr.mxu0 0.0
    %3478 = vmatpush1.msra.mxu0 0.0
    %3479 = vmatprep.subr.mxu0 0.0
    %3480 = vmatpush1.msra.mxu0 0.0
    %3481 = vmatprep.subr.mxu0 0.0
    %3482 = vmatpush1.msra.mxu0 0.0
    %3483 = vmatprep.subr.mxu0 0.0
    %3484 = vmatpush1.msra.mxu0 0.0
    %3485 = vmatprep.subr.mxu0 0.0
    %3486 = vmatpush1.msra.mxu0 0.0
    %3487 = vmatprep.subr.mxu0 0.0
    %3488 = vmatpush1.msra.mxu0 0.0
    %3489 = vmatprep.subr.mxu0 0.0
    %3490 = vmatpush1.msra.mxu0 0.0
    %3491 = vmatprep.subr.mxu0 0.0
    %3492 = vmatpush1.msra.mxu0 0.0
    %3493 = vmatprep.subr.mxu0 0.0
    %3494 = vmatpush1.msra.mxu0 0.0
    %3495 = vmatprep.subr.mxu0 0.0
    %3496 = vmatpush1.msra.mxu0 0.0
    %3497 = vmatprep.subr.mxu0 0.0
    %3498 = vmatpush1.msra.mxu0 0.0
    %3499 = vmatprep.subr.mxu0 0.0
    %3500 = vmatpush1.msra.mxu0 0.0
    %3501 = vmatprep.subr.mxu0 0.0
    %3502 = vmatpush1.msra.mxu0 0.0
    %3503 = vmatprep.mubr.f32.mxu0 0.0
    %3504 = vmatmul.mubr.f32.gmra.mrb[0].mxu0 %v2620
    %v3505 = vpop.f32.mrb[0].mxu0
    %v3506 = vadd.f32 0.0, %v3505
    %v3507 = vpop.f32.mrb[0].mxu0
    %3508 = vmatprep.mubr.f32.mxu0 0.0
    %3509 = vmatmul.mubr.f32.gmra.mrb[0].mxu0 %v2622
    %v3510 = vpop.f32.mrb[0].mxu0
    %v3511 = vadd.f32 0.0, %v3510
    %v3512 = vpop.f32.mrb[0].mxu0
    %3513 = vdwg.mxu0
    %v3514 = vtanh.pop %v3431
    %v3515 = vtanh.pop %v3436
    %v3516 = vtanh.pop %v3506
    %v3517 = vtanh.pop %v3511
    %s3518 = scalar_lea.vmem %s13, 32
    %v3519 = vld [vmem:[%s3518] sm:$0xff]
    %v3520 = vld [vmem:[%s3518 + $0x8] sm:$0xff]
    %v3521 = vld [vmem:[%s3518 + $0x10] sm:$0xff]
    %v3522 = vld [vmem:[%s3518 + $0x18] sm:$0xff]
    %s3523 = scalar_lea.vmem %s14, 32
    %v3524 = vld [vmem:[%s3523] sm:$0xff]
    %v3525 = vld [vmem:[%s3523 + $0x8] sm:$0xff]
    %v3526 = vld [vmem:[%s3523 + $0x10] sm:$0xff]
    %v3527 = vld [vmem:[%s3523 + $0x18] sm:$0xff]
    %v3529 = vsel %vm1497, %v3514, 0
    %v3532 = vsel %vm1497, %v3515, 0
    %v3535 = vsel %vm1497, %v3516, 0
    %v3538 = vsel %vm1497, %v3517, 0
    %3540 = vmatprep.subr.mxu0 0.0
    %3541 = vmatpush1.msra.mxu0 %v3524
    %3542 = vmatprep.subr.mxu0 0.0
    %3543 = vmatpush1.msra.mxu0 %v3525
    %3544 = vmatprep.subr.mxu0 0.0
    %3545 = vmatpush1.msra.mxu0 %v3526
    %3546 = vmatprep.subr.mxu0 0.0
    %3547 = vmatpush1.msra.mxu0 %v3527
    %3548 = vmatprep.subr.mxu0 0.0
    %3549 = vmatpush1.msra.mxu0 0.0
    %3550 = vmatprep.subr.mxu0 0.0
    %3551 = vmatpush1.msra.mxu0 0.0
    %3552 = vmatprep.subr.mxu0 0.0
    %3553 = vmatpush1.msra.mxu0 0.0
    %3554 = vmatprep.subr.mxu0 0.0
    %3555 = vmatpush1.msra.mxu0 0.0
    %3556 = vmatprep.subr.mxu0 0.0
    %3557 = vmatpush1.msra.mxu0 0.0
    %3558 = vmatprep.subr.mxu0 0.0
    %3559 = vmatpush1.msra.mxu0 0.0
    %3560 = vmatprep.subr.mxu0 0.0
    %3561 = vmatpush1.msra.mxu0 0.0
    %3562 = vmatprep.subr.mxu0 0.0
    %3563 = vmatpush1.msra.mxu0 0.0
    %3564 = vmatprep.subr.mxu0 0.0
    %3565 = vmatpush1.msra.mxu0 0.0
    %3566 = vmatprep.subr.mxu0 0.0
    %3567 = vmatpush1.msra.mxu0 0.0
    %3568 = vmatprep.subr.mxu0 0.0
    %3569 = vmatpush1.msra.mxu0 0.0
    %3570 = vmatprep.subr.mxu0 0.0
    %3571 = vmatpush1.msra.mxu0 0.0
    %3572 = vmatprep.subr.mxu0 0.0
    %3573 = vmatpush1.msra.mxu0 0.0
    %3574 = vmatprep.subr.mxu0 0.0
    %3575 = vmatpush1.msra.mxu0 0.0
    %3576 = vmatprep.subr.mxu0 0.0
    %3577 = vmatpush1.msra.mxu0 0.0
    %3578 = vmatprep.subr.mxu0 0.0
    %3579 = vmatpush1.msra.mxu0 0.0
    %3580 = vmatprep.subr.mxu0 0.0
    %3581 = vmatpush1.msra.mxu0 0.0
    %3582 = vmatprep.subr.mxu0 0.0
    %3583 = vmatpush1.msra.mxu0 0.0
    %3584 = vmatprep.subr.mxu0 0.0
    %3585 = vmatpush1.msra.mxu0 0.0
    %3586 = vmatprep.subr.mxu0 0.0
    %3587 = vmatpush1.msra.mxu0 0.0
    %3588 = vmatprep.subr.mxu0 0.0
    %3589 = vmatpush1.msra.mxu0 0.0
    %3590 = vmatprep.subr.mxu0 0.0
    %3591 = vmatpush1.msra.mxu0 0.0
    %3592 = vmatprep.subr.mxu0 0.0
    %3593 = vmatpush1.msra.mxu0 0.0
    %3594 = vmatprep.subr.mxu0 0.0
    %3595 = vmatpush1.msra.mxu0 0.0
    %3596 = vmatprep.subr.mxu0 0.0
    %3597 = vmatpush1.msra.mxu0 0.0
    %3598 = vmatprep.subr.mxu0 0.0
    %3599 = vmatpush1.msra.mxu0 0.0
    %3600 = vmatprep.subr.mxu0 0.0
    %3601 = vmatpush1.msra.mxu0 0.0
    %3602 = vmatprep.subr.mxu0 0.0
    %3603 = vmatpush1.msra.mxu0 0.0
    %3604 = vmatprep.mubr.f32.mxu0 0.0
    %3605 = vmatmul.mubr.f32.gmra.mrb[0].mxu0 %v3529
    %v3606 = vpop.f32.mrb[0].mxu0
    %v3607 = vadd.f32 0.0, %v3606
    %v3608 = vpop.f32.mrb[0].mxu0
    %3609 = vmatprep.mubr.f32.mxu0 0.0
    %3610 = vmatmul.mubr.f32.gmra.mrb[0].mxu0 %v3532
    %v3611 = vpop.f32.mrb[0].mxu0
    %v3612 = vadd.f32 0.0, %v3611
    %v3613 = vpop.f32.mrb[0].mxu0
    %3614 = vmatprep.mubr.f32.mxu0 0.0
    %3615 = vmatmul.mubr.f32.gmra.mrb[0].mxu0 %v3535
    %v3616 = vpop.f32.mrb[0].mxu0
    %v3617 = vadd.f32 0.0, %v3616
    %v3618 = vpop.f32.mrb[0].mxu0
    %3619 = vmatprep.mubr.f32.mxu0 0.0
    %3620 = vmatmul.mubr.f32.gmra.mrb[0].mxu0 %v3538
    %v3621 = vpop.f32.mrb[0].mxu0
    %v3622 = vadd.f32 0.0, %v3621
    %v3623 = vpop.f32.mrb[0].mxu0
    %3624 = vdwg.mxu0
    %v3626 = vsel %vm1497, %v3360, 0
    %v3629 = vsel %vm1497, %v3361, 0
    %v3632 = vsel %vm1497, %v3362, 0
    %v3635 = vsel %vm1497, %v3363, 0
    %3637 = vmatprep.subr.mxu0 0.0
    %3638 = vmatpush1.msra.mxu0 %v3519
    %3639 = vmatprep.subr.mxu0 0.0
    %3640 = vmatpush1.msra.mxu0 %v3520
    %3641 = vmatprep.subr.mxu0 0.0
    %3642 = vmatpush1.msra.mxu0 %v3521
    %3643 = vmatprep.subr.mxu0 0.0
    %3644 = vmatpush1.msra.mxu0 %v3522
    %3645 = vmatprep.subr.mxu0 0.0
    %3646 = vmatpush1.msra.mxu0 0.0
    %3647 = vmatprep.subr.mxu0 0.0
    %3648 = vmatpush1.msra.mxu0 0.0
    %3649 = vmatprep.subr.mxu0 0.0
    %3650 = vmatpush1.msra.mxu0 0.0
    %3651 = vmatprep.subr.mxu0 0.0
    %3652 = vmatpush1.msra.mxu0 0.0
    %3653 = vmatprep.subr.mxu0 0.0
    %3654 = vmatpush1.msra.mxu0 0.0
    %3655 = vmatprep.subr.mxu0 0.0
    %3656 = vmatpush1.msra.mxu0 0.0
    %3657 = vmatprep.subr.mxu0 0.0
    %3658 = vmatpush1.msra.mxu0 0.0
    %3659 = vmatprep.subr.mxu0 0.0
    %3660 = vmatpush1.msra.mxu0 0.0
    %3661 = vmatprep.subr.mxu0 0.0
    %3662 = vmatpush1.msra.mxu0 0.0
    %3663 = vmatprep.subr.mxu0 0.0
    %3664 = vmatpush1.msra.mxu0 0.0
    %3665 = vmatprep.subr.mxu0 0.0
    %3666 = vmatpush1.msra.mxu0 0.0
    %3667 = vmatprep.subr.mxu0 0.0
    %3668 = vmatpush1.msra.mxu0 0.0
    %3669 = vmatprep.subr.mxu0 0.0
    %3670 = vmatpush1.msra.mxu0 0.0
    %3671 = vmatprep.subr.mxu0 0.0
    %3672 = vmatpush1.msra.mxu0 0.0
    %3673 = vmatprep.subr.mxu0 0.0
    %3674 = vmatpush1.msra.mxu0 0.0
    %3675 = vmatprep.subr.mxu0 0.0
    %3676 = vmatpush1.msra.mxu0 0.0
    %3677 = vmatprep.subr.mxu0 0.0
    %3678 = vmatpush1.msra.mxu0 0.0
    %3679 = vmatprep.subr.mxu0 0.0
    %3680 = vmatpush1.msra.mxu0 0.0
    %3681 = vmatprep.subr.mxu0 0.0
    %3682 = vmatpush1.msra.mxu0 0.0
    %3683 = vmatprep.subr.mxu0 0.0
    %3684 = vmatpush1.msra.mxu0 0.0
    %3685 = vmatprep.subr.mxu0 0.0
    %3686 = vmatpush1.msra.mxu0 0.0
    %3687 = vmatprep.subr.mxu0 0.0
    %3688 = vmatpush1.msra.mxu0 0.0
    %3689 = vmatprep.subr.mxu0 0.0
    %3690 = vmatpush1.msra.mxu0 0.0
    %3691 = vmatprep.subr.mxu0 0.0
    %3692 = vmatpush1.msra.mxu0 0.0
    %3693 = vmatprep.subr.mxu0 0.0
    %3694 = vmatpush1.msra.mxu0 0.0
    %3695 = vmatprep.subr.mxu0 0.0
    %3696 = vmatpush1.msra.mxu0 0.0
    %3697 = vmatprep.subr.mxu0 0.0
    %3698 = vmatpush1.msra.mxu0 0.0
    %3699 = vmatprep.subr.mxu0 0.0
    %3700 = vmatpush1.msra.mxu0 0.0
    %3701 = vmatprep.mubr.f32.mxu0 0.0
    %3702 = vmatmul.mubr.f32.gmra.mrb[0].mxu0 %v3626
    %v3703 = vpop.f32.mrb[0].mxu0
    %v3704 = vadd.f32 %v3607, %v3703
    %v3705 = vpop.f32.mrb[0].mxu0
    %3706 = vmatprep.mubr.f32.mxu0 0.0
    %3707 = vmatmul.mubr.f32.gmra.mrb[0].mxu0 %v3629
    %v3708 = vpop.f32.mrb[0].mxu0
    %v3709 = vadd.f32 %v3612, %v3708
    %v3710 = vpop.f32.mrb[0].mxu0
    %3711 = vmatprep.mubr.f32.mxu0 0.0
    %3712 = vmatmul.mubr.f32.gmra.mrb[0].mxu0 %v3632
    %v3713 = vpop.f32.mrb[0].mxu0
    %v3714 = vadd.f32 %v3617, %v3713
    %v3715 = vpop.f32.mrb[0].mxu0
    %3716 = vmatprep.mubr.f32.mxu0 0.0
    %3717 = vmatmul.mubr.f32.gmra.mrb[0].mxu0 %v3635
    %v3718 = vpop.f32.mrb[0].mxu0
    %v3719 = vadd.f32 %v3622, %v3718
    %v3720 = vpop.f32.mrb[0].mxu0
    %3721 = vdwg.mxu0
    %s3722 = scalar_lea.vmem %s15, 1
    %v3723 = vld [vmem:[%s3722] sm:$0x1]
    %v3725 = vlaneseq
    %v3726 = vshrl.u32 %v3725, 7
    %v3727 = vsub.s32 0, %v3726
    %v3728 = vrot.slane %v3723, %v3727
    %v3730 = vadd.f32 %v3704, %v3728
    %v3731 = vadd.f32 %v3709, %v3728
    %v3732 = vadd.f32 %v3714, %v3728
    %v3733 = vadd.f32 %v3719, %v3728
    %v3734 = vtanh.pop %v3730
    %v3735 = vtanh.pop %v3731
    %v3736 = vtanh.pop %v3732
    %v3737 = vtanh.pop %v3733
    %s3738 = scalar_lea.vmem %s16, 64
    %v3739 = vld [vmem:[%s3738] sm:$0xff]
    %v3740 = vld [vmem:[%s3738 + $0x8] sm:$0xff]
    %v3741 = vld [vmem:[%s3738 + $0x10] sm:$0xff]
    %v3742 = vld [vmem:[%s3738 + $0x18] sm:$0xff]
    %v3744 = vsel %vm1497, %v3734, 0
    %v3747 = vsel %vm1497, %v3735, 0
    %v3750 = vsel %vm1497, %v3736, 0
    %v3753 = vsel %vm1497, %v3737, 0
    %3755 = vmatprep.subr.mxu0 0.0
    %3756 = vmatpush1.msra.mxu0 %v3739
    %3757 = vmatprep.subr.mxu0 0.0
    %3758 = vmatpush1.msra.mxu0 %v3740
    %3759 = vmatprep.subr.mxu0 0.0
    %3760 = vmatpush1.msra.mxu0 %v3741
    %3761 = vmatprep.subr.mxu0 0.0
    %3762 = vmatpush1.msra.mxu0 %v3742
    %3763 = vmatprep.subr.mxu0 0.0
    %3764 = vmatpush1.msra.mxu0 0.0
    %3765 = vmatprep.subr.mxu0 0.0
    %3766 = vmatpush1.msra.mxu0 0.0
    %3767 = vmatprep.subr.mxu0 0.0
    %3768 = vmatpush1.msra.mxu0 0.0
    %3769 = vmatprep.subr.mxu0 0.0
    %3770 = vmatpush1.msra.mxu0 0.0
    %3771 = vmatprep.subr.mxu0 0.0
    %3772 = vmatpush1.msra.mxu0 0.0
    %3773 = vmatprep.subr.mxu0 0.0
    %3774 = vmatpush1.msra.mxu0 0.0
    %3775 = vmatprep.subr.mxu0 0.0
    %3776 = vmatpush1.msra.mxu0 0.0
    %3777 = vmatprep.subr.mxu0 0.0
    %3778 = vmatpush1.msra.mxu0 0.0
    %3779 = vmatprep.subr.mxu0 0.0
    %3780 = vmatpush1.msra.mxu0 0.0
    %3781 = vmatprep.subr.mxu0 0.0
    %3782 = vmatpush1.msra.mxu0 0.0
    %3783 = vmatprep.subr.mxu0 0.0
    %3784 = vmatpush1.msra.mxu0 0.0
    %3785 = vmatprep.subr.mxu0 0.0
    %3786 = vmatpush1.msra.mxu0 0.0
    %3787 = vmatprep.subr.mxu0 0.0
    %3788 = vmatpush1.msra.mxu0 0.0
    %3789 = vmatprep.subr.mxu0 0.0
    %3790 = vmatpush1.msra.mxu0 0.0
    %3791 = vmatprep.subr.mxu0 0.0
    %3792 = vmatpush1.msra.mxu0 0.0
    %3793 = vmatprep.subr.mxu0 0.0
    %3794 = vmatpush1.msra.mxu0 0.0
    %3795 = vmatprep.subr.mxu0 0.0
    %3796 = vmatpush1.msra.mxu0 0.0
    %3797 = vmatprep.subr.mxu0 0.0
    %3798 = vmatpush1.msra.mxu0 0.0
    %3799 = vmatprep.subr.mxu0 0.0
    %3800 = vmatpush1.msra.mxu0 0.0
    %3801 = vmatprep.subr.mxu0 0.0
    %3802 = vmatpush1.msra.mxu0 0.0
    %3803 = vmatprep.subr.mxu0 0.0
    %3804 = vmatpush1.msra.mxu0 0.0
    %3805 = vmatprep.subr.mxu0 0.0
    %3806 = vmatpush1.msra.mxu0 0.0
    %3807 = vmatprep.subr.mxu0 0.0
    %3808 = vmatpush1.msra.mxu0 0.0
    %3809 = vmatprep.subr.mxu0 0.0
    %3810 = vmatpush1.msra.mxu0 0.0
    %3811 = vmatprep.subr.mxu0 0.0
    %3812 = vmatpush1.msra.mxu0 0.0
    %3813 = vmatprep.subr.mxu0 0.0
    %3814 = vmatpush1.msra.mxu0 0.0
    %3815 = vmatprep.subr.mxu0 0.0
    %3816 = vmatpush1.msra.mxu0 0.0
    %3817 = vmatprep.subr.mxu0 0.0
    %3818 = vmatpush1.msra.mxu0 0.0
    %3819 = vmatprep.mubr.f32.mxu0 0.0
    %3820 = vmatmul.mubr.f32.gmra.mrb[0].mxu0 %v3744
    %v3821 = vpop.f32.mrb[0].mxu0
    %v3822 = vadd.f32 0.0, %v3821
    %v3823 = vpop.f32.mrb[0].mxu0
    %3824 = vmatprep.mubr.f32.mxu0 0.0
    %3825 = vmatmul.mubr.f32.gmra.mrb[0].mxu0 %v3747
    %v3826 = vpop.f32.mrb[0].mxu0
    %v3827 = vadd.f32 0.0, %v3826
    %v3828 = vpop.f32.mrb[0].mxu0
    %3829 = vmatprep.mubr.f32.mxu0 0.0
    %3830 = vmatmul.mubr.f32.gmra.mrb[0].mxu0 %v3750
    %v3831 = vpop.f32.mrb[0].mxu0
    %v3832 = vadd.f32 0.0, %v3831
    %v3833 = vpop.f32.mrb[0].mxu0
    %3834 = vmatprep.mubr.f32.mxu0 0.0
    %3835 = vmatmul.mubr.f32.gmra.mrb[0].mxu0 %v3753
    %v3836 = vpop.f32.mrb[0].mxu0
    %v3837 = vadd.f32 0.0, %v3836
    %v3838 = vpop.f32.mrb[0].mxu0
    %3839 = vdwg.mxu0
    %v3840 = vadd.f32 %v3022, %v3822
    %v3841 = vadd.f32 %v3023, %v3827
    %v3842 = vadd.f32 %v3024, %v3832
    %v3843 = vadd.f32 %v3025, %v3837
    %s3844 = scalar_lea.vmem %s20, 64
    %v3845 = vld [vmem:[%s3844] sm:$0xff]
    %v3846 = vld [vmem:[%s3844 + $0x8] sm:$0xff]
    %v3847 = vld [vmem:[%s3844 + $0x10] sm:$0xff]
    %v3848 = vld [vmem:[%s3844 + $0x18] sm:$0xff]
    %3849 = vmatprep.subr.mxu0 0.0
    %3850 = vmatpush1.msra.mxu0 %v3845
    %3851 = vmatprep.subr.mxu0 0.0
    %3852 = vmatpush1.msra.mxu0 %v3846
    %3853 = vmatprep.subr.mxu0 0.0
    %3854 = vmatpush1.msra.mxu0 %v3847
    %3855 = vmatprep.subr.mxu0 0.0
    %3856 = vmatpush1.msra.mxu0 %v3848
    %3857 = vmatprep.subr.mxu0 0.0
    %3858 = vmatpush1.msra.mxu0 0.0
    %3859 = vmatprep.subr.mxu0 0.0
    %3860 = vmatpush1.msra.mxu0 0.0
    %3861 = vmatprep.subr.mxu0 0.0
    %3862 = vmatpush1.msra.mxu0 0.0
    %3863 = vmatprep.subr.mxu0 0.0
    %3864 = vmatpush1.msra.mxu0 0.0
    %3865 = vmatprep.subr.mxu0 0.0
    %3866 = vmatpush1.msra.mxu0 0.0
    %3867 = vmatprep.subr.mxu0 0.0
    %3868 = vmatpush1.msra.mxu0 0.0
    %3869 = vmatprep.subr.mxu0 0.0
    %3870 = vmatpush1.msra.mxu0 0.0
    %3871 = vmatprep.subr.mxu0 0.0
    %3872 = vmatpush1.msra.mxu0 0.0
    %3873 = vmatprep.subr.mxu0 0.0
    %3874 = vmatpush1.msra.mxu0 0.0
    %3875 = vmatprep.subr.mxu0 0.0
    %3876 = vmatpush1.msra.mxu0 0.0
    %3877 = vmatprep.subr.mxu0 0.0
    %3878 = vmatpush1.msra.mxu0 0.0
    %3879 = vmatprep.subr.mxu0 0.0
    %3880 = vmatpush1.msra.mxu0 0.0
    %3881 = vmatprep.subr.mxu0 0.0
    %3882 = vmatpush1.msra.mxu0 0.0
    %3883 = vmatprep.subr.mxu0 0.0
    %3884 = vmatpush1.msra.mxu0 0.0
    %3885 = vmatprep.subr.mxu0 0.0
    %3886 = vmatpush1.msra.mxu0 0.0
    %3887 = vmatprep.subr.mxu0 0.0
    %3888 = vmatpush1.msra.mxu0 0.0
    %3889 = vmatprep.subr.mxu0 0.0
    %3890 = vmatpush1.msra.mxu0 0.0
    %3891 = vmatprep.subr.mxu0 0.0
    %3892 = vmatpush1.msra.mxu0 0.0
    %3893 = vmatprep.subr.mxu0 0.0
    %3894 = vmatpush1.msra.mxu0 0.0
    %3895 = vmatprep.subr.mxu0 0.0
    %3896 = vmatpush1.msra.mxu0 0.0
    %3897 = vmatprep.subr.mxu0 0.0
    %3898 = vmatpush1.msra.mxu0 0.0
    %3899 = vmatprep.subr.mxu0 0.0
    %3900 = vmatpush1.msra.mxu0 0.0
    %3901 = vmatprep.subr.mxu0 0.0
    %3902 = vmatpush1.msra.mxu0 0.0
    %3903 = vmatprep.subr.mxu0 0.0
    %3904 = vmatpush1.msra.mxu0 0.0
    %3905 = vmatprep.subr.mxu0 0.0
    %3906 = vmatpush1.msra.mxu0 0.0
    %3907 = vmatprep.subr.mxu0 0.0
    %3908 = vmatpush1.msra.mxu0 0.0
    %3909 = vmatprep.subr.mxu0 0.0
    %3910 = vmatpush1.msra.mxu0 0.0
    %3911 = vmatprep.subr.mxu0 0.0
    %3912 = vmatpush1.msra.mxu0 0.0
    %3913 = vmatprep.mubr.f32.mxu0 0.0
    %3914 = vmatmul.mubr.f32.gmra.mrb[0].mxu0 %v3744
    %v3915 = vpop.f32.mrb[0].mxu0
    %v3916 = vadd.f32 0.0, %v3915
    %v3917 = vpop.f32.mrb[0].mxu0
    %3918 = vmatprep.mubr.f32.mxu0 0.0
    %3919 = vmatmul.mubr.f32.gmra.mrb[0].mxu0 %v3747
    %v3920 = vpop.f32.mrb[0].mxu0
    %v3921 = vadd.f32 0.0, %v3920
    %v3922 = vpop.f32.mrb[0].mxu0
    %3923 = vmatprep.mubr.f32.mxu0 0.0
    %3924 = vmatmul.mubr.f32.gmra.mrb[0].mxu0 %v3750
    %v3925 = vpop.f32.mrb[0].mxu0
    %v3926 = vadd.f32 0.0, %v3925
    %v3927 = vpop.f32.mrb[0].mxu0
    %3928 = vmatprep.mubr.f32.mxu0 0.0
    %3929 = vmatmul.mubr.f32.gmra.mrb[0].mxu0 %v3753
    %v3930 = vpop.f32.mrb[0].mxu0
    %v3931 = vadd.f32 0.0, %v3930
    %v3932 = vpop.f32.mrb[0].mxu0
    %3933 = vdwg.mxu0
    %v3934 = vadd.f32 %v3116, %v3916
    %v3935 = vadd.f32 %v3117, %v3921
    %v3936 = vadd.f32 %v3118, %v3926
    %v3937 = vadd.f32 %v3119, %v3931
    %s3938 = scalar_lea.vmem %s12, 64
    %v3939 = vld [vmem:[%s3938] sm:$0xff]
    %v3940 = vld [vmem:[%s3938 + $0x8] sm:$0xff]
    %v3941 = vld [vmem:[%s3938 + $0x10] sm:$0xff]
    %v3942 = vld [vmem:[%s3938 + $0x18] sm:$0xff]
    %3943 = vmatprep.subr.mxu0 0.0
    %3944 = vmatpush1.msra.mxu0 %v3939
    %3945 = vmatprep.subr.mxu0 0.0
    %3946 = vmatpush1.msra.mxu0 %v3940
    %3947 = vmatprep.subr.mxu0 0.0
    %3948 = vmatpush1.msra.mxu0 %v3941
    %3949 = vmatprep.subr.mxu0 0.0
    %3950 = vmatpush1.msra.mxu0 %v3942
    %3951 = vmatprep.subr.mxu0 0.0
    %3952 = vmatpush1.msra.mxu0 0.0
    %3953 = vmatprep.subr.mxu0 0.0
    %3954 = vmatpush1.msra.mxu0 0.0
    %3955 = vmatprep.subr.mxu0 0.0
    %3956 = vmatpush1.msra.mxu0 0.0
    %3957 = vmatprep.subr.mxu0 0.0
    %3958 = vmatpush1.msra.mxu0 0.0
    %3959 = vmatprep.subr.mxu0 0.0
    %3960 = vmatpush1.msra.mxu0 0.0
    %3961 = vmatprep.subr.mxu0 0.0
    %3962 = vmatpush1.msra.mxu0 0.0
    %3963 = vmatprep.subr.mxu0 0.0
    %3964 = vmatpush1.msra.mxu0 0.0
    %3965 = vmatprep.subr.mxu0 0.0
    %3966 = vmatpush1.msra.mxu0 0.0
    %3967 = vmatprep.subr.mxu0 0.0
    %3968 = vmatpush1.msra.mxu0 0.0
    %3969 = vmatprep.subr.mxu0 0.0
    %3970 = vmatpush1.msra.mxu0 0.0
    %3971 = vmatprep.subr.mxu0 0.0
    %3972 = vmatpush1.msra.mxu0 0.0
    %3973 = vmatprep.subr.mxu0 0.0
    %3974 = vmatpush1.msra.mxu0 0.0
    %3975 = vmatprep.subr.mxu0 0.0
    %3976 = vmatpush1.msra.mxu0 0.0
    %3977 = vmatprep.subr.mxu0 0.0
    %3978 = vmatpush1.msra.mxu0 0.0
    %3979 = vmatprep.subr.mxu0 0.0
    %3980 = vmatpush1.msra.mxu0 0.0
    %3981 = vmatprep.subr.mxu0 0.0
    %3982 = vmatpush1.msra.mxu0 0.0
    %3983 = vmatprep.subr.mxu0 0.0
    %3984 = vmatpush1.msra.mxu0 0.0
    %3985 = vmatprep.subr.mxu0 0.0
    %3986 = vmatpush1.msra.mxu0 0.0
    %3987 = vmatprep.subr.mxu0 0.0
    %3988 = vmatpush1.msra.mxu0 0.0
    %3989 = vmatprep.subr.mxu0 0.0
    %3990 = vmatpush1.msra.mxu0 0.0
    %3991 = vmatprep.subr.mxu0 0.0
    %3992 = vmatpush1.msra.mxu0 0.0
    %3993 = vmatprep.subr.mxu0 0.0
    %3994 = vmatpush1.msra.mxu0 0.0
    %3995 = vmatprep.subr.mxu0 0.0
    %3996 = vmatpush1.msra.mxu0 0.0
    %3997 = vmatprep.subr.mxu0 0.0
    %3998 = vmatpush1.msra.mxu0 0.0
    %3999 = vmatprep.subr.mxu0 0.0
    %4000 = vmatpush1.msra.mxu0 0.0
    %4001 = vmatprep.subr.mxu0 0.0
    %4002 = vmatpush1.msra.mxu0 0.0
    %4003 = vmatprep.subr.mxu0 0.0
    %4004 = vmatpush1.msra.mxu0 0.0
    %4005 = vmatprep.subr.mxu0 0.0
    %4006 = vmatpush1.msra.mxu0 0.0
    %4007 = vmatprep.mubr.f32.mxu0 0.0
    %4008 = vmatmul.mubr.f32.gmra.mrb[0].mxu0 %v3744
    %v4009 = vpop.f32.mrb[0].mxu0
    %v4010 = vadd.f32 0.0, %v4009
    %v4011 = vpop.f32.mrb[0].mxu0
    %4012 = vmatprep.mubr.f32.mxu0 0.0
    %4013 = vmatmul.mubr.f32.gmra.mrb[0].mxu0 %v3747
    %v4014 = vpop.f32.mrb[0].mxu0
    %v4015 = vadd.f32 0.0, %v4014
    %v4016 = vpop.f32.mrb[0].mxu0
    %4017 = vmatprep.mubr.f32.mxu0 0.0
    %4018 = vmatmul.mubr.f32.gmra.mrb[0].mxu0 %v3750
    %v4019 = vpop.f32.mrb[0].mxu0
    %v4020 = vadd.f32 0.0, %v4019
    %v4021 = vpop.f32.mrb[0].mxu0
    %4022 = vmatprep.mubr.f32.mxu0 0.0
    %4023 = vmatmul.mubr.f32.gmra.mrb[0].mxu0 %v3753
    %v4024 = vpop.f32.mrb[0].mxu0
    %v4025 = vadd.f32 0.0, %v4024
    %v4026 = vpop.f32.mrb[0].mxu0
    %4027 = vdwg.mxu0
    %4028 = vmatprep.subr.mxu0 0.0
    %4029 = vmatpush1.msra.mxu0 %v4010
    %4030 = vmatprep.subr.mxu0 0.0
    %4031 = vmatpush1.msra.mxu0 %v4015
    %4032 = vmatprep.subr.mxu0 0.0
    %4033 = vmatpush1.msra.mxu0 0.0
    %4034 = vmatprep.subr.mxu0 0.0
    %4035 = vmatpush1.msra.mxu0 0.0
    %4036 = vmatprep.subr.mxu0 0.0
    %4037 = vmatpush1.msra.mxu0 0.0
    %4038 = vmatprep.subr.mxu0 0.0
    %4039 = vmatpush1.msra.mxu0 0.0
    %4040 = vmatprep.subr.mxu0 0.0
    %4041 = vmatpush1.msra.mxu0 0.0
    %4042 = vmatprep.subr.mxu0 0.0
    %4043 = vmatpush1.msra.mxu0 0.0
    %4044 = vmatprep.subr.mxu0 0.0
    %4045 = vmatpush1.msra.mxu0 0.0
    %4046 = vmatprep.subr.mxu0 0.0
    %4047 = vmatpush1.msra.mxu0 0.0
    %4048 = vmatprep.subr.mxu0 0.0
    %4049 = vmatpush1.msra.mxu0 0.0
    %4050 = vmatprep.subr.mxu0 0.0
    %4051 = vmatpush1.msra.mxu0 0.0
    %4052 = vmatprep.subr.mxu0 0.0
    %4053 = vmatpush1.msra.mxu0 0.0
    %4054 = vmatprep.subr.mxu0 0.0
    %4055 = vmatpush1.msra.mxu0 0.0
    %4056 = vmatprep.subr.mxu0 0.0
    %4057 = vmatpush1.msra.mxu0 0.0
    %4058 = vmatprep.subr.mxu0 0.0
    %4059 = vmatpush1.msra.mxu0 0.0
    %4060 = vmatprep.subr.mxu0 0.0
    %4061 = vmatpush1.msra.mxu0 0.0
    %4062 = vmatprep.subr.mxu0 0.0
    %4063 = vmatpush1.msra.mxu0 0.0
    %4064 = vmatprep.subr.mxu0 0.0
    %4065 = vmatpush1.msra.mxu0 0.0
    %4066 = vmatprep.subr.mxu0 0.0
    %4067 = vmatpush1.msra.mxu0 0.0
    %4068 = vmatprep.subr.mxu0 0.0
    %4069 = vmatpush1.msra.mxu0 0.0
    %4070 = vmatprep.subr.mxu0 0.0
    %4071 = vmatpush1.msra.mxu0 0.0
    %4072 = vmatprep.subr.mxu0 0.0
    %4073 = vmatpush1.msra.mxu0 0.0
    %4074 = vmatprep.subr.mxu0 0.0
    %4075 = vmatpush1.msra.mxu0 0.0
    %4076 = vmatprep.subr.mxu0 0.0
    %4077 = vmatpush1.msra.mxu0 0.0
    %4078 = vmatprep.subr.mxu0 0.0
    %4079 = vmatpush1.msra.mxu0 0.0
    %4080 = vmatprep.subr.mxu0 0.0
    %4081 = vmatpush1.msra.mxu0 0.0
    %4082 = vmatprep.subr.mxu0 0.0
    %4083 = vmatpush1.msra.mxu0 0.0
    %4084 = vmatprep.subr.mxu0 0.0
    %4085 = vmatpush1.msra.mxu0 0.0
    %4086 = vmatprep.subr.mxu0 0.0
    %4087 = vmatpush1.msra.mxu0 0.0
    %4088 = vmatprep.subr.mxu0 0.0
    %4089 = vmatpush1.msra.mxu0 0.0
    %4090 = vmatprep.subr.mxu0 0.0
    %4091 = vmatpush1.msra.mxu0 0.0
    %4092 = vmatprep.mubr.f32.mxu0 0.0
    %4093 = vmatmul.mubr.f32.gmra.mrb[0].mxu0 %v1985
    %v4094 = vpop.f32.mrb[0].mxu0
    %v4095 = vadd.f32 0.0, %v4094
    %v4096 = vpop.f32.mrb[0].mxu0
    %4097 = vmatprep.mubr.f32.mxu0 0.0
    %4098 = vmatmul.mubr.f32.gmra.mrb[0].mxu0 %v1988
    %v4099 = vpop.f32.mrb[0].mxu0
    %v4100 = vadd.f32 0.0, %v4099
    %v4101 = vpop.f32.mrb[0].mxu0
    %4102 = vdwg.mxu0
    %4103 = vmatprep.subr.mxu0 0.0
    %4104 = vmatpush1.msra.mxu0 %v4020
    %4105 = vmatprep.subr.mxu0 0.0
    %4106 = vmatpush1.msra.mxu0 %v4025
    %4107 = vmatprep.subr.mxu0 0.0
    %4108 = vmatpush1.msra.mxu0 0.0
    %4109 = vmatprep.subr.mxu0 0.0
    %4110 = vmatpush1.msra.mxu0 0.0
    %4111 = vmatprep.subr.mxu0 0.0
    %4112 = vmatpush1.msra.mxu0 0.0
    %4113 = vmatprep.subr.mxu0 0.0
    %4114 = vmatpush1.msra.mxu0 0.0
    %4115 = vmatprep.subr.mxu0 0.0
    %4116 = vmatpush1.msra.mxu0 0.0
    %4117 = vmatprep.subr.mxu0 0.0
    %4118 = vmatpush1.msra.mxu0 0.0
    %4119 = vmatprep.subr.mxu0 0.0
    %4120 = vmatpush1.msra.mxu0 0.0
    %4121 = vmatprep.subr.mxu0 0.0
    %4122 = vmatpush1.msra.mxu0 0.0
    %4123 = vmatprep.subr.mxu0 0.0
    %4124 = vmatpush1.msra.mxu0 0.0
    %4125 = vmatprep.subr.mxu0 0.0
    %4126 = vmatpush1.msra.mxu0 0.0
    %4127 = vmatprep.subr.mxu0 0.0
    %4128 = vmatpush1.msra.mxu0 0.0
    %4129 = vmatprep.subr.mxu0 0.0
    %4130 = vmatpush1.msra.mxu0 0.0
    %4131 = vmatprep.subr.mxu0 0.0
    %4132 = vmatpush1.msra.mxu0 0.0
    %4133 = vmatprep.subr.mxu0 0.0
    %4134 = vmatpush1.msra.mxu0 0.0
    %4135 = vmatprep.subr.mxu0 0.0
    %4136 = vmatpush1.msra.mxu0 0.0
    %4137 = vmatprep.subr.mxu0 0.0
    %4138 = vmatpush1.msra.mxu0 0.0
    %4139 = vmatprep.subr.mxu0 0.0
    %4140 = vmatpush1.msra.mxu0 0.0
    %4141 = vmatprep.subr.mxu0 0.0
    %4142 = vmatpush1.msra.mxu0 0.0
    %4143 = vmatprep.subr.mxu0 0.0
    %4144 = vmatpush1.msra.mxu0 0.0
    %4145 = vmatprep.subr.mxu0 0.0
    %4146 = vmatpush1.msra.mxu0 0.0
    %4147 = vmatprep.subr.mxu0 0.0
    %4148 = vmatpush1.msra.mxu0 0.0
    %4149 = vmatprep.subr.mxu0 0.0
    %4150 = vmatpush1.msra.mxu0 0.0
    %4151 = vmatprep.subr.mxu0 0.0
    %4152 = vmatpush1.msra.mxu0 0.0
    %4153 = vmatprep.subr.mxu0 0.0
    %4154 = vmatpush1.msra.mxu0 0.0
    %4155 = vmatprep.subr.mxu0 0.0
    %4156 = vmatpush1.msra.mxu0 0.0
    %4157 = vmatprep.subr.mxu0 0.0
    %4158 = vmatpush1.msra.mxu0 0.0
    %4159 = vmatprep.subr.mxu0 0.0
    %4160 = vmatpush1.msra.mxu0 0.0
    %4161 = vmatprep.subr.mxu0 0.0
    %4162 = vmatpush1.msra.mxu0 0.0
    %4163 = vmatprep.subr.mxu0 0.0
    %4164 = vmatpush1.msra.mxu0 0.0
    %4165 = vmatprep.subr.mxu0 0.0
    %4166 = vmatpush1.msra.mxu0 0.0
    %4167 = vmatprep.mubr.f32.mxu0 0.0
    %4168 = vmatmul.mubr.f32.gmra.mrb[0].mxu0 %v2066
    %v4169 = vpop.f32.mrb[0].mxu0
    %v4170 = vadd.f32 0.0, %v4169
    %v4171 = vpop.f32.mrb[0].mxu0
    %4172 = vmatprep.mubr.f32.mxu0 0.0
    %4173 = vmatmul.mubr.f32.gmra.mrb[0].mxu0 %v2069
    %v4174 = vpop.f32.mrb[0].mxu0
    %v4175 = vadd.f32 0.0, %v4174
    %v4176 = vpop.f32.mrb[0].mxu0
    %4177 = vdwg.mxu0
    %v4178 = vtanh.pop %v4095
    %v4179 = vtanh.pop %v4100
    %v4180 = vtanh.pop %v4170
    %v4181 = vtanh.pop %v4175
    %4182 = vmatprep.subr.mxu0 0.0
    %4183 = vmatpush1.msra.mxu0 %v4178
    %4184 = vmatprep.subr.mxu0 0.0
    %4185 = vmatpush1.msra.mxu0 %v4179
    %4186 = vmatprep.subr.mxu0 0.0
    %4187 = vmatpush1.msra.mxu0 0.0
    %4188 = vmatprep.subr.mxu0 0.0
    %4189 = vmatpush1.msra.mxu0 0.0
    %4190 = vmatprep.subr.mxu0 0.0
    %4191 = vmatpush1.msra.mxu0 0.0
    %4192 = vmatprep.subr.mxu0 0.0
    %4193 = vmatpush1.msra.mxu0 0.0
    %4194 = vmatprep.subr.mxu0 0.0
    %4195 = vmatpush1.msra.mxu0 0.0
    %4196 = vmatprep.subr.mxu0 0.0
    %4197 = vmatpush1.msra.mxu0 0.0
    %4198 = vmatprep.subr.mxu0 0.0
    %4199 = vmatpush1.msra.mxu0 0.0
    %4200 = vmatprep.subr.mxu0 0.0
    %4201 = vmatpush1.msra.mxu0 0.0
    %4202 = vmatprep.subr.mxu0 0.0
    %4203 = vmatpush1.msra.mxu0 0.0
    %4204 = vmatprep.subr.mxu0 0.0
    %4205 = vmatpush1.msra.mxu0 0.0
    %4206 = vmatprep.subr.mxu0 0.0
    %4207 = vmatpush1.msra.mxu0 0.0
    %4208 = vmatprep.subr.mxu0 0.0
    %4209 = vmatpush1.msra.mxu0 0.0
    %4210 = vmatprep.subr.mxu0 0.0
    %4211 = vmatpush1.msra.mxu0 0.0
    %4212 = vmatprep.subr.mxu0 0.0
    %4213 = vmatpush1.msra.mxu0 0.0
    %4214 = vmatprep.subr.mxu0 0.0
    %4215 = vmatpush1.msra.mxu0 0.0
    %4216 = vmatprep.subr.mxu0 0.0
    %4217 = vmatpush1.msra.mxu0 0.0
    %4218 = vmatprep.subr.mxu0 0.0
    %4219 = vmatpush1.msra.mxu0 0.0
    %4220 = vmatprep.subr.mxu0 0.0
    %4221 = vmatpush1.msra.mxu0 0.0
    %4222 = vmatprep.subr.mxu0 0.0
    %4223 = vmatpush1.msra.mxu0 0.0
    %4224 = vmatprep.subr.mxu0 0.0
    %4225 = vmatpush1.msra.mxu0 0.0
    %4226 = vmatprep.subr.mxu0 0.0
    %4227 = vmatpush1.msra.mxu0 0.0
    %4228 = vmatprep.subr.mxu0 0.0
    %4229 = vmatpush1.msra.mxu0 0.0
    %4230 = vmatprep.subr.mxu0 0.0
    %4231 = vmatpush1.msra.mxu0 0.0
    %4232 = vmatprep.subr.mxu0 0.0
    %4233 = vmatpush1.msra.mxu0 0.0
    %4234 = vmatprep.subr.mxu0 0.0
    %4235 = vmatpush1.msra.mxu0 0.0
    %4236 = vmatprep.subr.mxu0 0.0
    %4237 = vmatpush1.msra.mxu0 0.0
    %4238 = vmatprep.subr.mxu0 0.0
    %4239 = vmatpush1.msra.mxu0 0.0
    %4240 = vmatprep.subr.mxu0 0.0
    %4241 = vmatpush1.msra.mxu0 0.0
    %4242 = vmatprep.subr.mxu0 0.0
    %4243 = vmatpush1.msra.mxu0 0.0
    %4244 = vmatprep.subr.mxu0 0.0
    %4245 = vmatpush1.msra.mxu0 0.0
    %4246 = vmatprep.mubr.f32.mxu0 0.0
    %4247 = vmatmul.mubr.f32.gmra.mrb[0].mxu0 %v2351
    %v4248 = vpop.f32.mrb[0].mxu0
    %v4249 = vadd.f32 0.0, %v4248
    %v4250 = vpop.f32.mrb[0].mxu0
    %4251 = vmatprep.mubr.f32.mxu0 0.0
    %4252 = vmatmul.mubr.f32.gmra.mrb[0].mxu0 %v2353
    %v4253 = vpop.f32.mrb[0].mxu0
    %v4254 = vadd.f32 0.0, %v4253
    %v4255 = vpop.f32.mrb[0].mxu0
    %4256 = vdwg.mxu0
    %4257 = vmatprep.subr.mxu0 0.0
    %4258 = vmatpush1.msra.mxu0 %v4180
    %4259 = vmatprep.subr.mxu0 0.0
    %4260 = vmatpush1.msra.mxu0 %v4181
    %4261 = vmatprep.subr.mxu0 0.0
    %4262 = vmatpush1.msra.mxu0 0.0
    %4263 = vmatprep.subr.mxu0 0.0
    %4264 = vmatpush1.msra.mxu0 0.0
    %4265 = vmatprep.subr.mxu0 0.0
    %4266 = vmatpush1.msra.mxu0 0.0
    %4267 = vmatprep.subr.mxu0 0.0
    %4268 = vmatpush1.msra.mxu0 0.0
    %4269 = vmatprep.subr.mxu0 0.0
    %4270 = vmatpush1.msra.mxu0 0.0
    %4271 = vmatprep.subr.mxu0 0.0
    %4272 = vmatpush1.msra.mxu0 0.0
    %4273 = vmatprep.subr.mxu0 0.0
    %4274 = vmatpush1.msra.mxu0 0.0
    %4275 = vmatprep.subr.mxu0 0.0
    %4276 = vmatpush1.msra.mxu0 0.0
    %4277 = vmatprep.subr.mxu0 0.0
    %4278 = vmatpush1.msra.mxu0 0.0
    %4279 = vmatprep.subr.mxu0 0.0
    %4280 = vmatpush1.msra.mxu0 0.0
    %4281 = vmatprep.subr.mxu0 0.0
    %4282 = vmatpush1.msra.mxu0 0.0
    %4283 = vmatprep.subr.mxu0 0.0
    %4284 = vmatpush1.msra.mxu0 0.0
    %4285 = vmatprep.subr.mxu0 0.0
    %4286 = vmatpush1.msra.mxu0 0.0
    %4287 = vmatprep.subr.mxu0 0.0
    %4288 = vmatpush1.msra.mxu0 0.0
    %4289 = vmatprep.subr.mxu0 0.0
    %4290 = vmatpush1.msra.mxu0 0.0
    %4291 = vmatprep.subr.mxu0 0.0
    %4292 = vmatpush1.msra.mxu0 0.0
    %4293 = vmatprep.subr.mxu0 0.0
    %4294 = vmatpush1.msra.mxu0 0.0
    %4295 = vmatprep.subr.mxu0 0.0
    %4296 = vmatpush1.msra.mxu0 0.0
    %4297 = vmatprep.subr.mxu0 0.0
    %4298 = vmatpush1.msra.mxu0 0.0
    %4299 = vmatprep.subr.mxu0 0.0
    %4300 = vmatpush1.msra.mxu0 0.0
    %4301 = vmatprep.subr.mxu0 0.0
    %4302 = vmatpush1.msra.mxu0 0.0
    %4303 = vmatprep.subr.mxu0 0.0
    %4304 = vmatpush1.msra.mxu0 0.0
    %4305 = vmatprep.subr.mxu0 0.0
    %4306 = vmatpush1.msra.mxu0 0.0
    %4307 = vmatprep.subr.mxu0 0.0
    %4308 = vmatpush1.msra.mxu0 0.0
    %4309 = vmatprep.subr.mxu0 0.0
    %4310 = vmatpush1.msra.mxu0 0.0
    %4311 = vmatprep.subr.mxu0 0.0
    %4312 = vmatpush1.msra.mxu0 0.0
    %4313 = vmatprep.subr.mxu0 0.0
    %4314 = vmatpush1.msra.mxu0 0.0
    %4315 = vmatprep.subr.mxu0 0.0
    %4316 = vmatpush1.msra.mxu0 0.0
    %4317 = vmatprep.subr.mxu0 0.0
    %4318 = vmatpush1.msra.mxu0 0.0
    %4319 = vmatprep.subr.mxu0 0.0
    %4320 = vmatpush1.msra.mxu0 0.0
    %4321 = vmatprep.mubr.f32.mxu0 0.0
    %4322 = vmatmul.mubr.f32.gmra.mrb[0].mxu0 %v2620
    %v4323 = vpop.f32.mrb[0].mxu0
    %v4324 = vadd.f32 0.0, %v4323
    %v4325 = vpop.f32.mrb[0].mxu0
    %4326 = vmatprep.mubr.f32.mxu0 0.0
    %4327 = vmatmul.mubr.f32.gmra.mrb[0].mxu0 %v2622
    %v4328 = vpop.f32.mrb[0].mxu0
    %v4329 = vadd.f32 0.0, %v4328
    %v4330 = vpop.f32.mrb[0].mxu0
    %4331 = vdwg.mxu0
    %v4332 = vtanh.pop %v4249
    %v4333 = vtanh.pop %v4254
    %v4334 = vtanh.pop %v4324
    %v4335 = vtanh.pop %v4329
    %s4336 = scalar_lea.vmem %s13, 64
    %v4337 = vld [vmem:[%s4336] sm:$0xff]
    %v4338 = vld [vmem:[%s4336 + $0x8] sm:$0xff]
    %v4339 = vld [vmem:[%s4336 + $0x10] sm:$0xff]
    %v4340 = vld [vmem:[%s4336 + $0x18] sm:$0xff]
    %s4341 = scalar_lea.vmem %s14, 64
    %v4342 = vld [vmem:[%s4341] sm:$0xff]
    %v4343 = vld [vmem:[%s4341 + $0x8] sm:$0xff]
    %v4344 = vld [vmem:[%s4341 + $0x10] sm:$0xff]
    %v4345 = vld [vmem:[%s4341 + $0x18] sm:$0xff]
    %v4347 = vsel %vm1497, %v4332, 0
    %v4350 = vsel %vm1497, %v4333, 0
    %v4353 = vsel %vm1497, %v4334, 0
    %v4356 = vsel %vm1497, %v4335, 0
    %4358 = vmatprep.subr.mxu0 0.0
    %4359 = vmatpush1.msra.mxu0 %v4342
    %4360 = vmatprep.subr.mxu0 0.0
    %4361 = vmatpush1.msra.mxu0 %v4343
    %4362 = vmatprep.subr.mxu0 0.0
    %4363 = vmatpush1.msra.mxu0 %v4344
    %4364 = vmatprep.subr.mxu0 0.0
    %4365 = vmatpush1.msra.mxu0 %v4345
    %4366 = vmatprep.subr.mxu0 0.0
    %4367 = vmatpush1.msra.mxu0 0.0
    %4368 = vmatprep.subr.mxu0 0.0
    %4369 = vmatpush1.msra.mxu0 0.0
    %4370 = vmatprep.subr.mxu0 0.0
    %4371 = vmatpush1.msra.mxu0 0.0
    %4372 = vmatprep.subr.mxu0 0.0
    %4373 = vmatpush1.msra.mxu0 0.0
    %4374 = vmatprep.subr.mxu0 0.0
    %4375 = vmatpush1.msra.mxu0 0.0
    %4376 = vmatprep.subr.mxu0 0.0
    %4377 = vmatpush1.msra.mxu0 0.0
    %4378 = vmatprep.subr.mxu0 0.0
    %4379 = vmatpush1.msra.mxu0 0.0
    %4380 = vmatprep.subr.mxu0 0.0
    %4381 = vmatpush1.msra.mxu0 0.0
    %4382 = vmatprep.subr.mxu0 0.0
    %4383 = vmatpush1.msra.mxu0 0.0
    %4384 = vmatprep.subr.mxu0 0.0
    %4385 = vmatpush1.msra.mxu0 0.0
    %4386 = vmatprep.subr.mxu0 0.0
    %4387 = vmatpush1.msra.mxu0 0.0
    %4388 = vmatprep.subr.mxu0 0.0
    %4389 = vmatpush1.msra.mxu0 0.0
    %4390 = vmatprep.subr.mxu0 0.0
    %4391 = vmatpush1.msra.mxu0 0.0
    %4392 = vmatprep.subr.mxu0 0.0
    %4393 = vmatpush1.msra.mxu0 0.0
    %4394 = vmatprep.subr.mxu0 0.0
    %4395 = vmatpush1.msra.mxu0 0.0
    %4396 = vmatprep.subr.mxu0 0.0
    %4397 = vmatpush1.msra.mxu0 0.0
    %4398 = vmatprep.subr.mxu0 0.0
    %4399 = vmatpush1.msra.mxu0 0.0
    %4400 = vmatprep.subr.mxu0 0.0
    %4401 = vmatpush1.msra.mxu0 0.0
    %4402 = vmatprep.subr.mxu0 0.0
    %4403 = vmatpush1.msra.mxu0 0.0
    %4404 = vmatprep.subr.mxu0 0.0
    %4405 = vmatpush1.msra.mxu0 0.0
    %4406 = vmatprep.subr.mxu0 0.0
    %4407 = vmatpush1.msra.mxu0 0.0
    %4408 = vmatprep.subr.mxu0 0.0
    %4409 = vmatpush1.msra.mxu0 0.0
    %4410 = vmatprep.subr.mxu0 0.0
    %4411 = vmatpush1.msra.mxu0 0.0
    %4412 = vmatprep.subr.mxu0 0.0
    %4413 = vmatpush1.msra.mxu0 0.0
    %4414 = vmatprep.subr.mxu0 0.0
    %4415 = vmatpush1.msra.mxu0 0.0
    %4416 = vmatprep.subr.mxu0 0.0
    %4417 = vmatpush1.msra.mxu0 0.0
    %4418 = vmatprep.subr.mxu0 0.0
    %4419 = vmatpush1.msra.mxu0 0.0
    %4420 = vmatprep.subr.mxu0 0.0
    %4421 = vmatpush1.msra.mxu0 0.0
    %4422 = vmatprep.mubr.f32.mxu0 0.0
    %4423 = vmatmul.mubr.f32.gmra.mrb[0].mxu0 %v4347
    %v4424 = vpop.f32.mrb[0].mxu0
    %v4425 = vadd.f32 0.0, %v4424
    %v4426 = vpop.f32.mrb[0].mxu0
    %4427 = vmatprep.mubr.f32.mxu0 0.0
    %4428 = vmatmul.mubr.f32.gmra.mrb[0].mxu0 %v4350
    %v4429 = vpop.f32.mrb[0].mxu0
    %v4430 = vadd.f32 0.0, %v4429
    %v4431 = vpop.f32.mrb[0].mxu0
    %4432 = vmatprep.mubr.f32.mxu0 0.0
    %4433 = vmatmul.mubr.f32.gmra.mrb[0].mxu0 %v4353
    %v4434 = vpop.f32.mrb[0].mxu0
    %v4435 = vadd.f32 0.0, %v4434
    %v4436 = vpop.f32.mrb[0].mxu0
    %4437 = vmatprep.mubr.f32.mxu0 0.0
    %4438 = vmatmul.mubr.f32.gmra.mrb[0].mxu0 %v4356
    %v4439 = vpop.f32.mrb[0].mxu0
    %v4440 = vadd.f32 0.0, %v4439
    %v4441 = vpop.f32.mrb[0].mxu0
    %4442 = vdwg.mxu0
    %v4444 = vsel %vm1497, %v4178, 0
    %v4447 = vsel %vm1497, %v4179, 0
    %v4450 = vsel %vm1497, %v4180, 0
    %v4453 = vsel %vm1497, %v4181, 0
    %4455 = vmatprep.subr.mxu0 0.0
    %4456 = vmatpush1.msra.mxu0 %v4337
    %4457 = vmatprep.subr.mxu0 0.0
    %4458 = vmatpush1.msra.mxu0 %v4338
    %4459 = vmatprep.subr.mxu0 0.0
    %4460 = vmatpush1.msra.mxu0 %v4339
    %4461 = vmatprep.subr.mxu0 0.0
    %4462 = vmatpush1.msra.mxu0 %v4340
    %4463 = vmatprep.subr.mxu0 0.0
    %4464 = vmatpush1.msra.mxu0 0.0
    %4465 = vmatprep.subr.mxu0 0.0
    %4466 = vmatpush1.msra.mxu0 0.0
    %4467 = vmatprep.subr.mxu0 0.0
    %4468 = vmatpush1.msra.mxu0 0.0
    %4469 = vmatprep.subr.mxu0 0.0
    %4470 = vmatpush1.msra.mxu0 0.0
    %4471 = vmatprep.subr.mxu0 0.0
    %4472 = vmatpush1.msra.mxu0 0.0
    %4473 = vmatprep.subr.mxu0 0.0
    %4474 = vmatpush1.msra.mxu0 0.0
    %4475 = vmatprep.subr.mxu0 0.0
    %4476 = vmatpush1.msra.mxu0 0.0
    %4477 = vmatprep.subr.mxu0 0.0
    %4478 = vmatpush1.msra.mxu0 0.0
    %4479 = vmatprep.subr.mxu0 0.0
    %4480 = vmatpush1.msra.mxu0 0.0
    %4481 = vmatprep.subr.mxu0 0.0
    %4482 = vmatpush1.msra.mxu0 0.0
    %4483 = vmatprep.subr.mxu0 0.0
    %4484 = vmatpush1.msra.mxu0 0.0
    %4485 = vmatprep.subr.mxu0 0.0
    %4486 = vmatpush1.msra.mxu0 0.0
    %4487 = vmatprep.subr.mxu0 0.0
    %4488 = vmatpush1.msra.mxu0 0.0
    %4489 = vmatprep.subr.mxu0 0.0
    %4490 = vmatpush1.msra.mxu0 0.0
    %4491 = vmatprep.subr.mxu0 0.0
    %4492 = vmatpush1.msra.mxu0 0.0
    %4493 = vmatprep.subr.mxu0 0.0
    %4494 = vmatpush1.msra.mxu0 0.0
    %4495 = vmatprep.subr.mxu0 0.0
    %4496 = vmatpush1.msra.mxu0 0.0
    %4497 = vmatprep.subr.mxu0 0.0
    %4498 = vmatpush1.msra.mxu0 0.0
    %4499 = vmatprep.subr.mxu0 0.0
    %4500 = vmatpush1.msra.mxu0 0.0
    %4501 = vmatprep.subr.mxu0 0.0
    %4502 = vmatpush1.msra.mxu0 0.0
    %4503 = vmatprep.subr.mxu0 0.0
    %4504 = vmatpush1.msra.mxu0 0.0
    %4505 = vmatprep.subr.mxu0 0.0
    %4506 = vmatpush1.msra.mxu0 0.0
    %4507 = vmatprep.subr.mxu0 0.0
    %4508 = vmatpush1.msra.mxu0 0.0
    %4509 = vmatprep.subr.mxu0 0.0
    %4510 = vmatpush1.msra.mxu0 0.0
    %4511 = vmatprep.subr.mxu0 0.0
    %4512 = vmatpush1.msra.mxu0 0.0
    %4513 = vmatprep.subr.mxu0 0.0
    %4514 = vmatpush1.msra.mxu0 0.0
    %4515 = vmatprep.subr.mxu0 0.0
    %4516 = vmatpush1.msra.mxu0 0.0
    %4517 = vmatprep.subr.mxu0 0.0
    %4518 = vmatpush1.msra.mxu0 0.0
    %4519 = vmatprep.mubr.f32.mxu0 0.0
    %4520 = vmatmul.mubr.f32.gmra.mrb[0].mxu0 %v4444
    %v4521 = vpop.f32.mrb[0].mxu0
    %v4522 = vadd.f32 %v4425, %v4521
    %v4523 = vpop.f32.mrb[0].mxu0
    %4524 = vmatprep.mubr.f32.mxu0 0.0
    %4525 = vmatmul.mubr.f32.gmra.mrb[0].mxu0 %v4447
    %v4526 = vpop.f32.mrb[0].mxu0
    %v4527 = vadd.f32 %v4430, %v4526
    %v4528 = vpop.f32.mrb[0].mxu0
    %4529 = vmatprep.mubr.f32.mxu0 0.0
    %4530 = vmatmul.mubr.f32.gmra.mrb[0].mxu0 %v4450
    %v4531 = vpop.f32.mrb[0].mxu0
    %v4532 = vadd.f32 %v4435, %v4531
    %v4533 = vpop.f32.mrb[0].mxu0
    %4534 = vmatprep.mubr.f32.mxu0 0.0
    %4535 = vmatmul.mubr.f32.gmra.mrb[0].mxu0 %v4453
    %v4536 = vpop.f32.mrb[0].mxu0
    %v4537 = vadd.f32 %v4440, %v4536
    %v4538 = vpop.f32.mrb[0].mxu0
    %4539 = vdwg.mxu0
    %s4540 = scalar_lea.vmem %s15, 2
    %v4541 = vld [vmem:[%s4540] sm:$0x1]
    %v4543 = vlaneseq
    %v4544 = vshrl.u32 %v4543, 7
    %v4545 = vsub.s32 0, %v4544
    %v4546 = vrot.slane %v4541, %v4545
    %v4548 = vadd.f32 %v4522, %v4546
    %v4549 = vadd.f32 %v4527, %v4546
    %v4550 = vadd.f32 %v4532, %v4546
    %v4551 = vadd.f32 %v4537, %v4546
    %v4552 = vtanh.pop %v4548
    %v4553 = vtanh.pop %v4549
    %v4554 = vtanh.pop %v4550
    %v4555 = vtanh.pop %v4551
    %s4556 = scalar_lea.vmem %s16, 96
    %v4557 = vld [vmem:[%s4556] sm:$0xff]
    %v4558 = vld [vmem:[%s4556 + $0x8] sm:$0xff]
    %v4559 = vld [vmem:[%s4556 + $0x10] sm:$0xff]
    %v4560 = vld [vmem:[%s4556 + $0x18] sm:$0xff]
    %v4562 = vsel %vm1497, %v4552, 0
    %v4565 = vsel %vm1497, %v4553, 0
    %v4568 = vsel %vm1497, %v4554, 0
    %v4571 = vsel %vm1497, %v4555, 0
    %4573 = vmatprep.subr.mxu0 0.0
    %4574 = vmatpush1.msra.mxu0 %v4557
    %4575 = vmatprep.subr.mxu0 0.0
    %4576 = vmatpush1.msra.mxu0 %v4558
    %4577 = vmatprep.subr.mxu0 0.0
    %4578 = vmatpush1.msra.mxu0 %v4559
    %4579 = vmatprep.subr.mxu0 0.0
    %4580 = vmatpush1.msra.mxu0 %v4560
    %4581 = vmatprep.subr.mxu0 0.0
    %4582 = vmatpush1.msra.mxu0 0.0
    %4583 = vmatprep.subr.mxu0 0.0
    %4584 = vmatpush1.msra.mxu0 0.0
    %4585 = vmatprep.subr.mxu0 0.0
    %4586 = vmatpush1.msra.mxu0 0.0
    %4587 = vmatprep.subr.mxu0 0.0
    %4588 = vmatpush1.msra.mxu0 0.0
    %4589 = vmatprep.subr.mxu0 0.0
    %4590 = vmatpush1.msra.mxu0 0.0
    %4591 = vmatprep.subr.mxu0 0.0
    %4592 = vmatpush1.msra.mxu0 0.0
    %4593 = vmatprep.subr.mxu0 0.0
    %4594 = vmatpush1.msra.mxu0 0.0
    %4595 = vmatprep.subr.mxu0 0.0
    %4596 = vmatpush1.msra.mxu0 0.0
    %4597 = vmatprep.subr.mxu0 0.0
    %4598 = vmatpush1.msra.mxu0 0.0
    %4599 = vmatprep.subr.mxu0 0.0
    %4600 = vmatpush1.msra.mxu0 0.0
    %4601 = vmatprep.subr.mxu0 0.0
    %4602 = vmatpush1.msra.mxu0 0.0
    %4603 = vmatprep.subr.mxu0 0.0
    %4604 = vmatpush1.msra.mxu0 0.0
    %4605 = vmatprep.subr.mxu0 0.0
    %4606 = vmatpush1.msra.mxu0 0.0
    %4607 = vmatprep.subr.mxu0 0.0
    %4608 = vmatpush1.msra.mxu0 0.0
    %4609 = vmatprep.subr.mxu0 0.0
    %4610 = vmatpush1.msra.mxu0 0.0
    %4611 = vmatprep.subr.mxu0 0.0
    %4612 = vmatpush1.msra.mxu0 0.0
    %4613 = vmatprep.subr.mxu0 0.0
    %4614 = vmatpush1.msra.mxu0 0.0
    %4615 = vmatprep.subr.mxu0 0.0
    %4616 = vmatpush1.msra.mxu0 0.0
    %4617 = vmatprep.subr.mxu0 0.0
    %4618 = vmatpush1.msra.mxu0 0.0
    %4619 = vmatprep.subr.mxu0 0.0
    %4620 = vmatpush1.msra.mxu0 0.0
    %4621 = vmatprep.subr.mxu0 0.0
    %4622 = vmatpush1.msra.mxu0 0.0
    %4623 = vmatprep.subr.mxu0 0.0
    %4624 = vmatpush1.msra.mxu0 0.0
    %4625 = vmatprep.subr.mxu0 0.0
    %4626 = vmatpush1.msra.mxu0 0.0
    %4627 = vmatprep.subr.mxu0 0.0
    %4628 = vmatpush1.msra.mxu0 0.0
    %4629 = vmatprep.subr.mxu0 0.0
    %4630 = vmatpush1.msra.mxu0 0.0
    %4631 = vmatprep.subr.mxu0 0.0
    %4632 = vmatpush1.msra.mxu0 0.0
    %4633 = vmatprep.subr.mxu0 0.0
    %4634 = vmatpush1.msra.mxu0 0.0
    %4635 = vmatprep.subr.mxu0 0.0
    %4636 = vmatpush1.msra.mxu0 0.0
    %4637 = vmatprep.mubr.f32.mxu0 0.0
    %4638 = vmatmul.mubr.f32.gmra.mrb[0].mxu0 %v4562
    %v4639 = vpop.f32.mrb[0].mxu0
    %v4640 = vadd.f32 0.0, %v4639
    %v4641 = vpop.f32.mrb[0].mxu0
    %4642 = vmatprep.mubr.f32.mxu0 0.0
    %4643 = vmatmul.mubr.f32.gmra.mrb[0].mxu0 %v4565
    %v4644 = vpop.f32.mrb[0].mxu0
    %v4645 = vadd.f32 0.0, %v4644
    %v4646 = vpop.f32.mrb[0].mxu0
    %4647 = vmatprep.mubr.f32.mxu0 0.0
    %4648 = vmatmul.mubr.f32.gmra.mrb[0].mxu0 %v4568
    %v4649 = vpop.f32.mrb[0].mxu0
    %v4650 = vadd.f32 0.0, %v4649
    %v4651 = vpop.f32.mrb[0].mxu0
    %4652 = vmatprep.mubr.f32.mxu0 0.0
    %4653 = vmatmul.mubr.f32.gmra.mrb[0].mxu0 %v4571
    %v4654 = vpop.f32.mrb[0].mxu0
    %v4655 = vadd.f32 0.0, %v4654
    %v4656 = vpop.f32.mrb[0].mxu0
    %4657 = vdwg.mxu0
    %v4658 = vadd.f32 %v3840, %v4640
    %v4659 = vadd.f32 %v3841, %v4645
    %v4660 = vadd.f32 %v3842, %v4650
    %v4661 = vadd.f32 %v3843, %v4655
    %s4662 = scalar_lea.vmem %s20, 96
    %v4663 = vld [vmem:[%s4662] sm:$0xff]
    %v4664 = vld [vmem:[%s4662 + $0x8] sm:$0xff]
    %v4665 = vld [vmem:[%s4662 + $0x10] sm:$0xff]
    %v4666 = vld [vmem:[%s4662 + $0x18] sm:$0xff]
    %4667 = vmatprep.subr.mxu0 0.0
    %4668 = vmatpush1.msra.mxu0 %v4663
    %4669 = vmatprep.subr.mxu0 0.0
    %4670 = vmatpush1.msra.mxu0 %v4664
    %4671 = vmatprep.subr.mxu0 0.0
    %4672 = vmatpush1.msra.mxu0 %v4665
    %4673 = vmatprep.subr.mxu0 0.0
    %4674 = vmatpush1.msra.mxu0 %v4666
    %4675 = vmatprep.subr.mxu0 0.0
    %4676 = vmatpush1.msra.mxu0 0.0
    %4677 = vmatprep.subr.mxu0 0.0
    %4678 = vmatpush1.msra.mxu0 0.0
    %4679 = vmatprep.subr.mxu0 0.0
    %4680 = vmatpush1.msra.mxu0 0.0
    %4681 = vmatprep.subr.mxu0 0.0
    %4682 = vmatpush1.msra.mxu0 0.0
    %4683 = vmatprep.subr.mxu0 0.0
    %4684 = vmatpush1.msra.mxu0 0.0
    %4685 = vmatprep.subr.mxu0 0.0
    %4686 = vmatpush1.msra.mxu0 0.0
    %4687 = vmatprep.subr.mxu0 0.0
    %4688 = vmatpush1.msra.mxu0 0.0
    %4689 = vmatprep.subr.mxu0 0.0
    %4690 = vmatpush1.msra.mxu0 0.0
    %4691 = vmatprep.subr.mxu0 0.0
    %4692 = vmatpush1.msra.mxu0 0.0
    %4693 = vmatprep.subr.mxu0 0.0
    %4694 = vmatpush1.msra.mxu0 0.0
    %4695 = vmatprep.subr.mxu0 0.0
    %4696 = vmatpush1.msra.mxu0 0.0
    %4697 = vmatprep.subr.mxu0 0.0
    %4698 = vmatpush1.msra.mxu0 0.0
    %4699 = vmatprep.subr.mxu0 0.0
    %4700 = vmatpush1.msra.mxu0 0.0
    %4701 = vmatprep.subr.mxu0 0.0
    %4702 = vmatpush1.msra.mxu0 0.0
    %4703 = vmatprep.subr.mxu0 0.0
    %4704 = vmatpush1.msra.mxu0 0.0
    %4705 = vmatprep.subr.mxu0 0.0
    %4706 = vmatpush1.msra.mxu0 0.0
    %4707 = vmatprep.subr.mxu0 0.0
    %4708 = vmatpush1.msra.mxu0 0.0
    %4709 = vmatprep.subr.mxu0 0.0
    %4710 = vmatpush1.msra.mxu0 0.0
    %4711 = vmatprep.subr.mxu0 0.0
    %4712 = vmatpush1.msra.mxu0 0.0
    %4713 = vmatprep.subr.mxu0 0.0
    %4714 = vmatpush1.msra.mxu0 0.0
    %4715 = vmatprep.subr.mxu0 0.0
    %4716 = vmatpush1.msra.mxu0 0.0
    %4717 = vmatprep.subr.mxu0 0.0
    %4718 = vmatpush1.msra.mxu0 0.0
    %4719 = vmatprep.subr.mxu0 0.0
    %4720 = vmatpush1.msra.mxu0 0.0
    %4721 = vmatprep.subr.mxu0 0.0
    %4722 = vmatpush1.msra.mxu0 0.0
    %4723 = vmatprep.subr.mxu0 0.0
    %4724 = vmatpush1.msra.mxu0 0.0
    %4725 = vmatprep.subr.mxu0 0.0
    %4726 = vmatpush1.msra.mxu0 0.0
    %4727 = vmatprep.subr.mxu0 0.0
    %4728 = vmatpush1.msra.mxu0 0.0
    %4729 = vmatprep.subr.mxu0 0.0
    %4730 = vmatpush1.msra.mxu0 0.0
    %4731 = vmatprep.mubr.f32.mxu0 0.0
    %4732 = vmatmul.mubr.f32.gmra.mrb[0].mxu0 %v4562
    %v4733 = vpop.f32.mrb[0].mxu0
    %v4734 = vadd.f32 0.0, %v4733
    %v4735 = vpop.f32.mrb[0].mxu0
    %4736 = vmatprep.mubr.f32.mxu0 0.0
    %4737 = vmatmul.mubr.f32.gmra.mrb[0].mxu0 %v4565
    %v4738 = vpop.f32.mrb[0].mxu0
    %v4739 = vadd.f32 0.0, %v4738
    %v4740 = vpop.f32.mrb[0].mxu0
    %4741 = vmatprep.mubr.f32.mxu0 0.0
    %4742 = vmatmul.mubr.f32.gmra.mrb[0].mxu0 %v4568
    %v4743 = vpop.f32.mrb[0].mxu0
    %v4744 = vadd.f32 0.0, %v4743
    %v4745 = vpop.f32.mrb[0].mxu0
    %4746 = vmatprep.mubr.f32.mxu0 0.0
    %4747 = vmatmul.mubr.f32.gmra.mrb[0].mxu0 %v4571
    %v4748 = vpop.f32.mrb[0].mxu0
    %v4749 = vadd.f32 0.0, %v4748
    %v4750 = vpop.f32.mrb[0].mxu0
    %4751 = vdwg.mxu0
    %v4752 = vadd.f32 %v3934, %v4734
    %v4753 = vadd.f32 %v3935, %v4739
    %v4754 = vadd.f32 %v3936, %v4744
    %v4755 = vadd.f32 %v3937, %v4749
    %v4756 = vtanh.pop %v4658
    %v4757 = vtanh.pop %v4659
    %v4758 = vtanh.pop %v4660
    %v4759 = vtanh.pop %v4661
    %v4760 = vld [vmem:[%s18] sm:$0xff]
    %v4761 = vld [vmem:[%s18 + $0x8] sm:$0xff]
    %v4762 = vld [vmem:[%s18 + $0x10] sm:$0xff]
    %v4763 = vld [vmem:[%s18 + $0x18] sm:$0xff]
    %v4764 = vld [vmem:[%s18 + $0x20] sm:$0xff]
    %v4765 = vld [vmem:[%s18 + $0x28] sm:$0xff]
    %v4766 = vld [vmem:[%s18 + $0x30] sm:$0xff]
    %v4767 = vld [vmem:[%s18 + $0x38] sm:$0xff]
    %v4768 = vld [vmem:[%s18 + $0x40] sm:$0xff]
    %v4769 = vld [vmem:[%s18 + $0x48] sm:$0xff]
    %v4770 = vld [vmem:[%s18 + $0x50] sm:$0xff]
    %v4771 = vld [vmem:[%s18 + $0x58] sm:$0xff]
    %v4772 = vld [vmem:[%s18 + $0x60] sm:$0xff]
    %v4773 = vld [vmem:[%s18 + $0x68] sm:$0xff]
    %v4774 = vld [vmem:[%s18 + $0x70] sm:$0xff]
    %v4775 = vld [vmem:[%s18 + $0x78] sm:$0xff]
    %v4776 = vld [vmem:[%s19] sm:$0x1]
    %v4778 = vlaneseq
    %v4779 = vshrl.u32 %v4778, 7
    %v4780 = vsub.s32 0, %v4779
    %v4781 = vrot.slane %v4776, %v4780
    %4783 = vmatprep.subr.mxu0 0.0
    %4784 = vmatpush1.msra.mxu0 %v4760
    %4785 = vmatprep.subr.mxu0 0.0
    %4786 = vmatpush1.msra.mxu0 %v4761
    %4787 = vmatprep.subr.mxu0 0.0
    %4788 = vmatpush1.msra.mxu0 %v4762
    %4789 = vmatprep.subr.mxu0 0.0
    %4790 = vmatpush1.msra.mxu0 %v4763
    %4791 = vmatprep.subr.mxu0 0.0
    %4792 = vmatpush1.msra.mxu0 %v4764
    %4793 = vmatprep.subr.mxu0 0.0
    %4794 = vmatpush1.msra.mxu0 %v4765
    %4795 = vmatprep.subr.mxu0 0.0
    %4796 = vmatpush1.msra.mxu0 %v4766
    %4797 = vmatprep.subr.mxu0 0.0
    %4798 = vmatpush1.msra.mxu0 %v4767
    %4799 = vmatprep.subr.mxu0 0.0
    %4800 = vmatpush1.msra.mxu0 %v4768
    %4801 = vmatprep.subr.mxu0 0.0
    %4802 = vmatpush1.msra.mxu0 %v4769
    %4803 = vmatprep.subr.mxu0 0.0
    %4804 = vmatpush1.msra.mxu0 %v4770
    %4805 = vmatprep.subr.mxu0 0.0
    %4806 = vmatpush1.msra.mxu0 %v4771
    %4807 = vmatprep.subr.mxu0 0.0
    %4808 = vmatpush1.msra.mxu0 %v4772
    %4809 = vmatprep.subr.mxu0 0.0
    %4810 = vmatpush1.msra.mxu0 %v4773
    %4811 = vmatprep.subr.mxu0 0.0
    %4812 = vmatpush1.msra.mxu0 %v4774
    %4813 = vmatprep.subr.mxu0 0.0
    %4814 = vmatpush1.msra.mxu0 %v4775
    %4815 = vmatprep.subr.mxu0 0.0
    %4816 = vmatpush1.msra.mxu0 0.0
    %4817 = vmatprep.subr.mxu0 0.0
    %4818 = vmatpush1.msra.mxu0 0.0
    %4819 = vmatprep.subr.mxu0 0.0
    %4820 = vmatpush1.msra.mxu0 0.0
    %4821 = vmatprep.subr.mxu0 0.0
    %4822 = vmatpush1.msra.mxu0 0.0
    %4823 = vmatprep.subr.mxu0 0.0
    %4824 = vmatpush1.msra.mxu0 0.0
    %4825 = vmatprep.subr.mxu0 0.0
    %4826 = vmatpush1.msra.mxu0 0.0
    %4827 = vmatprep.subr.mxu0 0.0
    %4828 = vmatpush1.msra.mxu0 0.0
    %4829 = vmatprep.subr.mxu0 0.0
    %4830 = vmatpush1.msra.mxu0 0.0
    %4831 = vmatprep.subr.mxu0 0.0
    %4832 = vmatpush1.msra.mxu0 0.0
    %4833 = vmatprep.subr.mxu0 0.0
    %4834 = vmatpush1.msra.mxu0 0.0
    %4835 = vmatprep.subr.mxu0 0.0
    %4836 = vmatpush1.msra.mxu0 0.0
    %4837 = vmatprep.subr.mxu0 0.0
    %4838 = vmatpush1.msra.mxu0 0.0
    %4839 = vmatprep.subr.mxu0 0.0
    %4840 = vmatpush1.msra.mxu0 0.0
    %4841 = vmatprep.subr.mxu0 0.0
    %4842 = vmatpush1.msra.mxu0 0.0
    %4843 = vmatprep.subr.mxu0 0.0
    %4844 = vmatpush1.msra.mxu0 0.0
    %4845 = vmatprep.subr.mxu0 0.0
    %4846 = vmatpush1.msra.mxu0 0.0
    %4847 = vmatprep.mubr.f32.mxu0 0.0
    %4848 = vmatmul.mubr.f32.gmra.mrb[0].mxu0 %v4756
    %v4849 = vpop.f32.mrb[0].mxu0
    %v4850 = vadd.f32 %v4781, %v4849
    %v4851 = vpop.f32.mrb[0].mxu0
    %4852 = vmatprep.mubr.f32.mxu0 0.0
    %4853 = vmatmul.mubr.f32.gmra.mrb[0].mxu0 %v4757
    %v4854 = vpop.f32.mrb[0].mxu0
    %v4855 = vadd.f32 %v4781, %v4854
    %v4856 = vpop.f32.mrb[0].mxu0
    %4857 = vmatprep.mubr.f32.mxu0 0.0
    %4858 = vmatmul.mubr.f32.gmra.mrb[0].mxu0 %v4758
    %v4859 = vpop.f32.mrb[0].mxu0
    %v4860 = vadd.f32 %v4781, %v4859
    %v4861 = vpop.f32.mrb[0].mxu0
    %4862 = vmatprep.mubr.f32.mxu0 0.0
    %4863 = vmatmul.mubr.f32.gmra.mrb[0].mxu0 %v4759
    %v4864 = vpop.f32.mrb[0].mxu0
    %v4865 = vadd.f32 %v4781, %v4864
    %v4866 = vpop.f32.mrb[0].mxu0
    %4867 = vdwg.mxu0
    %v4868 = vtanh.pop %v4752
    %v4869 = vtanh.pop %v4753
    %v4870 = vtanh.pop %v4754
    %v4871 = vtanh.pop %v4755
    %v4872 = vld [vmem:[%s22] sm:$0xff]
    %v4873 = vld [vmem:[%s22 + $0x8] sm:$0xff]
    %v4874 = vld [vmem:[%s22 + $0x10] sm:$0xff]
    %v4875 = vld [vmem:[%s22 + $0x18] sm:$0xff]
    %v4876 = vld [vmem:[%s22 + $0x20] sm:$0xff]
    %v4877 = vld [vmem:[%s22 + $0x28] sm:$0xff]
    %v4878 = vld [vmem:[%s22 + $0x30] sm:$0xff]
    %v4879 = vld [vmem:[%s22 + $0x38] sm:$0xff]
    %v4880 = vld [vmem:[%s22 + $0x40] sm:$0xff]
    %v4881 = vld [vmem:[%s22 + $0x48] sm:$0xff]
    %v4882 = vld [vmem:[%s22 + $0x50] sm:$0xff]
    %v4883 = vld [vmem:[%s22 + $0x58] sm:$0xff]
    %v4884 = vld [vmem:[%s22 + $0x60] sm:$0xff]
    %v4885 = vld [vmem:[%s22 + $0x68] sm:$0xff]
    %v4886 = vld [vmem:[%s22 + $0x70] sm:$0xff]
    %v4887 = vld [vmem:[%s22 + $0x78] sm:$0xff]
    %v4888 = vld [vmem:[%s23] sm:$0x1]
    %v4890 = vlaneseq
    %v4891 = vshrl.u32 %v4890, 7
    %v4892 = vsub.s32 0, %v4891
    %v4893 = vrot.slane %v4888, %v4892
    %4895 = vmatprep.subr.mxu0 0.0
    %4896 = vmatpush1.msra.mxu0 %v4872
    %4897 = vmatprep.subr.mxu0 0.0
    %4898 = vmatpush1.msra.mxu0 %v4873
    %4899 = vmatprep.subr.mxu0 0.0
    %4900 = vmatpush1.msra.mxu0 %v4874
    %4901 = vmatprep.subr.mxu0 0.0
    %4902 = vmatpush1.msra.mxu0 %v4875
    %4903 = vmatprep.subr.mxu0 0.0
    %4904 = vmatpush1.msra.mxu0 %v4876
    %4905 = vmatprep.subr.mxu0 0.0
    %4906 = vmatpush1.msra.mxu0 %v4877
    %4907 = vmatprep.subr.mxu0 0.0
    %4908 = vmatpush1.msra.mxu0 %v4878
    %4909 = vmatprep.subr.mxu0 0.0
    %4910 = vmatpush1.msra.mxu0 %v4879
    %4911 = vmatprep.subr.mxu0 0.0
    %4912 = vmatpush1.msra.mxu0 %v4880
    %4913 = vmatprep.subr.mxu0 0.0
    %4914 = vmatpush1.msra.mxu0 %v4881
    %4915 = vmatprep.subr.mxu0 0.0
    %4916 = vmatpush1.msra.mxu0 %v4882
    %4917 = vmatprep.subr.mxu0 0.0
    %4918 = vmatpush1.msra.mxu0 %v4883
    %4919 = vmatprep.subr.mxu0 0.0
    %4920 = vmatpush1.msra.mxu0 %v4884
    %4921 = vmatprep.subr.mxu0 0.0
    %4922 = vmatpush1.msra.mxu0 %v4885
    %4923 = vmatprep.subr.mxu0 0.0
    %4924 = vmatpush1.msra.mxu0 %v4886
    %4925 = vmatprep.subr.mxu0 0.0
    %4926 = vmatpush1.msra.mxu0 %v4887
    %4927 = vmatprep.subr.mxu0 0.0
    %4928 = vmatpush1.msra.mxu0 0.0
    %4929 = vmatprep.subr.mxu0 0.0
    %4930 = vmatpush1.msra.mxu0 0.0
    %4931 = vmatprep.subr.mxu0 0.0
    %4932 = vmatpush1.msra.mxu0 0.0
    %4933 = vmatprep.subr.mxu0 0.0
    %4934 = vmatpush1.msra.mxu0 0.0
    %4935 = vmatprep.subr.mxu0 0.0
    %4936 = vmatpush1.msra.mxu0 0.0
    %4937 = vmatprep.subr.mxu0 0.0
    %4938 = vmatpush1.msra.mxu0 0.0
    %4939 = vmatprep.subr.mxu0 0.0
    %4940 = vmatpush1.msra.mxu0 0.0
    %4941 = vmatprep.subr.mxu0 0.0
    %4942 = vmatpush1.msra.mxu0 0.0
    %4943 = vmatprep.subr.mxu0 0.0
    %4944 = vmatpush1.msra.mxu0 0.0
    %4945 = vmatprep.subr.mxu0 0.0
    %4946 = vmatpush1.msra.mxu0 0.0
    %4947 = vmatprep.subr.mxu0 0.0
    %4948 = vmatpush1.msra.mxu0 0.0
    %4949 = vmatprep.subr.mxu0 0.0
    %4950 = vmatpush1.msra.mxu0 0.0
    %4951 = vmatprep.subr.mxu0 0.0
    %4952 = vmatpush1.msra.mxu0 0.0
    %4953 = vmatprep.subr.mxu0 0.0
    %4954 = vmatpush1.msra.mxu0 0.0
    %4955 = vmatprep.subr.mxu0 0.0
    %4956 = vmatpush1.msra.mxu0 0.0
    %4957 = vmatprep.subr.mxu0 0.0
    %4958 = vmatpush1.msra.mxu0 0.0
    %4959 = vmatprep.mubr.f32.mxu0 0.0
    %4960 = vmatmul.mubr.f32.gmra.mrb[0].mxu0 %v4868
    %v4961 = vpop.f32.mrb[0].mxu0
    %v4962 = vadd.f32 %v4893, %v4961
    %v4963 = vpop.f32.mrb[0].mxu0
    %4964 = vmatprep.mubr.f32.mxu0 0.0
    %4965 = vmatmul.mubr.f32.gmra.mrb[0].mxu0 %v4869
    %v4966 = vpop.f32.mrb[0].mxu0
    %v4967 = vadd.f32 %v4893, %v4966
    %v4968 = vpop.f32.mrb[0].mxu0
    %4969 = vmatprep.mubr.f32.mxu0 0.0
    %4970 = vmatmul.mubr.f32.gmra.mrb[0].mxu0 %v4870
    %v4971 = vpop.f32.mrb[0].mxu0
    %v4972 = vadd.f32 %v4893, %v4971
    %v4973 = vpop.f32.mrb[0].mxu0
    %4974 = vmatprep.mubr.f32.mxu0 0.0
    %4975 = vmatmul.mubr.f32.gmra.mrb[0].mxu0 %v4871
    %v4976 = vpop.f32.mrb[0].mxu0
    %v4977 = vadd.f32 %v4893, %v4976
    %v4978 = vpop.f32.mrb[0].mxu0
    %4979 = vdwg.mxu0
    %v4980 = vmul.f32 %v4962, 1.442695
    %v4981 = vpow.pop %v4980
    %v4982 = vmul.f32 %v4967, 1.442695
    %v4983 = vpow.pop %v4982
    %v4984 = vmul.f32 %v4972, 1.442695
    %v4985 = vpow.pop %v4984
    %v4986 = vmul.f32 %v4977, 1.442695
    %v4987 = vpow.pop %v4986
    %v4988 = vmul.f32 %v82, %v4981
    %v4989 = vmul.f32 %v83, %v4983
    %v4990 = vmul.f32 %v84, %v4985
    %v4991 = vmul.f32 %v85, %v4987
    %v4992 = vadd.f32 %v4988, %v4850
    %v4993 = vadd.f32 %v4989, %v4855
    %v4994 = vadd.f32 %v4990, %v4860
    %v4995 = vadd.f32 %v4991, %v4865
    %5000 = vrot.lane.b32.xlu0 %v4850, 32
    %v5001 = vpop.permute.xlu0 %5000
    %5002 = vrot.lane.b32.xlu0 %v4855, 32
    %v5003 = vpop.permute.xlu0 %5002
    %5004 = vrot.lane.b32.xlu0 %v4860, 32
    %v5005 = vpop.permute.xlu0 %5004
    %5006 = vrot.lane.b32.xlu0 %v4865, 32
    %v5007 = vpop.permute.xlu0 %5006
    %5016 = vrot.lane.b32.xlu0 %v4962, 64
    %v5017 = vpop.permute.xlu0 %5016
    %5018 = vrot.lane.b32.xlu0 %v4967, 64
    %v5019 = vpop.permute.xlu0 %5018
    %5020 = vrot.lane.b32.xlu0 %v4972, 64
    %v5021 = vpop.permute.xlu0 %5020
    %5022 = vrot.lane.b32.xlu0 %v4977, 64
    %v5023 = vpop.permute.xlu0 %5022
    %v5028 = vsel %vm1497, %v4992, %v5001
    %v5029 = vsel %vm1497, %v4993, %v5003
    %v5030 = vsel %vm1497, %v4994, %v5005
    %v5031 = vsel %vm1497, %v4995, %v5007
    %vm5032 = vcmask 523264
    %v5033 = vsel %vm5032, %v5028, %v5017
    %v5034 = vsel %vm5032, %v5029, %v5019
    %v5035 = vsel %vm5032, %v5030, %v5021
    %v5036 = vsel %vm5032, %v5031, %v5023
    %vm5037 = vcmask 785408
    %5038 = vst.msk [vmem:[#allocation2] sm:$0xff] %vm5037, %v5033
    %5039 = vst.msk [vmem:[#allocation2 + $0x8] sm:$0xff] %vm5037, %v5034
    %5040 = vst.msk [vmem:[#allocation2 + $0x10] sm:$0xff] %vm5037, %v5035
    %5041 = vst.msk [vmem:[#allocation2 + $0x18] sm:$0xff] %vm5037, %v5036
    // Predicated region
    $region98: #{tpu_custom_call.1} parent=1 // pred_check
      _
    $region99: #{tpu_custom_call.1} parent=1 // pred_check_branch
      %5043 = sbr.rel (0) target = $region101
    $region100: #{tpu_custom_call.1} parent=1 // pred_region
      %s5045 = ssub.s32 512, 512
      %5046 = vsyncadd [#allocation3], %s5045
      %s5047 = sshll.u32 [#allocation2], 4
      %s5048 = int_to_ptr.vmem [resolvable:$true] %s5047
      %5053 = dma.vmem_to_hbm [thread:$0]  %s5048, 512, %s24, [#allocation3], 128, 128, 8
    $region101: #{tpu_custom_call.1} parent=1 // pred_fallthru
      _
    // Predicated region
    $region102: #{tpu_custom_call.1} parent=1 // pred_check
      _
    $region103: #{tpu_custom_call.1} parent=1 // pred_check_branch
      %5055 = sbr.rel (0) target = $region105
    $region104: #{tpu_custom_call.1} parent=1 // pred_region
      %5056 = dma.done [#allocation3], 512
    $region105: #{tpu_custom_call.1} parent=1 // pred_fallthru
      _
    %5057 = vsyncpa [#allocation3], 1

</llo_original>
